<compile_context>
chip_gen: v7x
topology: tpu7x:2x2x1
jax: 0.10.0
libtpu: 0.0.40
codegen_flags: <defaults>
</compile_context>

<pallas_src>
import functools

import jax
import jax.numpy as jnp
from jax import lax
from jax.experimental import pallas as pl
from jax.experimental.pallas import tpu as pltpu

_VMEM_LIMIT = 32 * 1024 * 1024  # safe on v5e/v6e/v7x; tiles here are tiny anyway
_LEAKY_SLOPE = 0.3              # matches nn.LeakyReLU(0.3) in the reference module


# ---------------------------------------------------------------------------
# Fused conv3x3 / stride-2 / pad-1  +  bias  +  LeakyReLU kernel.
#   x_ref  : (1, 2, Hh*Wout, K)  bf16   row-phase-decomposed, W-taps folded in K
#   w_ref  : (3, K, Cout)        bf16   one (K, Cout) slab per H-tap
#   b_ref  : (1, Cout)           f32
#   o_ref  : (1, Hout*Wout, Cout) bf16
#   acc_ref: (Hout*Wout, Cout)   f32    VMEM accumulator
# ---------------------------------------------------------------------------
def _conv_tap_kernel(x_ref, w_ref, b_ref, o_ref, acc_ref, *, wout, negative_slope):
    m = acc_ref.shape[0]
    # H-tap kh=0: even-row phase, row offset 0.
    acc_ref[...] = jnp.dot(x_ref[0, 0, pl.ds(0, m), :], w_ref[0],
                           preferred_element_type=jnp.float32)
    # H-tap kh=1: odd-row phase, row offset 0.
    acc_ref[...] += jnp.dot(x_ref[0, 1, pl.ds(0, m), :], w_ref[1],
                            preferred_element_type=jnp.float32)
    # H-tap kh=2: even-row phase, one stride-2 row down (offset = Wout rows).
    acc_ref[...] += jnp.dot(x_ref[0, 0, pl.ds(wout, m), :], w_ref[2],
                            preferred_element_type=jnp.float32)
    # Epilogue (once, in f32): bias + LeakyReLU, then cast to bf16.
    y = acc_ref[...] + b_ref[...]
    y = jnp.where(y >= 0.0, y, negative_slope * y)
    o_ref[0] = y.astype(o_ref.dtype)


def _conv_block(x_nhwc, w, b, *, cout_pad):
    """One DBlock: conv3x3/stride2/pad1 + bias + LeakyReLU(0.3) (+ identity dropout).

    x_nhwc: (B, H, W, Cin) bf16
    w     : (3, 3, Cin, Cout) f32 (HWIO)
    b     : (Cout,) f32
    Returns (B, H//2, W//2, cout_pad) bf16 with channels >= Cout zeroed.
    """
    B, H, W, Cin = x_nhwc.shape
    Cout = w.shape[-1]
    Hout, Wout = H // 2, W // 2
    Hh = Hout + 1                     # rows per stride-2 phase of the padded input
    K = 3 * Cin                       # W-taps folded into the contraction dim
    M = Hout * Wout
    R = Hh * Wout

    # Lane-dense output channels (e.g. conv1: 64 -> 128).  Zero-padded weights
    # and bias make the extra channels exactly 0 after LeakyReLU.
    if cout_pad > Cout:
        w = jnp.pad(w, ((0, 0), (0, 0), (0, 0), (0, cout_pad - Cout)))
        b = jnp.pad(b, (0, cout_pad - Cout))
    Cp = cout_pad

    # --- wrapper-side layout prep (plain JAX, ~1.5x input bytes, not 9x im2col) ---
    x_pad = jnp.pad(x_nhwc, ((0, 0), (1, 1), (1, 1), (0, 0)))            # spatial pad 1
    # Fold the 3 W-direction taps of the stride-2 conv into the channel dim:
    #   x_wf[b, h, ow, kw*Cin + c] = x_pad[b, h, 2*ow + kw, c]
    x_wf = jnp.concatenate(
        [x_pad[:, :, kw:kw + 2 * Wout:2, :] for kw in range(3)], axis=-1)
    # Split stride-2 row phases and flatten spatial -> (B, 2, Hh*Wout, K).
    xph = jnp.stack([x_wf[:, 0::2], x_wf[:, 1::2]], axis=1)
    xph = xph.reshape(B, 2, R, K).astype(jnp.bfloat16)

    w_fold = w.reshape(3, K, Cp).astype(jnp.bfloat16)                    # (kh, kw*Cin+ci, co)
    b2 = b.reshape(1, Cp).astype(jnp.float32)

    kernel = functools.partial(_conv_tap_kernel, wout=Wout,
                               negative_slope=_LEAKY_SLOPE)
    flops = 2 * B * M * K * 3 * Cp
    bytes_accessed = 2 * (xph.size + w_fold.size + B * M * Cp) + 4 * b2.size

    out = pl.pallas_call(
        kernel,
        out_shape=jax.ShapeDtypeStruct((B, M, Cp), jnp.bfloat16),
        grid=(B,),
        in_specs=[
            pl.BlockSpec((1, 2, R, K), lambda i: (i, 0, 0, 0)),
            pl.BlockSpec((3, K, Cp), lambda i: (0, 0, 0)),   # weights: VMEM-resident
            pl.BlockSpec((1, Cp), lambda i: (0, 0)),
        ],
        out_specs=pl.BlockSpec((1, M, Cp), lambda i: (i, 0, 0)),
        scratch_shapes=[pltpu.VMEM((M, Cp), jnp.float32)],
        compiler_params=pltpu.CompilerParams(
            dimension_semantics=("parallel",),
            vmem_limit_bytes=_VMEM_LIMIT),
        cost_estimate=pl.CostEstimate(flops=flops, transcendentals=0,
                                      bytes_accessed=bytes_accessed),
    )(xph, w_fold, b2)

    return out.reshape(B, Hout, Wout, Cp)


# ---------------------------------------------------------------------------
# Final Linear(4096 -> 1) + sigmoid as multiply + lane reduction (no N=1 matmul).
# ---------------------------------------------------------------------------
def _linear_sigmoid_kernel(h_ref, w_ref, b_ref, o_ref):
    prod = h_ref[...].astype(jnp.float32) * w_ref[...].astype(jnp.float32)
    logit = jnp.sum(prod, axis=-1, keepdims=True) + b_ref[...]
    prob = jax.nn.sigmoid(logit)                         # EUP
    o_ref[...] = jnp.broadcast_to(prob, o_ref.shape)     # lane-dense (B, 128) store


def _linear_sigmoid(h_flat, w_vec, bias):
    B, F = h_flat.shape
    out = pl.pallas_call(
        _linear_sigmoid_kernel,
        out_shape=jax.ShapeDtypeStruct((B, 128), jnp.float32),
        grid=(1,),
        in_specs=[
            pl.BlockSpec((B, F), lambda i: (0, 0)),
            pl.BlockSpec((1, F), lambda i: (0, 0)),
            pl.BlockSpec((1, 1), lambda i: (0, 0)),
        ],
        out_specs=pl.BlockSpec((B, 128), lambda i: (0, 0)),
        compiler_params=pltpu.CompilerParams(
            dimension_semantics=("arbitrary",),
            vmem_limit_bytes=_VMEM_LIMIT),
        cost_estimate=pl.CostEstimate(flops=2 * B * F, transcendentals=B,
                                      bytes_accessed=2 * (B * F + F) + 4 * (B * 128 + 1)),
    )(h_flat.astype(jnp.bfloat16),
      w_vec.reshape(1, F).astype(jnp.bfloat16),
      jnp.asarray(bias, jnp.float32).reshape(1, 1))
    return out[:, :1]


# ---------------------------------------------------------------------------
# Full Discriminator forward (Pallas path) and a pure-JAX reference.
# ---------------------------------------------------------------------------
def _pad_cin(w, cin):
    pad = cin - w.shape[2]
    if pad > 0:
        w = jnp.pad(w, ((0, 0), (0, 0), (0, pad), (0, 0)))
    return w


def discriminator_forward(params, x_nchw):
    # NCHW -> NHWC exactly once; activations stay bf16 NHWC afterwards.
    x = jnp.transpose(x_nchw, (0, 2, 3, 1)).astype(jnp.bfloat16)
    h = _conv_block(x, params["w1"], params["b1"], cout_pad=128)          # (B,16,16,128)
    h = _conv_block(h, _pad_cin(params["w2"], h.shape[-1]),
                    params["b2"], cout_pad=128)                           # (B, 8, 8,128)
    h = _conv_block(h, _pad_cin(params["w3"], h.shape[-1]),
                    params["b3"], cout_pad=256)                           # (B, 4, 4,256)
    b, hh, ww, c = h.shape
    h_flat = h.reshape(b, hh * ww * c)                                    # (h, w, c) order
    # Reorder the PyTorch (c, h, w)-ordered Linear weight to our (h, w, c) order.
    wl = params["wl"].reshape(c, hh, ww).transpose(1, 2, 0).reshape(-1)
    return _linear_sigmoid(h_flat, wl, params["bl"])


def discriminator_reference(params, x_nchw):
    x = jnp.transpose(x_nchw, (0, 2, 3, 1)).astype(jnp.float32)

    def block(h, w, b):
        y = lax.conv_general_dilated(h, w, window_strides=(2, 2),
                                     padding=((1, 1), (1, 1)),
                                     dimension_numbers=("NHWC", "HWIO", "NHWC"))
        y = y + b
        return jnp.where(y >= 0.0, y, _LEAKY_SLOPE * y)

    h = block(x, params["w1"], params["b1"])
    h = block(h, params["w2"], params["b2"])
    h = block(h, params["w3"], params["b3"])
    b = h.shape[0]
    h_chw = jnp.transpose(h, (0, 3, 1, 2)).reshape(b, -1)   # PyTorch .view order
    logit = h_chw @ params["wl"].astype(jnp.float32) + params["bl"]
    return jax.nn.sigmoid(logit).reshape(b, 1)


if __name__ == "__main__":
    key = jax.random.PRNGKey(0)
    ks = jax.random.split(key, 6)
    batch, in_channels, height, width = 2, 3, 32, 32   # 32x32 DCGAN discriminator input
    x = jax.random.normal(ks[0], (batch, in_channels, height, width), jnp.float32)
    params = {
        "w1": 0.10 * jax.random.normal(ks[1], (3, 3, in_channels, 64), jnp.float32),
        "b1": jnp.zeros((64,), jnp.float32),
        "w2": 0.05 * jax.random.normal(ks[2], (3, 3, 64, 128), jnp.float32),
        "b2": jnp.zeros((128,), jnp.float32),
        "w3": 0.03 * jax.random.normal(ks[3], (3, 3, 128, 256), jnp.float32),
        "b3": jnp.zeros((256,), jnp.float32),
        "wl": 0.02 * jax.random.normal(ks[4], (256 * 4 * 4,), jnp.float32),
        "bl": jnp.zeros((), jnp.float32),
    }

    fwd = jax.jit(discriminator_forward)
    out = jax.block_until_ready(fwd(params, x))
    ref = jax.block_until_ready(discriminator_reference(params, x))

    assert out.shape == (batch, 1), out.shape
    assert bool(jnp.all(jnp.isfinite(out)))
    max_err = float(jnp.max(jnp.abs(out.astype(jnp.float32) - ref)))
    assert max_err < 3e-2, f"kernel/reference mismatch: {max_err}"
    print("KERNEL_OK")
</pallas_src>

<mosaic_0001>
module attributes {stable_mosaic.version = 11 : i64} {
  func.func @_conv_tap_kernel(%arg0: i32, %arg1: memref<1x2x272x9xbf16, #tpu.memory_space<vmem>>, %arg2: memref<3x9x128xbf16, #tpu.memory_space<vmem>>, %arg3: memref<1x128xf32, #tpu.memory_space<vmem>>, %arg4: memref<1x256x128xbf16, #tpu.memory_space<vmem>>, %arg5: memref<256x128xf32, #tpu.memory_space<vmem>>) attributes {dimension_semantics = [#tpu.dimension_semantics<parallel>], iteration_bounds = array<i64: 2>, scalar_prefetch = 0 : i64, scratch_operands = 1 : i64, tpu.core_type = #tpu.core_type<tc>, window_params = [{transform_indices = @transform_0, window_bounds = array<i64: 1, 2, 272, 9>}, {pipeline_mode = #tpu.pipeline_mode<synchronous>, transform_indices = @transform_1, window_bounds = array<i64: 3, 9, 128>}, {pipeline_mode = #tpu.pipeline_mode<synchronous>, transform_indices = @transform_2, window_bounds = array<i64: 1, 128>}, {transform_indices = @transform_3, window_bounds = array<i64: 1, 256, 128>}]} {
    %c0 = arith.constant 0 : index
    %c0_0 = arith.constant 0 : index
    %c0_1 = arith.constant 0 : index
    %c0_2 = arith.constant 0 : index
    %0 = vector.load %arg1[%c0, %c0_0, %c0_1, %c0_2] : memref<1x2x272x9xbf16, #tpu.memory_space<vmem>>, vector<1x1x256x9xbf16>
    %1 = vector.shape_cast %0 : vector<1x1x256x9xbf16> to vector<256x9xbf16>
    %c0_3 = arith.constant 0 : index
    %c0_4 = arith.constant 0 : index
    %c0_5 = arith.constant 0 : index
    %2 = vector.load %arg2[%c0_3, %c0_4, %c0_5] : memref<3x9x128xbf16, #tpu.memory_space<vmem>>, vector<1x9x128xbf16>
    %3 = vector.shape_cast %2 : vector<1x9x128xbf16> to vector<9x128xbf16>
    %cst = arith.constant dense<0.000000e+00> : vector<256x128xf32>
    %4 = tpu.matmul %1, %3, %cst {dimension_numbers = #tpu.dot_dimension_numbers<[1], [0], [0], [1], [0, 0, 1, 1], [], []>} : vector<256x9xbf16>, vector<9x128xbf16>, vector<256x128xf32> -> vector<256x128xf32>
    %c0_6 = arith.constant 0 : index
    %c0_7 = arith.constant 0 : index
    %5 = vector.load %arg5[%c0_6, %c0_7] : memref<256x128xf32, #tpu.memory_space<vmem>>, vector<256x128xf32>
    tpu.vector_store %arg5[%c0_6, %c0_7], %4 {strides = array<i32>} : memref<256x128xf32, #tpu.memory_space<vmem>>, vector<256x128xf32>,
    %c0_8 = arith.constant 0 : index
    %c0_9 = arith.constant 0 : index
    %6 = vector.load %arg5[%c0_8, %c0_9] : memref<256x128xf32, #tpu.memory_space<vmem>>, vector<256x128xf32>
    %c0_10 = arith.constant 0 : index
    %c1 = arith.constant 1 : index
    %c0_11 = arith.constant 0 : index
    %c0_12 = arith.constant 0 : index
    %7 = vector.load %arg1[%c0_10, %c1, %c0_11, %c0_12] : memref<1x2x272x9xbf16, #tpu.memory_space<vmem>>, vector<1x1x256x9xbf16>
    %8 = vector.shape_cast %7 : vector<1x1x256x9xbf16> to vector<256x9xbf16>
    %c1_13 = arith.constant 1 : index
    %c0_14 = arith.constant 0 : index
    %c0_15 = arith.constant 0 : index
    %9 = vector.load %arg2[%c1_13, %c0_14, %c0_15] : memref<3x9x128xbf16, #tpu.memory_space<vmem>>, vector<1x9x128xbf16>
    %10 = vector.shape_cast %9 : vector<1x9x128xbf16> to vector<9x128xbf16>
    %cst_16 = arith.constant dense<0.000000e+00> : vector<256x128xf32>
    %11 = tpu.matmul %8, %10, %cst_16 {dimension_numbers = #tpu.dot_dimension_numbers<[1], [0], [0], [1], [0, 0, 1, 1], [], []>} : vector<256x9xbf16>, vector<9x128xbf16>, vector<256x128xf32> -> vector<256x128xf32>
    %12 = arith.addf %6, %11 : vector<256x128xf32>
    %c0_17 = arith.constant 0 : index
    %c0_18 = arith.constant 0 : index
    %13 = vector.load %arg5[%c0_17, %c0_18] : memref<256x128xf32, #tpu.memory_space<vmem>>, vector<256x128xf32>
    tpu.vector_store %arg5[%c0_17, %c0_18], %12 {strides = array<i32>} : memref<256x128xf32, #tpu.memory_space<vmem>>, vector<256x128xf32>,
    %c0_19 = arith.constant 0 : index
    %c0_20 = arith.constant 0 : index
    %14 = vector.load %arg5[%c0_19, %c0_20] : memref<256x128xf32, #tpu.memory_space<vmem>>, vector<256x128xf32>
    %c0_21 = arith.constant 0 : index
    %c0_22 = arith.constant 0 : index
    %c16 = arith.constant 16 : index
    %c0_23 = arith.constant 0 : index
    %15 = vector.load %arg1[%c0_21, %c0_22, %c16, %c0_23] : memref<1x2x272x9xbf16, #tpu.memory_space<vmem>>, vector<1x1x256x9xbf16>
    %16 = vector.shape_cast %15 : vector<1x1x256x9xbf16> to vector<256x9xbf16>
    %c2 = arith.constant 2 : index
    %c0_24 = arith.constant 0 : index
    %c0_25 = arith.constant 0 : index
    %17 = vector.load %arg2[%c2, %c0_24, %c0_25] : memref<3x9x128xbf16, #tpu.memory_space<vmem>>, vector<1x9x128xbf16>
    %18 = vector.shape_cast %17 : vector<1x9x128xbf16> to vector<9x128xbf16>
    %cst_26 = arith.constant dense<0.000000e+00> : vector<256x128xf32>
    %19 = tpu.matmul %16, %18, %cst_26 {dimension_numbers = #tpu.dot_dimension_numbers<[1], [0], [0], [1], [0, 0, 1, 1], [], []>} : vector<256x9xbf16>, vector<9x128xbf16>, vector<256x128xf32> -> vector<256x128xf32>
    %20 = arith.addf %14, %19 : vector<256x128xf32>
    %c0_27 = arith.constant 0 : index
    %c0_28 = arith.constant 0 : index
    %21 = vector.load %arg5[%c0_27, %c0_28] : memref<256x128xf32, #tpu.memory_space<vmem>>, vector<256x128xf32>
    tpu.vector_store %arg5[%c0_27, %c0_28], %20 {strides = array<i32>} : memref<256x128xf32, #tpu.memory_space<vmem>>, vector<256x128xf32>,
    %c0_29 = arith.constant 0 : index
    %c0_30 = arith.constant 0 : index
    %22 = vector.load %arg5[%c0_29, %c0_30] : memref<256x128xf32, #tpu.memory_space<vmem>>, vector<256x128xf32>
    %c0_31 = arith.constant 0 : index
    %c0_32 = arith.constant 0 : index
    %23 = vector.load %arg3[%c0_31, %c0_32] : memref<1x128xf32, #tpu.memory_space<vmem>>, vector<1x128xf32>
    %24 = vector.broadcast %23 : vector<1x128xf32> to vector<256x128xf32>
    %25 = arith.addf %22, %24 : vector<256x128xf32>
    %cst_33 = arith.constant 0.000000e+00 : f32
    %26 = vector.broadcast %cst_33 : f32 to vector<256x128xf32>
    %27 = arith.cmpf oge, %25, %26 : vector<256x128xf32>
    %cst_34 = arith.constant 3.000000e-01 : f32
    %28 = vector.broadcast %cst_34 : f32 to vector<256x128xf32>
    %29 = arith.mulf %28, %25 : vector<256x128xf32>
    %30 = arith.select %27, %25, %29 : vector<256x128xi1>, vector<256x128xf32>
    %31 = arith.truncf %30 : vector<256x128xf32> to vector<256x128xbf16>
    %c0_35 = arith.constant 0 : index
    %c0_36 = arith.constant 0 : index
    %c0_37 = arith.constant 0 : index
    %32 = vector.load %arg4[%c0_35, %c0_36, %c0_37] : memref<1x256x128xbf16, #tpu.memory_space<vmem>>, vector<1x256x128xbf16>
    %33 = vector.shape_cast %32 : vector<1x256x128xbf16> to vector<256x128xbf16>
    %34 = vector.shape_cast %31 : vector<256x128xbf16> to vector<1x256x128xbf16>
    tpu.vector_store %arg4[%c0_35, %c0_36, %c0_37], %34 {strides = array<i32>} : memref<1x256x128xbf16, #tpu.memory_space<vmem>>, vector<1x256x128xbf16>,
    return
  }
  func.func @transform_0(%arg0: i32) -> (i32, i32, i32, i32) {
    %c0_i32 = arith.constant 0 : i32
    %c0_i32_0 = arith.constant 0 : i32
    %c0_i32_1 = arith.constant 0 : i32
    %c0_i32_2 = arith.constant 0 : i32
    return %arg0, %c0_i32, %c0_i32_0, %c0_i32_1 : i32, i32, i32, i32
  }
  func.func @transform_1(%arg0: i32) -> (i32, i32, i32) {
    %c0_i32 = arith.constant 0 : i32
    %c0_i32_0 = arith.constant 0 : i32
    %c0_i32_1 = arith.constant 0 : i32
    %c0_i32_2 = arith.constant 0 : i32
    return %c0_i32, %c0_i32_0, %c0_i32_1 : i32, i32, i32
  }
  func.func @transform_2(%arg0: i32) -> (i32, i32) {
    %c0_i32 = arith.constant 0 : i32
    %c0_i32_0 = arith.constant 0 : i32
    %c0_i32_1 = arith.constant 0 : i32
    return %c0_i32, %c0_i32_0 : i32, i32
  }
  func.func @transform_3(%arg0: i32) -> (i32, i32, i32) {
    %c0_i32 = arith.constant 0 : i32
    %c0_i32_0 = arith.constant 0 : i32
    %c0_i32_1 = arith.constant 0 : i32
    return %arg0, %c0_i32, %c0_i32_0 : i32, i32, i32
  }
}

module attributes {stable_mosaic.version = 11 : i64} {
  func.func @_conv_tap_kernel(%arg0: i32, %arg1: memref<1x2x72x384xbf16, #tpu.memory_space<vmem>>, %arg2: memref<3x384x128xbf16, #tpu.memory_space<vmem>>, %arg3: memref<1x128xf32, #tpu.memory_space<vmem>>, %arg4: memref<1x64x128xbf16, #tpu.memory_space<vmem>>, %arg5: memref<64x128xf32, #tpu.memory_space<vmem>>) attributes {dimension_semantics = [#tpu.dimension_semantics<parallel>], iteration_bounds = array<i64: 2>, scalar_prefetch = 0 : i64, scratch_operands = 1 : i64, tpu.core_type = #tpu.core_type<tc>, window_params = [{transform_indices = @transform_0, window_bounds = array<i64: 1, 2, 72, 384>}, {pipeline_mode = #tpu.pipeline_mode<synchronous>, transform_indices = @transform_1, window_bounds = array<i64: 3, 384, 128>}, {pipeline_mode = #tpu.pipeline_mode<synchronous>, transform_indices = @transform_2, window_bounds = array<i64: 1, 128>}, {transform_indices = @transform_3, window_bounds = array<i64: 1, 64, 128>}]} {
    %c0 = arith.constant 0 : index
    %c0_0 = arith.constant 0 : index
    %c0_1 = arith.constant 0 : index
    %c0_2 = arith.constant 0 : index
    %0 = vector.load %arg1[%c0, %c0_0, %c0_1, %c0_2] : memref<1x2x72x384xbf16, #tpu.memory_space<vmem>>, vector<1x1x64x384xbf16>
    %1 = vector.shape_cast %0 : vector<1x1x64x384xbf16> to vector<64x384xbf16>
    %c0_3 = arith.constant 0 : index
    %c0_4 = arith.constant 0 : index
    %c0_5 = arith.constant 0 : index
    %2 = vector.load %arg2[%c0_3, %c0_4, %c0_5] : memref<3x384x128xbf16, #tpu.memory_space<vmem>>, vector<1x384x128xbf16>
    %3 = vector.shape_cast %2 : vector<1x384x128xbf16> to vector<384x128xbf16>
    %cst = arith.constant dense<0.000000e+00> : vector<64x128xf32>
    %4 = tpu.matmul %1, %3, %cst {dimension_numbers = #tpu.dot_dimension_numbers<[1], [0], [0], [1], [0, 0, 1, 1], [], []>} : vector<64x384xbf16>, vector<384x128xbf16>, vector<64x128xf32> -> vector<64x128xf32>
    %c0_6 = arith.constant 0 : index
    %c0_7 = arith.constant 0 : index
    %5 = vector.load %arg5[%c0_6, %c0_7] : memref<64x128xf32, #tpu.memory_space<vmem>>, vector<64x128xf32>
    tpu.vector_store %arg5[%c0_6, %c0_7], %4 {strides = array<i32>} : memref<64x128xf32, #tpu.memory_space<vmem>>, vector<64x128xf32>,
    %c0_8 = arith.constant 0 : index
    %c0_9 = arith.constant 0 : index
    %6 = vector.load %arg5[%c0_8, %c0_9] : memref<64x128xf32, #tpu.memory_space<vmem>>, vector<64x128xf32>
    %c0_10 = arith.constant 0 : index
    %c1 = arith.constant 1 : index
    %c0_11 = arith.constant 0 : index
    %c0_12 = arith.constant 0 : index
    %7 = vector.load %arg1[%c0_10, %c1, %c0_11, %c0_12] : memref<1x2x72x384xbf16, #tpu.memory_space<vmem>>, vector<1x1x64x384xbf16>
    %8 = vector.shape_cast %7 : vector<1x1x64x384xbf16> to vector<64x384xbf16>
    %c1_13 = arith.constant 1 : index
    %c0_14 = arith.constant 0 : index
    %c0_15 = arith.constant 0 : index
    %9 = vector.load %arg2[%c1_13, %c0_14, %c0_15] : memref<3x384x128xbf16, #tpu.memory_space<vmem>>, vector<1x384x128xbf16>
    %10 = vector.shape_cast %9 : vector<1x384x128xbf16> to vector<384x128xbf16>
    %cst_16 = arith.constant dense<0.000000e+00> : vector<64x128xf32>
    %11 = tpu.matmul %8, %10, %cst_16 {dimension_numbers = #tpu.dot_dimension_numbers<[1], [0], [0], [1], [0, 0, 1, 1], [], []>} : vector<64x384xbf16>, vector<384x128xbf16>, vector<64x128xf32> -> vector<64x128xf32>
    %12 = arith.addf %6, %11 : vector<64x128xf32>
    %c0_17 = arith.constant 0 : index
    %c0_18 = arith.constant 0 : index
    %13 = vector.load %arg5[%c0_17, %c0_18] : memref<64x128xf32, #tpu.memory_space<vmem>>, vector<64x128xf32>
    tpu.vector_store %arg5[%c0_17, %c0_18], %12 {strides = array<i32>} : memref<64x128xf32, #tpu.memory_space<vmem>>, vector<64x128xf32>,
    %c0_19 = arith.constant 0 : index
    %c0_20 = arith.constant 0 : index
    %14 = vector.load %arg5[%c0_19, %c0_20] : memref<64x128xf32, #tpu.memory_space<vmem>>, vector<64x128xf32>
    %c0_21 = arith.constant 0 : index
    %c0_22 = arith.constant 0 : index
    %c8 = arith.constant 8 : index
    %c0_23 = arith.constant 0 : index
    %15 = vector.load %arg1[%c0_21, %c0_22, %c8, %c0_23] : memref<1x2x72x384xbf16, #tpu.memory_space<vmem>>, vector<1x1x64x384xbf16>
    %16 = vector.shape_cast %15 : vector<1x1x64x384xbf16> to vector<64x384xbf16>
    %c2 = arith.constant 2 : index
    %c0_24 = arith.constant 0 : index
    %c0_25 = arith.constant 0 : index
    %17 = vector.load %arg2[%c2, %c0_24, %c0_25] : memref<3x384x128xbf16, #tpu.memory_space<vmem>>, vector<1x384x128xbf16>
    %18 = vector.shape_cast %17 : vector<1x384x128xbf16> to vector<384x128xbf16>
    %cst_26 = arith.constant dense<0.000000e+00> : vector<64x128xf32>
    %19 = tpu.matmul %16, %18, %cst_26 {dimension_numbers = #tpu.dot_dimension_numbers<[1], [0], [0], [1], [0, 0, 1, 1], [], []>} : vector<64x384xbf16>, vector<384x128xbf16>, vector<64x128xf32> -> vector<64x128xf32>
    %20 = arith.addf %14, %19 : vector<64x128xf32>
    %c0_27 = arith.constant 0 : index
    %c0_28 = arith.constant 0 : index
    %21 = vector.load %arg5[%c0_27, %c0_28] : memref<64x128xf32, #tpu.memory_space<vmem>>, vector<64x128xf32>
    tpu.vector_store %arg5[%c0_27, %c0_28], %20 {strides = array<i32>} : memref<64x128xf32, #tpu.memory_space<vmem>>, vector<64x128xf32>,
    %c0_29 = arith.constant 0 : index
    %c0_30 = arith.constant 0 : index
    %22 = vector.load %arg5[%c0_29, %c0_30] : memref<64x128xf32, #tpu.memory_space<vmem>>, vector<64x128xf32>
    %c0_31 = arith.constant 0 : index
    %c0_32 = arith.constant 0 : index
    %23 = vector.load %arg3[%c0_31, %c0_32] : memref<1x128xf32, #tpu.memory_space<vmem>>, vector<1x128xf32>
    %24 = vector.broadcast %23 : vector<1x128xf32> to vector<64x128xf32>
    %25 = arith.addf %22, %24 : vector<64x128xf32>
    %cst_33 = arith.constant 0.000000e+00 : f32
    %26 = vector.broadcast %cst_33 : f32 to vector<64x128xf32>
    %27 = arith.cmpf oge, %25, %26 : vector<64x128xf32>
    %cst_34 = arith.constant 3.000000e-01 : f32
    %28 = vector.broadcast %cst_34 : f32 to vector<64x128xf32>
    %29 = arith.mulf %28, %25 : vector<64x128xf32>
    %30 = arith.select %27, %25, %29 : vector<64x128xi1>, vector<64x128xf32>
    %31 = arith.truncf %30 : vector<64x128xf32> to vector<64x128xbf16>
    %c0_35 = arith.constant 0 : index
    %c0_36 = arith.constant 0 : index
    %c0_37 = arith.constant 0 : index
    %32 = vector.load %arg4[%c0_35, %c0_36, %c0_37] : memref<1x64x128xbf16, #tpu.memory_space<vmem>>, vector<1x64x128xbf16>
    %33 = vector.shape_cast %32 : vector<1x64x128xbf16> to vector<64x128xbf16>
    %34 = vector.shape_cast %31 : vector<64x128xbf16> to vector<1x64x128xbf16>
    tpu.vector_store %arg4[%c0_35, %c0_36, %c0_37], %34 {strides = array<i32>} : memref<1x64x128xbf16, #tpu.memory_space<vmem>>, vector<1x64x128xbf16>,
    return
  }
  func.func @transform_0(%arg0: i32) -> (i32, i32, i32, i32) {
    %c0_i32 = arith.constant 0 : i32
    %c0_i32_0 = arith.constant 0 : i32
    %c0_i32_1 = arith.constant 0 : i32
    %c0_i32_2 = arith.constant 0 : i32
    return %arg0, %c0_i32, %c0_i32_0, %c0_i32_1 : i32, i32, i32, i32
  }
  func.func @transform_1(%arg0: i32) -> (i32, i32, i32) {
    %c0_i32 = arith.constant 0 : i32
    %c0_i32_0 = arith.constant 0 : i32
    %c0_i32_1 = arith.constant 0 : i32
    %c0_i32_2 = arith.constant 0 : i32
    return %c0_i32, %c0_i32_0, %c0_i32_1 : i32, i32, i32
  }
  func.func @transform_2(%arg0: i32) -> (i32, i32) {
    %c0_i32 = arith.constant 0 : i32
    %c0_i32_0 = arith.constant 0 : i32
    %c0_i32_1 = arith.constant 0 : i32
    return %c0_i32, %c0_i32_0 : i32, i32
  }
  func.func @transform_3(%arg0: i32) -> (i32, i32, i32) {
    %c0_i32 = arith.constant 0 : i32
    %c0_i32_0 = arith.constant 0 : i32
    %c0_i32_1 = arith.constant 0 : i32
    return %arg0, %c0_i32, %c0_i32_0 : i32, i32, i32
  }
}

module attributes {stable_mosaic.version = 11 : i64} {
  func.func @_conv_tap_kernel(%arg0: i32, %arg1: memref<1x2x20x384xbf16, #tpu.memory_space<vmem>>, %arg2: memref<3x384x256xbf16, #tpu.memory_space<vmem>>, %arg3: memref<1x256xf32, #tpu.memory_space<vmem>>, %arg4: memref<1x16x256xbf16, #tpu.memory_space<vmem>>, %arg5: memref<16x256xf32, #tpu.memory_space<vmem>>) attributes {dimension_semantics = [#tpu.dimension_semantics<parallel>], iteration_bounds = array<i64: 2>, scalar_prefetch = 0 : i64, scratch_operands = 1 : i64, tpu.core_type = #tpu.core_type<tc>, window_params = [{transform_indices = @transform_0, window_bounds = array<i64: 1, 2, 20, 384>}, {pipeline_mode = #tpu.pipeline_mode<synchronous>, transform_indices = @transform_1, window_bounds = array<i64: 3, 384, 256>}, {pipeline_mode = #tpu.pipeline_mode<synchronous>, transform_indices = @transform_2, window_bounds = array<i64: 1, 256>}, {transform_indices = @transform_3, window_bounds = array<i64: 1, 16, 256>}]} {
    %c0 = arith.constant 0 : index
    %c0_0 = arith.constant 0 : index
    %c0_1 = arith.constant 0 : index
    %c0_2 = arith.constant 0 : index
    %0 = vector.load %arg1[%c0, %c0_0, %c0_1, %c0_2] : memref<1x2x20x384xbf16, #tpu.memory_space<vmem>>, vector<1x1x16x384xbf16>
    %1 = vector.shape_cast %0 : vector<1x1x16x384xbf16> to vector<16x384xbf16>
    %c0_3 = arith.constant 0 : index
    %c0_4 = arith.constant 0 : index
    %c0_5 = arith.constant 0 : index
    %2 = vector.load %arg2[%c0_3, %c0_4, %c0_5] : memref<3x384x256xbf16, #tpu.memory_space<vmem>>, vector<1x384x256xbf16>
    %3 = vector.shape_cast %2 : vector<1x384x256xbf16> to vector<384x256xbf16>
    %cst = arith.constant dense<0.000000e+00> : vector<16x256xf32>
    %4 = tpu.matmul %1, %3, %cst {dimension_numbers = #tpu.dot_dimension_numbers<[1], [0], [0], [1], [0, 0, 1, 1], [], []>} : vector<16x384xbf16>, vector<384x256xbf16>, vector<16x256xf32> -> vector<16x256xf32>
    %c0_6 = arith.constant 0 : index
    %c0_7 = arith.constant 0 : index
    %5 = vector.load %arg5[%c0_6, %c0_7] : memref<16x256xf32, #tpu.memory_space<vmem>>, vector<16x256xf32>
    tpu.vector_store %arg5[%c0_6, %c0_7], %4 {strides = array<i32>} : memref<16x256xf32, #tpu.memory_space<vmem>>, vector<16x256xf32>,
    %c0_8 = arith.constant 0 : index
    %c0_9 = arith.constant 0 : index
    %6 = vector.load %arg5[%c0_8, %c0_9] : memref<16x256xf32, #tpu.memory_space<vmem>>, vector<16x256xf32>
    %c0_10 = arith.constant 0 : index
    %c1 = arith.constant 1 : index
    %c0_11 = arith.constant 0 : index
    %c0_12 = arith.constant 0 : index
    %7 = vector.load %arg1[%c0_10, %c1, %c0_11, %c0_12] : memref<1x2x20x384xbf16, #tpu.memory_space<vmem>>, vector<1x1x16x384xbf16>
    %8 = vector.shape_cast %7 : vector<1x1x16x384xbf16> to vector<16x384xbf16>
    %c1_13 = arith.constant 1 : index
    %c0_14 = arith.constant 0 : index
    %c0_15 = arith.constant 0 : index
    %9 = vector.load %arg2[%c1_13, %c0_14, %c0_15] : memref<3x384x256xbf16, #tpu.memory_space<vmem>>, vector<1x384x256xbf16>
    %10 = vector.shape_cast %9 : vector<1x384x256xbf16> to vector<384x256xbf16>
    %cst_16 = arith.constant dense<0.000000e+00> : vector<16x256xf32>
    %11 = tpu.matmul %8, %10, %cst_16 {dimension_numbers = #tpu.dot_dimension_numbers<[1], [0], [0], [1], [0, 0, 1, 1], [], []>} : vector<16x384xbf16>, vector<384x256xbf16>, vector<16x256xf32> -> vector<16x256xf32>
    %12 = arith.addf %6, %11 : vector<16x256xf32>
    %c0_17 = arith.constant 0 : index
    %c0_18 = arith.constant 0 : index
    %13 = vector.load %arg5[%c0_17, %c0_18] : memref<16x256xf32, #tpu.memory_space<vmem>>, vector<16x256xf32>
    tpu.vector_store %arg5[%c0_17, %c0_18], %12 {strides = array<i32>} : memref<16x256xf32, #tpu.memory_space<vmem>>, vector<16x256xf32>,
    %c0_19 = arith.constant 0 : index
    %c0_20 = arith.constant 0 : index
    %14 = vector.load %arg5[%c0_19, %c0_20] : memref<16x256xf32, #tpu.memory_space<vmem>>, vector<16x256xf32>
    %c0_21 = arith.constant 0 : index
    %c0_22 = arith.constant 0 : index
    %c4 = arith.constant 4 : index
    %c0_23 = arith.constant 0 : index
    %15 = vector.load %arg1[%c0_21, %c0_22, %c4, %c0_23] : memref<1x2x20x384xbf16, #tpu.memory_space<vmem>>, vector<1x1x16x384xbf16>
    %16 = vector.shape_cast %15 : vector<1x1x16x384xbf16> to vector<16x384xbf16>
    %c2 = arith.constant 2 : index
    %c0_24 = arith.constant 0 : index
    %c0_25 = arith.constant 0 : index
    %17 = vector.load %arg2[%c2, %c0_24, %c0_25] : memref<3x384x256xbf16, #tpu.memory_space<vmem>>, vector<1x384x256xbf16>
    %18 = vector.shape_cast %17 : vector<1x384x256xbf16> to vector<384x256xbf16>
    %cst_26 = arith.constant dense<0.000000e+00> : vector<16x256xf32>
    %19 = tpu.matmul %16, %18, %cst_26 {dimension_numbers = #tpu.dot_dimension_numbers<[1], [0], [0], [1], [0, 0, 1, 1], [], []>} : vector<16x384xbf16>, vector<384x256xbf16>, vector<16x256xf32> -> vector<16x256xf32>
    %20 = arith.addf %14, %19 : vector<16x256xf32>
    %c0_27 = arith.constant 0 : index
    %c0_28 = arith.constant 0 : index
    %21 = vector.load %arg5[%c0_27, %c0_28] : memref<16x256xf32, #tpu.memory_space<vmem>>, vector<16x256xf32>
    tpu.vector_store %arg5[%c0_27, %c0_28], %20 {strides = array<i32>} : memref<16x256xf32, #tpu.memory_space<vmem>>, vector<16x256xf32>,
    %c0_29 = arith.constant 0 : index
    %c0_30 = arith.constant 0 : index
    %22 = vector.load %arg5[%c0_29, %c0_30] : memref<16x256xf32, #tpu.memory_space<vmem>>, vector<16x256xf32>
    %c0_31 = arith.constant 0 : index
    %c0_32 = arith.constant 0 : index
    %23 = vector.load %arg3[%c0_31, %c0_32] : memref<1x256xf32, #tpu.memory_space<vmem>>, vector<1x256xf32>
    %24 = vector.broadcast %23 : vector<1x256xf32> to vector<16x256xf32>
    %25 = arith.addf %22, %24 : vector<16x256xf32>
    %cst_33 = arith.constant 0.000000e+00 : f32
    %26 = vector.broadcast %cst_33 : f32 to vector<16x256xf32>
    %27 = arith.cmpf oge, %25, %26 : vector<16x256xf32>
    %cst_34 = arith.constant 3.000000e-01 : f32
    %28 = vector.broadcast %cst_34 : f32 to vector<16x256xf32>
    %29 = arith.mulf %28, %25 : vector<16x256xf32>
    %30 = arith.select %27, %25, %29 : vector<16x256xi1>, vector<16x256xf32>
    %31 = arith.truncf %30 : vector<16x256xf32> to vector<16x256xbf16>
    %c0_35 = arith.constant 0 : index
    %c0_36 = arith.constant 0 : index
    %c0_37 = arith.constant 0 : index
    %32 = vector.load %arg4[%c0_35, %c0_36, %c0_37] : memref<1x16x256xbf16, #tpu.memory_space<vmem>>, vector<1x16x256xbf16>
    %33 = vector.shape_cast %32 : vector<1x16x256xbf16> to vector<16x256xbf16>
    %34 = vector.shape_cast %31 : vector<16x256xbf16> to vector<1x16x256xbf16>
    tpu.vector_store %arg4[%c0_35, %c0_36, %c0_37], %34 {strides = array<i32>} : memref<1x16x256xbf16, #tpu.memory_space<vmem>>, vector<1x16x256xbf16>,
    return
  }
  func.func @transform_0(%arg0: i32) -> (i32, i32, i32, i32) {
    %c0_i32 = arith.constant 0 : i32
    %c0_i32_0 = arith.constant 0 : i32
    %c0_i32_1 = arith.constant 0 : i32
    %c0_i32_2 = arith.constant 0 : i32
    return %arg0, %c0_i32, %c0_i32_0, %c0_i32_1 : i32, i32, i32, i32
  }
  func.func @transform_1(%arg0: i32) -> (i32, i32, i32) {
    %c0_i32 = arith.constant 0 : i32
    %c0_i32_0 = arith.constant 0 : i32
    %c0_i32_1 = arith.constant 0 : i32
    %c0_i32_2 = arith.constant 0 : i32
    return %c0_i32, %c0_i32_0, %c0_i32_1 : i32, i32, i32
  }
  func.func @transform_2(%arg0: i32) -> (i32, i32) {
    %c0_i32 = arith.constant 0 : i32
    %c0_i32_0 = arith.constant 0 : i32
    %c0_i32_1 = arith.constant 0 : i32
    return %c0_i32, %c0_i32_0 : i32, i32
  }
  func.func @transform_3(%arg0: i32) -> (i32, i32, i32) {
    %c0_i32 = arith.constant 0 : i32
    %c0_i32_0 = arith.constant 0 : i32
    %c0_i32_1 = arith.constant 0 : i32
    return %arg0, %c0_i32, %c0_i32_0 : i32, i32, i32
  }
}

module attributes {stable_mosaic.version = 11 : i64} {
  func.func @_linear_sigmoid_kernel(%arg0: i32, %arg1: memref<2x4096xbf16, #tpu.memory_space<vmem>>, %arg2: memref<1x4096xbf16, #tpu.memory_space<vmem>>, %arg3: memref<1x1xf32, #tpu.memory_space<vmem>>, %arg4: memref<2x128xf32, #tpu.memory_space<vmem>>) attributes {dimension_semantics = [#tpu.dimension_semantics<arbitrary>], iteration_bounds = array<i64: 1>, scalar_prefetch = 0 : i64, scratch_operands = 0 : i64, tpu.core_type = #tpu.core_type<tc>, window_params = [{pipeline_mode = #tpu.pipeline_mode<synchronous>, transform_indices = @transform_0, window_bounds = array<i64: 2, 4096>}, {pipeline_mode = #tpu.pipeline_mode<synchronous>, transform_indices = @transform_1, window_bounds = array<i64: 1, 4096>}, {pipeline_mode = #tpu.pipeline_mode<synchronous>, transform_indices = @transform_2, window_bounds = array<i64: 1, 1>}, {pipeline_mode = #tpu.pipeline_mode<synchronous>, transform_indices = @transform_3, window_bounds = array<i64: 2, 128>}]} {
    %c0 = arith.constant 0 : index
    %c0_0 = arith.constant 0 : index
    %0 = vector.load %arg1[%c0, %c0_0] : memref<2x4096xbf16, #tpu.memory_space<vmem>>, vector<2x4096xbf16>
    %1 = arith.extf %0 : vector<2x4096xbf16> to vector<2x4096xf32>
    %c0_1 = arith.constant 0 : index
    %c0_2 = arith.constant 0 : index
    %2 = vector.load %arg2[%c0_1, %c0_2] : memref<1x4096xbf16, #tpu.memory_space<vmem>>, vector<1x4096xbf16>
    %3 = arith.extf %2 : vector<1x4096xbf16> to vector<1x4096xf32>
    %4 = vector.broadcast %3 : vector<1x4096xf32> to vector<2x4096xf32>
    %5 = arith.mulf %1, %4 : vector<2x4096xf32>
    %cst = arith.constant dense<0.000000e+00> : vector<2xf32>
    %6 = vector.multi_reduction <add>, %5, %cst [1] : vector<2x4096xf32> to vector<2xf32>
    %7 = vector.shape_cast %6 : vector<2xf32> to vector<2x1xf32>
    %c0_3 = arith.constant 0 : index
    %c0_4 = arith.constant 0 : index
    %8 = vector.load %arg3[%c0_3, %c0_4] : memref<1x1xf32, #tpu.memory_space<vmem>>, vector<1x1xf32>
    %9 = vector.broadcast %8 : vector<1x1xf32> to vector<2x1xf32>
    %10 = arith.addf %7, %9 : vector<2x1xf32>
    %11 = arith.negf %10 : vector<2x1xf32>
    %12 = math.exp %11 : vector<2x1xf32>
    %cst_5 = arith.constant 1.000000e+00 : f32
    %13 = vector.broadcast %cst_5 : f32 to vector<2x1xf32>
    %14 = arith.addf %13, %12 : vector<2x1xf32>
    %15 = arith.divf %13, %14 : vector<2x1xf32>
    %16 = vector.shape_cast %15 : vector<2x1xf32> to vector<2x1xf32>
    %17 = vector.broadcast %16 : vector<2x1xf32> to vector<2x128xf32>
    %c0_6 = arith.constant 0 : index
    %c0_7 = arith.constant 0 : index
    %18 = vector.load %arg4[%c0_6, %c0_7] : memref<2x128xf32, #tpu.memory_space<vmem>>, vector<2x128xf32>
    tpu.vector_store %arg4[%c0_6, %c0_7], %17 {strides = array<i32>} : memref<2x128xf32, #tpu.memory_space<vmem>>, vector<2x128xf32>,
    return
  }
  func.func @transform_0(%arg0: i32) -> (i32, i32) {
    %c0_i32 = arith.constant 0 : i32
    %c0_i32_0 = arith.constant 0 : i32
    %c0_i32_1 = arith.constant 0 : i32
    return %c0_i32, %c0_i32_0 : i32, i32
  }
  func.func @transform_1(%arg0: i32) -> (i32, i32) {
    %c0_i32 = arith.constant 0 : i32
    %c0_i32_0 = arith.constant 0 : i32
    %c0_i32_1 = arith.constant 0 : i32
    return %c0_i32, %c0_i32_0 : i32, i32
  }
  func.func @transform_2(%arg0: i32) -> (i32, i32) {
    %c0_i32 = arith.constant 0 : i32
    %c0_i32_0 = arith.constant 0 : i32
    %c0_i32_1 = arith.constant 0 : i32
    return %c0_i32, %c0_i32_0 : i32, i32
  }
  func.func @transform_3(%arg0: i32) -> (i32, i32) {
    %c0_i32 = arith.constant 0 : i32
    %c0_i32_0 = arith.constant 0 : i32
    %c0_i32_1 = arith.constant 0 : i32
    return %c0_i32, %c0_i32_0 : i32, i32
  }
}

</mosaic_0001>

<llo_original>
// kernel: discriminator_forward.4
$region0: #{discriminator_forward.4}
  #allocation0 [shape = 'u32[]', space=smem, size = 0x4, offset = 0x4, fixed_abs, tag = 'smem constant byte address 0x4 - core index']
  #allocation1 [shape = 'u32[144,128]{1,0:T(1,128)}', space=vmem, size = 0x12000, scoped, tag = 'internal scratch']
  #allocation2 [shape = 'f32[256,128]{1,0:T(8,128)}', space=vmem, size = 0x20000, scoped, tag = 'scratch operand']
  %s0 = inlined_call_operand.vmem [shape: bf16[2,2,272,9], index: 0, kind: input, shape index: {}]
  %s1 = inlined_call_operand.vmem [shape: bf16[3,9,128], index: 1, kind: input, shape index: {}]
  %s2 = inlined_call_operand.vmem [shape: f32[1,128], index: 2, kind: input, shape index: {}]
  %s3 = inlined_call_operand.vmem [shape: bf16[2,256,128], index: 3, kind: output, shape index: {}]
  %s4 = sld [smem:[#allocation0]]
  $region45: #{discriminator_forward.4} parent=0
    _
  %s6 = ssub.s32 1, %s4
  %s7 = scalar_select 0, %s6, %s4
  loop: start=0, step=1, limit=4
  $region2: #{discriminator_forward.4} parent=0 // loop_pre_header
    _
  $region3: #{discriminator_forward.4} parent=0 // loop_header
    %s9 = sphi 0, %s13
    %p10 = scmp.ge.s32.totalorder %s9, 4
    %s19 = sphi 0, %s21
    %s22 = sphi 0, %s19
    %s23 = sphi 0, %s22
    %s39 = sphi 0, %s23
    %s43 = sphi 0, %s43
    %s45 = sphi 0, %s43
    %s46 = sphi 0, %s45
    %s60 = sphi 0, %s46
    %s64 = sphi 0, %s64
    %s66 = sphi 0, %s64
    %s67 = sphi 0, %s66
    %s81 = sphi 0, %s67
    %s87 = sphi 0, %s89
    %s90 = sphi 0, %s87
    %s91 = sphi 0, %s90
    %s107 = sphi 0, %s91
  $region4: #{discriminator_forward.4} parent=0 // loop_header_branch
    %12 = sbr.rel (%p10) target = $region8
  $region5: #{discriminator_forward.4} parent=0 // loop_body
    %s14 = ssub.s32 %s9, 1
    %s15 = ssub.s32 %s9, 2
    %s16 = sadd.s32 %s9, 1
    %s17 = ssub.s32 %s9, %s16
    %p18 = scmp.eq.s32.totalorder %s17, 0
    %s20 = sadd.s32 %s19, 1
    %s21 = scalar_select %p18, %s19, %s20
    %p24 = pneg %p18
    %p25 = scmp.eq.s32.totalorder %s9, 1
    %p26 = por %p24, %p25
    %p27 = scmp.ne.s32.totalorder %s19, %s22
    %p28 = scmp.eq.s32.totalorder %s9, 0
    %p29 = por %p27, %p28
    %p30 = scmp.ne.s32.totalorder %s19, %s22
    %p31 = scmp.eq.s32.totalorder %s14, 1
    %p32 = por %p30, %p31
    %p33 = scmp.ne.s32.totalorder %s22, %s23
    %p34 = scmp.eq.s32.totalorder %s14, 0
    %p35 = por %p33, %p34
    %p36 = scmp.ne.s32.totalorder %s22, %s23
    %p37 = scmp.eq.s32.totalorder %s15, 1
    %p38 = por %p36, %p37
    %p40 = scmp.ne.s32.totalorder %s23, %s39
    %p41 = scmp.eq.s32.totalorder %s15, 0
    %p42 = por %p40, %p41
    %s44 = sadd.s32 %s43, 1
    %p47 = scmp.eq.s32.totalorder %s9, 1
    %p48 = scmp.ne.s32.totalorder %s43, %s45
    %p49 = scmp.eq.s32.totalorder %s9, 0
    %p50 = por %p48, %p49
    %p51 = scmp.ne.s32.totalorder %s43, %s45
    %p52 = scmp.eq.s32.totalorder %s14, 1
    %p53 = por %p51, %p52
    %p54 = scmp.ne.s32.totalorder %s45, %s46
    %p55 = scmp.eq.s32.totalorder %s14, 0
    %p56 = por %p54, %p55
    %p57 = scmp.ne.s32.totalorder %s45, %s46
    %p58 = scmp.eq.s32.totalorder %s15, 1
    %p59 = por %p57, %p58
    %p61 = scmp.ne.s32.totalorder %s46, %s60
    %p62 = scmp.eq.s32.totalorder %s15, 0
    %p63 = por %p61, %p62
    %s65 = sadd.s32 %s64, 1
    %p68 = scmp.eq.s32.totalorder %s9, 1
    %p69 = scmp.ne.s32.totalorder %s64, %s66
    %p70 = scmp.eq.s32.totalorder %s9, 0
    %p71 = por %p69, %p70
    %p72 = scmp.ne.s32.totalorder %s64, %s66
    %p73 = scmp.eq.s32.totalorder %s14, 1
    %p74 = por %p72, %p73
    %p75 = scmp.ne.s32.totalorder %s66, %s67
    %p76 = scmp.eq.s32.totalorder %s14, 0
    %p77 = por %p75, %p76
    %p78 = scmp.ne.s32.totalorder %s66, %s67
    %p79 = scmp.eq.s32.totalorder %s15, 1
    %p80 = por %p78, %p79
    %p82 = scmp.ne.s32.totalorder %s67, %s81
    %p83 = scmp.eq.s32.totalorder %s15, 0
    %p84 = por %p82, %p83
    %s85 = ssub.s32 %s9, %s16
    %p86 = scmp.eq.s32.totalorder %s85, 0
    %s88 = sadd.s32 %s87, 1
    %s89 = scalar_select %p86, %s87, %s88
    %p92 = pneg %p86
    %p93 = scmp.eq.s32.totalorder %s9, 1
    %p94 = por %p92, %p93
    %p95 = scmp.ne.s32.totalorder %s87, %s90
    %p96 = scmp.eq.s32.totalorder %s9, 0
    %p97 = por %p95, %p96
    %p98 = scmp.ne.s32.totalorder %s87, %s90
    %p99 = scmp.eq.s32.totalorder %s14, 1
    %p100 = por %p98, %p99
    %p101 = scmp.ne.s32.totalorder %s90, %s91
    %p102 = scmp.eq.s32.totalorder %s14, 0
    %p103 = por %p101, %p102
    %p104 = scmp.ne.s32.totalorder %s90, %s91
    %p105 = scmp.eq.s32.totalorder %s15, 1
    %p106 = por %p104, %p105
    %p108 = scmp.ne.s32.totalorder %s91, %s107
    %p109 = scmp.eq.s32.totalorder %s15, 0
    %p110 = por %p108, %p109
    %p111 = scmp.le.s32.totalorder 1, %s9
    %p112 = scmp.lt.s32.totalorder %s9, 3
    %p113 = pnand %p111, %p112
    %p114 = pneg %p113
    // Predicated region
    $region9: #{discriminator_forward.4} parent=5 // pred_check
      _
    $region10: #{discriminator_forward.4} parent=5 // pred_check_branch
      %116 = sbr.rel (%p113) target = $region12
    $region11: #{discriminator_forward.4} parent=5 // pred_region
      %s117 = ssub.s32 %s9, 1
      // Predicated region
      $region13: #{discriminator_forward.4} parent=11 // pred_check
        %p118 = pneg %p56
      $region14: #{discriminator_forward.4} parent=11 // pred_check_branch
        %120 = sbr.rel (%p118) target = $region16
      $region15: #{discriminator_forward.4} parent=11 // pred_region
        _
      $region16: #{discriminator_forward.4} parent=11 // pred_fallthru
        _
      // Predicated region
      $region17: #{discriminator_forward.4} parent=11 // pred_check
        %p121 = pneg %p77
      $region18: #{discriminator_forward.4} parent=11 // pred_check_branch
        %123 = sbr.rel (%p121) target = $region20
      $region19: #{discriminator_forward.4} parent=11 // pred_region
        _
      $region20: #{discriminator_forward.4} parent=11 // pred_fallthru
        _
    $region12: #{discriminator_forward.4} parent=5 // pred_fallthru
      _
    %p124 = scmp.lt.s32.totalorder %s9, 2
    // Predicated region
    $region21: #{discriminator_forward.4} parent=5 // pred_check
      %p125 = pneg %p124
    $region22: #{discriminator_forward.4} parent=5 // pred_check_branch
      %127 = sbr.rel (%p125) target = $region24
    $region23: #{discriminator_forward.4} parent=5 // pred_region
      // Predicated region
      $region25: #{discriminator_forward.4} parent=23 // pred_check
        %p128 = pneg %p29
      $region26: #{discriminator_forward.4} parent=23 // pred_check_branch
        %130 = sbr.rel (%p128) target = $region28
      $region27: #{discriminator_forward.4} parent=23 // pred_region
        %p131 = scmp.lt.s32.totalorder %s9, 1
        %s132 = scalar_select %p131, %s9, 1
        %s133 = smul.addr %s132, 68
        %s134 = smul.addr %s133, 4
        %s135 = scalar_lea.vmem %s0, %s134
      $region28: #{discriminator_forward.4} parent=23 // pred_fallthru
        _
    $region24: #{discriminator_forward.4} parent=5 // pred_fallthru
      _
    %p136 = scmp.le.s32.totalorder 1, %s9
    %p137 = scmp.lt.s32.totalorder %s9, 3
    %p138 = pnand %p136, %p137
    %p139 = pneg %p138
    // Predicated region
    $region29: #{discriminator_forward.4} parent=5 // pred_check
      _
    $region30: #{discriminator_forward.4} parent=5 // pred_check_branch
      %141 = sbr.rel (%p138) target = $region32
    $region31: #{discriminator_forward.4} parent=5 // pred_region
      %s142 = ssub.s32 %s9, 1
      %p143 = scmp.lt.s32.totalorder %s14, 1
      %s144 = scalar_select %p143, %s14, 1
      %s145 = smul.addr %s144, 68
      %s146 = smul.addr %s145, 4
      %s147 = scalar_lea.vmem %s0, %s146
      %p148 = pneg %p35
      %p149 = pneg %p32
      %p150 = pneg %p56
      %p151 = pneg %p53
      %p152 = pneg %p77
      %p153 = pneg %p74
      %p154 = pneg %p103
      %p155 = pneg %p100
      %p156 = scmp.lt.s32.totalorder %s14, 1
      %s157 = scalar_select %p156, %s14, 1
      %s158 = smul.addr %s157, 32
      %s159 = smul.addr %s158, 4
      %s160 = scalar_lea.vmem %s3, %s159
      %p161 = scmp.lt.s32.totalorder %s14, 1
      %s162 = scalar_select %p161, %s14, 1
      %s163 = smul.addr %s162, 68
      %s164 = smul.addr %s163, 4
      %s165 = scalar_lea.vmem %s0, %s164
      %p166 = scmp.lt.s32.totalorder %s14, 1
      %s167 = scalar_select %p166, %s14, 1
      %s168 = smul.addr %s167, 32
      %s169 = smul.addr %s168, 4
      %s170 = scalar_lea.vmem %s3, %s169
      %v172 = vld [vmem:[%s165] sm:$0xf]
      %v173 = vld [vmem:[%s165 + $0x4] sm:$0xf]
      %v174 = vld [vmem:[%s165 + $0x8] sm:$0xf]
      %v175 = vld [vmem:[%s165 + $0xc] sm:$0xf]
      %v176 = vld [vmem:[%s165 + $0x10] sm:$0xf]
      %v177 = vld [vmem:[%s165 + $0x14] sm:$0xf]
      %v178 = vld [vmem:[%s165 + $0x18] sm:$0xf]
      %v179 = vld [vmem:[%s165 + $0x1c] sm:$0xf]
      %v180 = vld [vmem:[%s165 + $0x20] sm:$0xf]
      %v181 = vld [vmem:[%s165 + $0x24] sm:$0xf]
      %v182 = vld [vmem:[%s165 + $0x28] sm:$0xf]
      %v183 = vld [vmem:[%s165 + $0x2c] sm:$0xf]
      %v184 = vld [vmem:[%s165 + $0x30] sm:$0xf]
      %v185 = vld [vmem:[%s165 + $0x34] sm:$0xf]
      %v186 = vld [vmem:[%s165 + $0x38] sm:$0xf]
      %v187 = vld [vmem:[%s165 + $0x3c] sm:$0xf]
      %v188 = vld [vmem:[%s165 + $0x40] sm:$0xf]
      %v189 = vld [vmem:[%s165 + $0x44] sm:$0xf]
      %v190 = vld [vmem:[%s165 + $0x48] sm:$0xf]
      %v191 = vld [vmem:[%s165 + $0x4c] sm:$0xf]
      %v192 = vld [vmem:[%s165 + $0x50] sm:$0xf]
      %v193 = vld [vmem:[%s165 + $0x54] sm:$0xf]
      %v194 = vld [vmem:[%s165 + $0x58] sm:$0xf]
      %v195 = vld [vmem:[%s165 + $0x5c] sm:$0xf]
      %v196 = vld [vmem:[%s165 + $0x60] sm:$0xf]
      %v197 = vld [vmem:[%s165 + $0x64] sm:$0xf]
      %v198 = vld [vmem:[%s165 + $0x68] sm:$0xf]
      %v199 = vld [vmem:[%s165 + $0x6c] sm:$0xf]
      %v200 = vld [vmem:[%s165 + $0x70] sm:$0xf]
      %v201 = vld [vmem:[%s165 + $0x74] sm:$0xf]
      %v202 = vld [vmem:[%s165 + $0x78] sm:$0xf]
      %v203 = vld [vmem:[%s165 + $0x7c] sm:$0xf]
      %v204 = vld [vmem:[%s1] sm:$0xf]
      %v205 = vld [vmem:[%s1 + $0x4] sm:$0x1]
      %v238 = vunpack.c.l.b16 %v172
      %v239 = vunpack.c.l.b16 %v173
      %v240 = vunpack.c.l.b16 %v174
      %v241 = vunpack.c.l.b16 %v175
      %v242 = vunpack.c.l.b16 %v176
      %v243 = vunpack.c.l.b16 %v177
      %v244 = vunpack.c.l.b16 %v178
      %v245 = vunpack.c.l.b16 %v179
      %v246 = vunpack.c.l.b16 %v180
      %v247 = vunpack.c.l.b16 %v181
      %v248 = vunpack.c.l.b16 %v182
      %v249 = vunpack.c.l.b16 %v183
      %v250 = vunpack.c.l.b16 %v184
      %v251 = vunpack.c.l.b16 %v185
      %v252 = vunpack.c.l.b16 %v186
      %v253 = vunpack.c.l.b16 %v187
      %v254 = vunpack.c.l.b16 %v188
      %v255 = vunpack.c.l.b16 %v189
      %v256 = vunpack.c.l.b16 %v190
      %v257 = vunpack.c.l.b16 %v191
      %v258 = vunpack.c.l.b16 %v192
      %v259 = vunpack.c.l.b16 %v193
      %v260 = vunpack.c.l.b16 %v194
      %v261 = vunpack.c.l.b16 %v195
      %v262 = vunpack.c.l.b16 %v196
      %v263 = vunpack.c.l.b16 %v197
      %v264 = vunpack.c.l.b16 %v198
      %v265 = vunpack.c.l.b16 %v199
      %v266 = vunpack.c.l.b16 %v200
      %v267 = vunpack.c.l.b16 %v201
      %v268 = vunpack.c.l.b16 %v202
      %v269 = vunpack.c.l.b16 %v203
      %v270 = vpack.c.b16 %v239, %v238
      %v271 = vpack.c.b16 %v241, %v240
      %v272 = vpack.c.b16 %v243, %v242
      %v273 = vpack.c.b16 %v245, %v244
      %v274 = vpack.c.b16 %v247, %v246
      %v275 = vpack.c.b16 %v249, %v248
      %v276 = vpack.c.b16 %v251, %v250
      %v277 = vpack.c.b16 %v253, %v252
      %v278 = vpack.c.b16 %v255, %v254
      %v279 = vpack.c.b16 %v257, %v256
      %v280 = vpack.c.b16 %v259, %v258
      %v281 = vpack.c.b16 %v261, %v260
      %v282 = vpack.c.b16 %v263, %v262
      %v283 = vpack.c.b16 %v265, %v264
      %v284 = vpack.c.b16 %v267, %v266
      %v285 = vpack.c.b16 %v269, %v268
      %v288 = vunpack.c.l.b16 %v204
      %v289 = vunpack.c.l.b16 %v205
      %v290 = vpack.c.b16 %v289, %v288
      %vm291 = vcmask 72704
      %v293 = vsel %vm291, %v270, 0
      %v296 = vsel %vm291, %v271, 0
      %v299 = vsel %vm291, %v272, 0
      %v302 = vsel %vm291, %v273, 0
      %v305 = vsel %vm291, %v274, 0
      %v308 = vsel %vm291, %v275, 0
      %v311 = vsel %vm291, %v276, 0
      %v314 = vsel %vm291, %v277, 0
      %v317 = vsel %vm291, %v278, 0
      %v320 = vsel %vm291, %v279, 0
      %v323 = vsel %vm291, %v280, 0
      %v326 = vsel %vm291, %v281, 0
      %v329 = vsel %vm291, %v282, 0
      %v332 = vsel %vm291, %v283, 0
      %v335 = vsel %vm291, %v284, 0
      %v338 = vsel %vm291, %v285, 0
      %vm340 = vcmask 1043456
      %vm341 = vcmask 1044480
      %v342 = vsel %vm340, 4294967295, 65535
      %v343 = vsel %vm341, %v342, 0
      %v345 = vand.u32 %v290, %v343
      %347 = vmatprep.subr.bf16.mxu0 0
      %348 = vmatpush1.bf16.msra.mxu0 %v345
      %349 = vmatprep.subr.bf16.mxu0 0
      %350 = vmatpush1.bf16.msra.mxu0 0
      %351 = vmatprep.subr.bf16.mxu0 0
      %352 = vmatpush1.bf16.msra.mxu0 0
      %353 = vmatprep.subr.bf16.mxu0 0
      %354 = vmatpush1.bf16.msra.mxu0 0
      %355 = vmatprep.subr.bf16.mxu0 0
      %356 = vmatpush1.bf16.msra.mxu0 0
      %357 = vmatprep.subr.bf16.mxu0 0
      %358 = vmatpush1.bf16.msra.mxu0 0
      %359 = vmatprep.subr.bf16.mxu0 0
      %360 = vmatpush1.bf16.msra.mxu0 0
      %361 = vmatprep.subr.bf16.mxu0 0
      %362 = vmatpush1.bf16.msra.mxu0 0
      %363 = vmatprep.subr.bf16.mxu0 0
      %364 = vmatpush1.bf16.msra.mxu0 0
      %365 = vmatprep.subr.bf16.mxu0 0
      %366 = vmatpush1.bf16.msra.mxu0 0
      %367 = vmatprep.subr.bf16.mxu0 0
      %368 = vmatpush1.bf16.msra.mxu0 0
      %369 = vmatprep.subr.bf16.mxu0 0
      %370 = vmatpush1.bf16.msra.mxu0 0
      %371 = vmatprep.subr.bf16.mxu0 0
      %372 = vmatpush1.bf16.msra.mxu0 0
      %373 = vmatprep.subr.bf16.mxu0 0
      %374 = vmatpush1.bf16.msra.mxu0 0
      %375 = vmatprep.subr.bf16.mxu0 0
      %376 = vmatpush1.bf16.msra.mxu0 0
      %377 = vmatprep.subr.bf16.mxu0 0
      %378 = vmatpush1.bf16.msra.mxu0 0
      %379 = vmatprep.mubr.bf16.mxu0 0
      %380 = vmatmul.mubr.bf16.gmra.mrb[0].mxu0 %v293
      %v381 = vpop.f32.mrb[0].mxu0
      %v382 = vadd.f32 0.0, %v381
      %v383 = vpop.f32.mrb[0].mxu0
      %v384 = vpop.f32.mrb[0].mxu0
      %v385 = vadd.f32 0.0, %v384
      %v386 = vpop.f32.mrb[0].mxu0
      %387 = vmatprep.mubr.bf16.mxu0 0
      %388 = vmatmul.mubr.bf16.gmra.mrb[0].mxu0 %v296
      %v389 = vpop.f32.mrb[0].mxu0
      %v390 = vadd.f32 0.0, %v389
      %v391 = vpop.f32.mrb[0].mxu0
      %v392 = vpop.f32.mrb[0].mxu0
      %v393 = vadd.f32 0.0, %v392
      %v394 = vpop.f32.mrb[0].mxu0
      %395 = vmatprep.mubr.bf16.mxu0 0
      %396 = vmatmul.mubr.bf16.gmra.mrb[0].mxu0 %v299
      %v397 = vpop.f32.mrb[0].mxu0
      %v398 = vadd.f32 0.0, %v397
      %v399 = vpop.f32.mrb[0].mxu0
      %v400 = vpop.f32.mrb[0].mxu0
      %v401 = vadd.f32 0.0, %v400
      %v402 = vpop.f32.mrb[0].mxu0
      %403 = vmatprep.mubr.bf16.mxu0 0
      %404 = vmatmul.mubr.bf16.gmra.mrb[0].mxu0 %v302
      %v405 = vpop.f32.mrb[0].mxu0
      %v406 = vadd.f32 0.0, %v405
      %v407 = vpop.f32.mrb[0].mxu0
      %v408 = vpop.f32.mrb[0].mxu0
      %v409 = vadd.f32 0.0, %v408
      %v410 = vpop.f32.mrb[0].mxu0
      %411 = vmatprep.mubr.bf16.mxu0 0
      %412 = vmatmul.mubr.bf16.gmra.mrb[0].mxu0 %v305
      %v413 = vpop.f32.mrb[0].mxu0
      %v414 = vadd.f32 0.0, %v413
      %v415 = vpop.f32.mrb[0].mxu0
      %v416 = vpop.f32.mrb[0].mxu0
      %v417 = vadd.f32 0.0, %v416
      %v418 = vpop.f32.mrb[0].mxu0
      %419 = vmatprep.mubr.bf16.mxu0 0
      %420 = vmatmul.mubr.bf16.gmra.mrb[0].mxu0 %v308
      %v421 = vpop.f32.mrb[0].mxu0
      %v422 = vadd.f32 0.0, %v421
      %v423 = vpop.f32.mrb[0].mxu0
      %v424 = vpop.f32.mrb[0].mxu0
      %v425 = vadd.f32 0.0, %v424
      %v426 = vpop.f32.mrb[0].mxu0
      %427 = vmatprep.mubr.bf16.mxu0 0
      %428 = vmatmul.mubr.bf16.gmra.mrb[0].mxu0 %v311
      %v429 = vpop.f32.mrb[0].mxu0
      %v430 = vadd.f32 0.0, %v429
      %v431 = vpop.f32.mrb[0].mxu0
      %v432 = vpop.f32.mrb[0].mxu0
      %v433 = vadd.f32 0.0, %v432
      %v434 = vpop.f32.mrb[0].mxu0
      %435 = vmatprep.mubr.bf16.mxu0 0
      %436 = vmatmul.mubr.bf16.gmra.mrb[0].mxu0 %v314
      %v437 = vpop.f32.mrb[0].mxu0
      %v438 = vadd.f32 0.0, %v437
      %v439 = vpop.f32.mrb[0].mxu0
      %v440 = vpop.f32.mrb[0].mxu0
      %v441 = vadd.f32 0.0, %v440
      %v442 = vpop.f32.mrb[0].mxu0
      %443 = vmatprep.mubr.bf16.mxu0 0
      %444 = vmatmul.mubr.bf16.gmra.mrb[0].mxu0 %v317
      %v445 = vpop.f32.mrb[0].mxu0
      %v446 = vadd.f32 0.0, %v445
      %v447 = vpop.f32.mrb[0].mxu0
      %v448 = vpop.f32.mrb[0].mxu0
      %v449 = vadd.f32 0.0, %v448
      %v450 = vpop.f32.mrb[0].mxu0
      %451 = vmatprep.mubr.bf16.mxu0 0
      %452 = vmatmul.mubr.bf16.gmra.mrb[0].mxu0 %v320
      %v453 = vpop.f32.mrb[0].mxu0
      %v454 = vadd.f32 0.0, %v453
      %v455 = vpop.f32.mrb[0].mxu0
      %v456 = vpop.f32.mrb[0].mxu0
      %v457 = vadd.f32 0.0, %v456
      %v458 = vpop.f32.mrb[0].mxu0
      %459 = vmatprep.mubr.bf16.mxu0 0
      %460 = vmatmul.mubr.bf16.gmra.mrb[0].mxu0 %v323
      %v461 = vpop.f32.mrb[0].mxu0
      %v462 = vadd.f32 0.0, %v461
      %v463 = vpop.f32.mrb[0].mxu0
      %v464 = vpop.f32.mrb[0].mxu0
      %v465 = vadd.f32 0.0, %v464
      %v466 = vpop.f32.mrb[0].mxu0
      %467 = vmatprep.mubr.bf16.mxu0 0
      %468 = vmatmul.mubr.bf16.gmra.mrb[0].mxu0 %v326
      %v469 = vpop.f32.mrb[0].mxu0
      %v470 = vadd.f32 0.0, %v469
      %v471 = vpop.f32.mrb[0].mxu0
      %v472 = vpop.f32.mrb[0].mxu0
      %v473 = vadd.f32 0.0, %v472
      %v474 = vpop.f32.mrb[0].mxu0
      %475 = vmatprep.mubr.bf16.mxu0 0
      %476 = vmatmul.mubr.bf16.gmra.mrb[0].mxu0 %v329
      %v477 = vpop.f32.mrb[0].mxu0
      %v478 = vadd.f32 0.0, %v477
      %v479 = vpop.f32.mrb[0].mxu0
      %v480 = vpop.f32.mrb[0].mxu0
      %v481 = vadd.f32 0.0, %v480
      %v482 = vpop.f32.mrb[0].mxu0
      %483 = vmatprep.mubr.bf16.mxu0 0
      %484 = vmatmul.mubr.bf16.gmra.mrb[0].mxu0 %v332
      %v485 = vpop.f32.mrb[0].mxu0
      %v486 = vadd.f32 0.0, %v485
      %v487 = vpop.f32.mrb[0].mxu0
      %v488 = vpop.f32.mrb[0].mxu0
      %v489 = vadd.f32 0.0, %v488
      %v490 = vpop.f32.mrb[0].mxu0
      %491 = vmatprep.mubr.bf16.mxu0 0
      %492 = vmatmul.mubr.bf16.gmra.mrb[0].mxu0 %v335
      %v493 = vpop.f32.mrb[0].mxu0
      %v494 = vadd.f32 0.0, %v493
      %v495 = vpop.f32.mrb[0].mxu0
      %v496 = vpop.f32.mrb[0].mxu0
      %v497 = vadd.f32 0.0, %v496
      %v498 = vpop.f32.mrb[0].mxu0
      %499 = vmatprep.mubr.bf16.mxu0 0
      %500 = vmatmul.mubr.bf16.gmra.mrb[0].mxu0 %v338
      %v501 = vpop.f32.mrb[0].mxu0
      %v502 = vadd.f32 0.0, %v501
      %v503 = vpop.f32.mrb[0].mxu0
      %v504 = vpop.f32.mrb[0].mxu0
      %v505 = vadd.f32 0.0, %v504
      %v506 = vpop.f32.mrb[0].mxu0
      %507 = vdwg.mxu0
      %508 = vst [vmem:[#allocation2] sm:$0xff] %v382
      %509 = vst [vmem:[#allocation2 + $0x8] sm:$0xff] %v385
      %510 = vst [vmem:[#allocation2 + $0x10] sm:$0xff] %v390
      %511 = vst [vmem:[#allocation2 + $0x18] sm:$0xff] %v393
      %512 = vst [vmem:[#allocation2 + $0x20] sm:$0xff] %v398
      %513 = vst [vmem:[#allocation2 + $0x28] sm:$0xff] %v401
      %514 = vst [vmem:[#allocation2 + $0x30] sm:$0xff] %v406
      %515 = vst [vmem:[#allocation2 + $0x38] sm:$0xff] %v409
      %516 = vst [vmem:[#allocation2 + $0x40] sm:$0xff] %v414
      %517 = vst [vmem:[#allocation2 + $0x48] sm:$0xff] %v417
      %518 = vst [vmem:[#allocation2 + $0x50] sm:$0xff] %v422
      %519 = vst [vmem:[#allocation2 + $0x58] sm:$0xff] %v425
      %520 = vst [vmem:[#allocation2 + $0x60] sm:$0xff] %v430
      %521 = vst [vmem:[#allocation2 + $0x68] sm:$0xff] %v433
      %522 = vst [vmem:[#allocation2 + $0x70] sm:$0xff] %v438
      %523 = vst [vmem:[#allocation2 + $0x78] sm:$0xff] %v441
      %524 = vst [vmem:[#allocation2 + $0x80] sm:$0xff] %v446
      %525 = vst [vmem:[#allocation2 + $0x88] sm:$0xff] %v449
      %526 = vst [vmem:[#allocation2 + $0x90] sm:$0xff] %v454
      %527 = vst [vmem:[#allocation2 + $0x98] sm:$0xff] %v457
      %528 = vst [vmem:[#allocation2 + $0xa0] sm:$0xff] %v462
      %529 = vst [vmem:[#allocation2 + $0xa8] sm:$0xff] %v465
      %530 = vst [vmem:[#allocation2 + $0xb0] sm:$0xff] %v470
      %531 = vst [vmem:[#allocation2 + $0xb8] sm:$0xff] %v473
      %532 = vst [vmem:[#allocation2 + $0xc0] sm:$0xff] %v478
      %533 = vst [vmem:[#allocation2 + $0xc8] sm:$0xff] %v481
      %534 = vst [vmem:[#allocation2 + $0xd0] sm:$0xff] %v486
      %535 = vst [vmem:[#allocation2 + $0xd8] sm:$0xff] %v489
      %536 = vst [vmem:[#allocation2 + $0xe0] sm:$0xff] %v494
      %537 = vst [vmem:[#allocation2 + $0xe8] sm:$0xff] %v497
      %538 = vst [vmem:[#allocation2 + $0xf0] sm:$0xff] %v502
      %539 = vst [vmem:[#allocation2 + $0xf8] sm:$0xff] %v505
      %v540 = vld [vmem:[#allocation2] sm:$0xff]
      %v541 = vld [vmem:[#allocation2 + $0x8] sm:$0xff]
      %v542 = vld [vmem:[#allocation2 + $0x10] sm:$0xff]
      %v543 = vld [vmem:[#allocation2 + $0x18] sm:$0xff]
      %v544 = vld [vmem:[#allocation2 + $0x20] sm:$0xff]
      %v545 = vld [vmem:[#allocation2 + $0x28] sm:$0xff]
      %v546 = vld [vmem:[#allocation2 + $0x30] sm:$0xff]
      %v547 = vld [vmem:[#allocation2 + $0x38] sm:$0xff]
      %v548 = vld [vmem:[#allocation2 + $0x40] sm:$0xff]
      %v549 = vld [vmem:[#allocation2 + $0x48] sm:$0xff]
      %v550 = vld [vmem:[#allocation2 + $0x50] sm:$0xff]
      %v551 = vld [vmem:[#allocation2 + $0x58] sm:$0xff]
      %v552 = vld [vmem:[#allocation2 + $0x60] sm:$0xff]
      %v553 = vld [vmem:[#allocation2 + $0x68] sm:$0xff]
      %v554 = vld [vmem:[#allocation2 + $0x70] sm:$0xff]
      %v555 = vld [vmem:[#allocation2 + $0x78] sm:$0xff]
      %v556 = vld [vmem:[#allocation2 + $0x80] sm:$0xff]
      %v557 = vld [vmem:[#allocation2 + $0x88] sm:$0xff]
      %v558 = vld [vmem:[#allocation2 + $0x90] sm:$0xff]
      %v559 = vld [vmem:[#allocation2 + $0x98] sm:$0xff]
      %v560 = vld [vmem:[#allocation2 + $0xa0] sm:$0xff]
      %v561 = vld [vmem:[#allocation2 + $0xa8] sm:$0xff]
      %v562 = vld [vmem:[#allocation2 + $0xb0] sm:$0xff]
      %v563 = vld [vmem:[#allocation2 + $0xb8] sm:$0xff]
      %v564 = vld [vmem:[#allocation2 + $0xc0] sm:$0xff]
      %v565 = vld [vmem:[#allocation2 + $0xc8] sm:$0xff]
      %v566 = vld [vmem:[#allocation2 + $0xd0] sm:$0xff]
      %v567 = vld [vmem:[#allocation2 + $0xd8] sm:$0xff]
      %v568 = vld [vmem:[#allocation2 + $0xe0] sm:$0xff]
      %v569 = vld [vmem:[#allocation2 + $0xe8] sm:$0xff]
      %v570 = vld [vmem:[#allocation2 + $0xf0] sm:$0xff]
      %v571 = vld [vmem:[#allocation2 + $0xf8] sm:$0xff]
      %s572 = scalar_lea.vmem %s165, 136
      %v573 = vld [vmem:[%s572] sm:$0xf]
      %v574 = vld [vmem:[%s572 + $0x4] sm:$0xf]
      %v575 = vld [vmem:[%s572 + $0x8] sm:$0xf]
      %v576 = vld [vmem:[%s572 + $0xc] sm:$0xf]
      %v577 = vld [vmem:[%s572 + $0x10] sm:$0xf]
      %v578 = vld [vmem:[%s572 + $0x14] sm:$0xf]
      %v579 = vld [vmem:[%s572 + $0x18] sm:$0xf]
      %v580 = vld [vmem:[%s572 + $0x1c] sm:$0xf]
      %v581 = vld [vmem:[%s572 + $0x20] sm:$0xf]
      %v582 = vld [vmem:[%s572 + $0x24] sm:$0xf]
      %v583 = vld [vmem:[%s572 + $0x28] sm:$0xf]
      %v584 = vld [vmem:[%s572 + $0x2c] sm:$0xf]
      %v585 = vld [vmem:[%s572 + $0x30] sm:$0xf]
      %v586 = vld [vmem:[%s572 + $0x34] sm:$0xf]
      %v587 = vld [vmem:[%s572 + $0x38] sm:$0xf]
      %v588 = vld [vmem:[%s572 + $0x3c] sm:$0xf]
      %v589 = vld [vmem:[%s572 + $0x40] sm:$0xf]
      %v590 = vld [vmem:[%s572 + $0x44] sm:$0xf]
      %v591 = vld [vmem:[%s572 + $0x48] sm:$0xf]
      %v592 = vld [vmem:[%s572 + $0x4c] sm:$0xf]
      %v593 = vld [vmem:[%s572 + $0x50] sm:$0xf]
      %v594 = vld [vmem:[%s572 + $0x54] sm:$0xf]
      %v595 = vld [vmem:[%s572 + $0x58] sm:$0xf]
      %v596 = vld [vmem:[%s572 + $0x5c] sm:$0xf]
      %v597 = vld [vmem:[%s572 + $0x60] sm:$0xf]
      %v598 = vld [vmem:[%s572 + $0x64] sm:$0xf]
      %v599 = vld [vmem:[%s572 + $0x68] sm:$0xf]
      %v600 = vld [vmem:[%s572 + $0x6c] sm:$0xf]
      %v601 = vld [vmem:[%s572 + $0x70] sm:$0xf]
      %v602 = vld [vmem:[%s572 + $0x74] sm:$0xf]
      %v603 = vld [vmem:[%s572 + $0x78] sm:$0xf]
      %v604 = vld [vmem:[%s572 + $0x7c] sm:$0xf]
      %s605 = scalar_lea.vmem %s1, 8
      %v606 = vld [vmem:[%s605] sm:$0xf]
      %v607 = vld [vmem:[%s605 + $0x4] sm:$0x1]
      %v640 = vunpack.c.l.b16 %v573
      %v641 = vunpack.c.l.b16 %v574
      %v642 = vunpack.c.l.b16 %v575
      %v643 = vunpack.c.l.b16 %v576
      %v644 = vunpack.c.l.b16 %v577
      %v645 = vunpack.c.l.b16 %v578
      %v646 = vunpack.c.l.b16 %v579
      %v647 = vunpack.c.l.b16 %v580
      %v648 = vunpack.c.l.b16 %v581
      %v649 = vunpack.c.l.b16 %v582
      %v650 = vunpack.c.l.b16 %v583
      %v651 = vunpack.c.l.b16 %v584
      %v652 = vunpack.c.l.b16 %v585
      %v653 = vunpack.c.l.b16 %v586
      %v654 = vunpack.c.l.b16 %v587
      %v655 = vunpack.c.l.b16 %v588
      %v656 = vunpack.c.l.b16 %v589
      %v657 = vunpack.c.l.b16 %v590
      %v658 = vunpack.c.l.b16 %v591
      %v659 = vunpack.c.l.b16 %v592
      %v660 = vunpack.c.l.b16 %v593
      %v661 = vunpack.c.l.b16 %v594
      %v662 = vunpack.c.l.b16 %v595
      %v663 = vunpack.c.l.b16 %v596
      %v664 = vunpack.c.l.b16 %v597
      %v665 = vunpack.c.l.b16 %v598
      %v666 = vunpack.c.l.b16 %v599
      %v667 = vunpack.c.l.b16 %v600
      %v668 = vunpack.c.l.b16 %v601
      %v669 = vunpack.c.l.b16 %v602
      %v670 = vunpack.c.l.b16 %v603
      %v671 = vunpack.c.l.b16 %v604
      %v672 = vpack.c.b16 %v641, %v640
      %v673 = vpack.c.b16 %v643, %v642
      %v674 = vpack.c.b16 %v645, %v644
      %v675 = vpack.c.b16 %v647, %v646
      %v676 = vpack.c.b16 %v649, %v648
      %v677 = vpack.c.b16 %v651, %v650
      %v678 = vpack.c.b16 %v653, %v652
      %v679 = vpack.c.b16 %v655, %v654
      %v680 = vpack.c.b16 %v657, %v656
      %v681 = vpack.c.b16 %v659, %v658
      %v682 = vpack.c.b16 %v661, %v660
      %v683 = vpack.c.b16 %v663, %v662
      %v684 = vpack.c.b16 %v665, %v664
      %v685 = vpack.c.b16 %v667, %v666
      %v686 = vpack.c.b16 %v669, %v668
      %v687 = vpack.c.b16 %v671, %v670
      %v690 = vunpack.c.l.b16 %v606
      %v691 = vunpack.c.l.b16 %v607
      %v692 = vpack.c.b16 %v691, %v690
      %v694 = vsel %vm291, %v672, 0
      %v697 = vsel %vm291, %v673, 0
      %v700 = vsel %vm291, %v674, 0
      %v703 = vsel %vm291, %v675, 0
      %v706 = vsel %vm291, %v676, 0
      %v709 = vsel %vm291, %v677, 0
      %v712 = vsel %vm291, %v678, 0
      %v715 = vsel %vm291, %v679, 0
      %v718 = vsel %vm291, %v680, 0
      %v721 = vsel %vm291, %v681, 0
      %v724 = vsel %vm291, %v682, 0
      %v727 = vsel %vm291, %v683, 0
      %v730 = vsel %vm291, %v684, 0
      %v733 = vsel %vm291, %v685, 0
      %v736 = vsel %vm291, %v686, 0
      %v739 = vsel %vm291, %v687, 0
      %v742 = vand.u32 %v692, %v343
      %744 = vmatprep.subr.bf16.mxu0 0
      %745 = vmatpush1.bf16.msra.mxu0 %v742
      %746 = vmatprep.subr.bf16.mxu0 0
      %747 = vmatpush1.bf16.msra.mxu0 0
      %748 = vmatprep.subr.bf16.mxu0 0
      %749 = vmatpush1.bf16.msra.mxu0 0
      %750 = vmatprep.subr.bf16.mxu0 0
      %751 = vmatpush1.bf16.msra.mxu0 0
      %752 = vmatprep.subr.bf16.mxu0 0
      %753 = vmatpush1.bf16.msra.mxu0 0
      %754 = vmatprep.subr.bf16.mxu0 0
      %755 = vmatpush1.bf16.msra.mxu0 0
      %756 = vmatprep.subr.bf16.mxu0 0
      %757 = vmatpush1.bf16.msra.mxu0 0
      %758 = vmatprep.subr.bf16.mxu0 0
      %759 = vmatpush1.bf16.msra.mxu0 0
      %760 = vmatprep.subr.bf16.mxu0 0
      %761 = vmatpush1.bf16.msra.mxu0 0
      %762 = vmatprep.subr.bf16.mxu0 0
      %763 = vmatpush1.bf16.msra.mxu0 0
      %764 = vmatprep.subr.bf16.mxu0 0
      %765 = vmatpush1.bf16.msra.mxu0 0
      %766 = vmatprep.subr.bf16.mxu0 0
      %767 = vmatpush1.bf16.msra.mxu0 0
      %768 = vmatprep.subr.bf16.mxu0 0
      %769 = vmatpush1.bf16.msra.mxu0 0
      %770 = vmatprep.subr.bf16.mxu0 0
      %771 = vmatpush1.bf16.msra.mxu0 0
      %772 = vmatprep.subr.bf16.mxu0 0
      %773 = vmatpush1.bf16.msra.mxu0 0
      %774 = vmatprep.subr.bf16.mxu0 0
      %775 = vmatpush1.bf16.msra.mxu0 0
      %776 = vmatprep.mubr.bf16.mxu0 0
      %777 = vmatmul.mubr.bf16.gmra.mrb[0].mxu0 %v694
      %v778 = vpop.f32.mrb[0].mxu0
      %v779 = vadd.f32 0.0, %v778
      %v780 = vpop.f32.mrb[0].mxu0
      %v781 = vpop.f32.mrb[0].mxu0
      %v782 = vadd.f32 0.0, %v781
      %v783 = vpop.f32.mrb[0].mxu0
      %784 = vmatprep.mubr.bf16.mxu0 0
      %785 = vmatmul.mubr.bf16.gmra.mrb[0].mxu0 %v697
      %v786 = vpop.f32.mrb[0].mxu0
      %v787 = vadd.f32 0.0, %v786
      %v788 = vpop.f32.mrb[0].mxu0
      %v789 = vpop.f32.mrb[0].mxu0
      %v790 = vadd.f32 0.0, %v789
      %v791 = vpop.f32.mrb[0].mxu0
      %792 = vmatprep.mubr.bf16.mxu0 0
      %793 = vmatmul.mubr.bf16.gmra.mrb[0].mxu0 %v700
      %v794 = vpop.f32.mrb[0].mxu0
      %v795 = vadd.f32 0.0, %v794
      %v796 = vpop.f32.mrb[0].mxu0
      %v797 = vpop.f32.mrb[0].mxu0
      %v798 = vadd.f32 0.0, %v797
      %v799 = vpop.f32.mrb[0].mxu0
      %800 = vmatprep.mubr.bf16.mxu0 0
      %801 = vmatmul.mubr.bf16.gmra.mrb[0].mxu0 %v703
      %v802 = vpop.f32.mrb[0].mxu0
      %v803 = vadd.f32 0.0, %v802
      %v804 = vpop.f32.mrb[0].mxu0
      %v805 = vpop.f32.mrb[0].mxu0
      %v806 = vadd.f32 0.0, %v805
      %v807 = vpop.f32.mrb[0].mxu0
      %808 = vmatprep.mubr.bf16.mxu0 0
      %809 = vmatmul.mubr.bf16.gmra.mrb[0].mxu0 %v706
      %v810 = vpop.f32.mrb[0].mxu0
      %v811 = vadd.f32 0.0, %v810
      %v812 = vpop.f32.mrb[0].mxu0
      %v813 = vpop.f32.mrb[0].mxu0
      %v814 = vadd.f32 0.0, %v813
      %v815 = vpop.f32.mrb[0].mxu0
      %816 = vmatprep.mubr.bf16.mxu0 0
      %817 = vmatmul.mubr.bf16.gmra.mrb[0].mxu0 %v709
      %v818 = vpop.f32.mrb[0].mxu0
      %v819 = vadd.f32 0.0, %v818
      %v820 = vpop.f32.mrb[0].mxu0
      %v821 = vpop.f32.mrb[0].mxu0
      %v822 = vadd.f32 0.0, %v821
      %v823 = vpop.f32.mrb[0].mxu0
      %824 = vmatprep.mubr.bf16.mxu0 0
      %825 = vmatmul.mubr.bf16.gmra.mrb[0].mxu0 %v712
      %v826 = vpop.f32.mrb[0].mxu0
      %v827 = vadd.f32 0.0, %v826
      %v828 = vpop.f32.mrb[0].mxu0
      %v829 = vpop.f32.mrb[0].mxu0
      %v830 = vadd.f32 0.0, %v829
      %v831 = vpop.f32.mrb[0].mxu0
      %832 = vmatprep.mubr.bf16.mxu0 0
      %833 = vmatmul.mubr.bf16.gmra.mrb[0].mxu0 %v715
      %v834 = vpop.f32.mrb[0].mxu0
      %v835 = vadd.f32 0.0, %v834
      %v836 = vpop.f32.mrb[0].mxu0
      %v837 = vpop.f32.mrb[0].mxu0
      %v838 = vadd.f32 0.0, %v837
      %v839 = vpop.f32.mrb[0].mxu0
      %840 = vmatprep.mubr.bf16.mxu0 0
      %841 = vmatmul.mubr.bf16.gmra.mrb[0].mxu0 %v718
      %v842 = vpop.f32.mrb[0].mxu0
      %v843 = vadd.f32 0.0, %v842
      %v844 = vpop.f32.mrb[0].mxu0
      %v845 = vpop.f32.mrb[0].mxu0
      %v846 = vadd.f32 0.0, %v845
      %v847 = vpop.f32.mrb[0].mxu0
      %848 = vmatprep.mubr.bf16.mxu0 0
      %849 = vmatmul.mubr.bf16.gmra.mrb[0].mxu0 %v721
      %v850 = vpop.f32.mrb[0].mxu0
      %v851 = vadd.f32 0.0, %v850
      %v852 = vpop.f32.mrb[0].mxu0
      %v853 = vpop.f32.mrb[0].mxu0
      %v854 = vadd.f32 0.0, %v853
      %v855 = vpop.f32.mrb[0].mxu0
      %856 = vmatprep.mubr.bf16.mxu0 0
      %857 = vmatmul.mubr.bf16.gmra.mrb[0].mxu0 %v724
      %v858 = vpop.f32.mrb[0].mxu0
      %v859 = vadd.f32 0.0, %v858
      %v860 = vpop.f32.mrb[0].mxu0
      %v861 = vpop.f32.mrb[0].mxu0
      %v862 = vadd.f32 0.0, %v861
      %v863 = vpop.f32.mrb[0].mxu0
      %864 = vmatprep.mubr.bf16.mxu0 0
      %865 = vmatmul.mubr.bf16.gmra.mrb[0].mxu0 %v727
      %v866 = vpop.f32.mrb[0].mxu0
      %v867 = vadd.f32 0.0, %v866
      %v868 = vpop.f32.mrb[0].mxu0
      %v869 = vpop.f32.mrb[0].mxu0
      %v870 = vadd.f32 0.0, %v869
      %v871 = vpop.f32.mrb[0].mxu0
      %872 = vmatprep.mubr.bf16.mxu0 0
      %873 = vmatmul.mubr.bf16.gmra.mrb[0].mxu0 %v730
      %v874 = vpop.f32.mrb[0].mxu0
      %v875 = vadd.f32 0.0, %v874
      %v876 = vpop.f32.mrb[0].mxu0
      %v877 = vpop.f32.mrb[0].mxu0
      %v878 = vadd.f32 0.0, %v877
      %v879 = vpop.f32.mrb[0].mxu0
      %880 = vmatprep.mubr.bf16.mxu0 0
      %881 = vmatmul.mubr.bf16.gmra.mrb[0].mxu0 %v733
      %v882 = vpop.f32.mrb[0].mxu0
      %v883 = vadd.f32 0.0, %v882
      %v884 = vpop.f32.mrb[0].mxu0
      %v885 = vpop.f32.mrb[0].mxu0
      %v886 = vadd.f32 0.0, %v885
      %v887 = vpop.f32.mrb[0].mxu0
      %888 = vmatprep.mubr.bf16.mxu0 0
      %889 = vmatmul.mubr.bf16.gmra.mrb[0].mxu0 %v736
      %v890 = vpop.f32.mrb[0].mxu0
      %v891 = vadd.f32 0.0, %v890
      %v892 = vpop.f32.mrb[0].mxu0
      %v893 = vpop.f32.mrb[0].mxu0
      %v894 = vadd.f32 0.0, %v893
      %v895 = vpop.f32.mrb[0].mxu0
      %896 = vmatprep.mubr.bf16.mxu0 0
      %897 = vmatmul.mubr.bf16.gmra.mrb[0].mxu0 %v739
      %v898 = vpop.f32.mrb[0].mxu0
      %v899 = vadd.f32 0.0, %v898
      %v900 = vpop.f32.mrb[0].mxu0
      %v901 = vpop.f32.mrb[0].mxu0
      %v902 = vadd.f32 0.0, %v901
      %v903 = vpop.f32.mrb[0].mxu0
      %904 = vdwg.mxu0
      %v905 = vadd.f32 %v540, %v779
      %v906 = vadd.f32 %v541, %v782
      %v907 = vadd.f32 %v542, %v787
      %v908 = vadd.f32 %v543, %v790
      %v909 = vadd.f32 %v544, %v795
      %v910 = vadd.f32 %v545, %v798
      %v911 = vadd.f32 %v546, %v803
      %v912 = vadd.f32 %v547, %v806
      %v913 = vadd.f32 %v548, %v811
      %v914 = vadd.f32 %v549, %v814
      %v915 = vadd.f32 %v550, %v819
      %v916 = vadd.f32 %v551, %v822
      %v917 = vadd.f32 %v552, %v827
      %v918 = vadd.f32 %v553, %v830
      %v919 = vadd.f32 %v554, %v835
      %v920 = vadd.f32 %v555, %v838
      %v921 = vadd.f32 %v556, %v843
      %v922 = vadd.f32 %v557, %v846
      %v923 = vadd.f32 %v558, %v851
      %v924 = vadd.f32 %v559, %v854
      %v925 = vadd.f32 %v560, %v859
      %v926 = vadd.f32 %v561, %v862
      %v927 = vadd.f32 %v562, %v867
      %v928 = vadd.f32 %v563, %v870
      %v929 = vadd.f32 %v564, %v875
      %v930 = vadd.f32 %v565, %v878
      %v931 = vadd.f32 %v566, %v883
      %v932 = vadd.f32 %v567, %v886
      %v933 = vadd.f32 %v568, %v891
      %v934 = vadd.f32 %v569, %v894
      %v935 = vadd.f32 %v570, %v899
      %v936 = vadd.f32 %v571, %v902
      %937 = vst [vmem:[#allocation2] sm:$0xff] %v905
      %938 = vst [vmem:[#allocation2 + $0x8] sm:$0xff] %v906
      %939 = vst [vmem:[#allocation2 + $0x10] sm:$0xff] %v907
      %940 = vst [vmem:[#allocation2 + $0x18] sm:$0xff] %v908
      %941 = vst [vmem:[#allocation2 + $0x20] sm:$0xff] %v909
      %942 = vst [vmem:[#allocation2 + $0x28] sm:$0xff] %v910
      %943 = vst [vmem:[#allocation2 + $0x30] sm:$0xff] %v911
      %944 = vst [vmem:[#allocation2 + $0x38] sm:$0xff] %v912
      %945 = vst [vmem:[#allocation2 + $0x40] sm:$0xff] %v913
      %946 = vst [vmem:[#allocation2 + $0x48] sm:$0xff] %v914
      %947 = vst [vmem:[#allocation2 + $0x50] sm:$0xff] %v915
      %948 = vst [vmem:[#allocation2 + $0x58] sm:$0xff] %v916
      %949 = vst [vmem:[#allocation2 + $0x60] sm:$0xff] %v917
      %950 = vst [vmem:[#allocation2 + $0x68] sm:$0xff] %v918
      %951 = vst [vmem:[#allocation2 + $0x70] sm:$0xff] %v919
      %952 = vst [vmem:[#allocation2 + $0x78] sm:$0xff] %v920
      %953 = vst [vmem:[#allocation2 + $0x80] sm:$0xff] %v921
      %954 = vst [vmem:[#allocation2 + $0x88] sm:$0xff] %v922
      %955 = vst [vmem:[#allocation2 + $0x90] sm:$0xff] %v923
      %956 = vst [vmem:[#allocation2 + $0x98] sm:$0xff] %v924
      %957 = vst [vmem:[#allocation2 + $0xa0] sm:$0xff] %v925
      %958 = vst [vmem:[#allocation2 + $0xa8] sm:$0xff] %v926
      %959 = vst [vmem:[#allocation2 + $0xb0] sm:$0xff] %v927
      %960 = vst [vmem:[#allocation2 + $0xb8] sm:$0xff] %v928
      %961 = vst [vmem:[#allocation2 + $0xc0] sm:$0xff] %v929
      %962 = vst [vmem:[#allocation2 + $0xc8] sm:$0xff] %v930
      %963 = vst [vmem:[#allocation2 + $0xd0] sm:$0xff] %v931
      %964 = vst [vmem:[#allocation2 + $0xd8] sm:$0xff] %v932
      %965 = vst [vmem:[#allocation2 + $0xe0] sm:$0xff] %v933
      %966 = vst [vmem:[#allocation2 + $0xe8] sm:$0xff] %v934
      %967 = vst [vmem:[#allocation2 + $0xf0] sm:$0xff] %v935
      %968 = vst [vmem:[#allocation2 + $0xf8] sm:$0xff] %v936
      %v969 = vld [vmem:[#allocation2] sm:$0xff]
      %v970 = vld [vmem:[#allocation2 + $0x8] sm:$0xff]
      %v971 = vld [vmem:[#allocation2 + $0x10] sm:$0xff]
      %v972 = vld [vmem:[#allocation2 + $0x18] sm:$0xff]
      %v973 = vld [vmem:[#allocation2 + $0x20] sm:$0xff]
      %v974 = vld [vmem:[#allocation2 + $0x28] sm:$0xff]
      %v975 = vld [vmem:[#allocation2 + $0x30] sm:$0xff]
      %v976 = vld [vmem:[#allocation2 + $0x38] sm:$0xff]
      %v977 = vld [vmem:[#allocation2 + $0x40] sm:$0xff]
      %v978 = vld [vmem:[#allocation2 + $0x48] sm:$0xff]
      %v979 = vld [vmem:[#allocation2 + $0x50] sm:$0xff]
      %v980 = vld [vmem:[#allocation2 + $0x58] sm:$0xff]
      %v981 = vld [vmem:[#allocation2 + $0x60] sm:$0xff]
      %v982 = vld [vmem:[#allocation2 + $0x68] sm:$0xff]
      %v983 = vld [vmem:[#allocation2 + $0x70] sm:$0xff]
      %v984 = vld [vmem:[#allocation2 + $0x78] sm:$0xff]
      %v985 = vld [vmem:[#allocation2 + $0x80] sm:$0xff]
      %v986 = vld [vmem:[#allocation2 + $0x88] sm:$0xff]
      %v987 = vld [vmem:[#allocation2 + $0x90] sm:$0xff]
      %v988 = vld [vmem:[#allocation2 + $0x98] sm:$0xff]
      %v989 = vld [vmem:[#allocation2 + $0xa0] sm:$0xff]
      %v990 = vld [vmem:[#allocation2 + $0xa8] sm:$0xff]
      %v991 = vld [vmem:[#allocation2 + $0xb0] sm:$0xff]
      %v992 = vld [vmem:[#allocation2 + $0xb8] sm:$0xff]
      %v993 = vld [vmem:[#allocation2 + $0xc0] sm:$0xff]
      %v994 = vld [vmem:[#allocation2 + $0xc8] sm:$0xff]
      %v995 = vld [vmem:[#allocation2 + $0xd0] sm:$0xff]
      %v996 = vld [vmem:[#allocation2 + $0xd8] sm:$0xff]
      %v997 = vld [vmem:[#allocation2 + $0xe0] sm:$0xff]
      %v998 = vld [vmem:[#allocation2 + $0xe8] sm:$0xff]
      %v999 = vld [vmem:[#allocation2 + $0xf0] sm:$0xff]
      %v1000 = vld [vmem:[#allocation2 + $0xf8] sm:$0xff]
      %v1001 = vld [vmem:[%s165 + $0x8] sm:$0xf]
      %v1002 = vld [vmem:[%s165 + $0xc] sm:$0xf]
      %v1003 = vld [vmem:[%s165 + $0x10] sm:$0xf]
      %v1004 = vld [vmem:[%s165 + $0x14] sm:$0xf]
      %v1005 = vld [vmem:[%s165 + $0x18] sm:$0xf]
      %v1006 = vld [vmem:[%s165 + $0x1c] sm:$0xf]
      %v1007 = vld [vmem:[%s165 + $0x20] sm:$0xf]
      %v1008 = vld [vmem:[%s165 + $0x24] sm:$0xf]
      %v1009 = vld [vmem:[%s165 + $0x28] sm:$0xf]
      %v1010 = vld [vmem:[%s165 + $0x2c] sm:$0xf]
      %v1011 = vld [vmem:[%s165 + $0x30] sm:$0xf]
      %v1012 = vld [vmem:[%s165 + $0x34] sm:$0xf]
      %v1013 = vld [vmem:[%s165 + $0x38] sm:$0xf]
      %v1014 = vld [vmem:[%s165 + $0x3c] sm:$0xf]
      %v1015 = vld [vmem:[%s165 + $0x40] sm:$0xf]
      %v1016 = vld [vmem:[%s165 + $0x44] sm:$0xf]
      %v1017 = vld [vmem:[%s165 + $0x48] sm:$0xf]
      %v1018 = vld [vmem:[%s165 + $0x4c] sm:$0xf]
      %v1019 = vld [vmem:[%s165 + $0x50] sm:$0xf]
      %v1020 = vld [vmem:[%s165 + $0x54] sm:$0xf]
      %v1021 = vld [vmem:[%s165 + $0x58] sm:$0xf]
      %v1022 = vld [vmem:[%s165 + $0x5c] sm:$0xf]
      %v1023 = vld [vmem:[%s165 + $0x60] sm:$0xf]
      %v1024 = vld [vmem:[%s165 + $0x64] sm:$0xf]
      %v1025 = vld [vmem:[%s165 + $0x68] sm:$0xf]
      %v1026 = vld [vmem:[%s165 + $0x6c] sm:$0xf]
      %v1027 = vld [vmem:[%s165 + $0x70] sm:$0xf]
      %v1028 = vld [vmem:[%s165 + $0x74] sm:$0xf]
      %v1029 = vld [vmem:[%s165 + $0x78] sm:$0xf]
      %v1030 = vld [vmem:[%s165 + $0x7c] sm:$0xf]
      %v1031 = vld [vmem:[%s165 + $0x80] sm:$0xf]
      %v1032 = vld [vmem:[%s165 + $0x84] sm:$0xf]
      %s1033 = scalar_lea.vmem %s1, 16
      %v1034 = vld [vmem:[%s1033] sm:$0xf]
      %v1035 = vld [vmem:[%s1033 + $0x4] sm:$0x1]
      %v1068 = vunpack.c.l.b16 %v1001
      %v1069 = vunpack.c.l.b16 %v1002
      %v1070 = vunpack.c.l.b16 %v1003
      %v1071 = vunpack.c.l.b16 %v1004
      %v1072 = vunpack.c.l.b16 %v1005
      %v1073 = vunpack.c.l.b16 %v1006
      %v1074 = vunpack.c.l.b16 %v1007
      %v1075 = vunpack.c.l.b16 %v1008
      %v1076 = vunpack.c.l.b16 %v1009
      %v1077 = vunpack.c.l.b16 %v1010
      %v1078 = vunpack.c.l.b16 %v1011
      %v1079 = vunpack.c.l.b16 %v1012
      %v1080 = vunpack.c.l.b16 %v1013
      %v1081 = vunpack.c.l.b16 %v1014
      %v1082 = vunpack.c.l.b16 %v1015
      %v1083 = vunpack.c.l.b16 %v1016
      %v1084 = vunpack.c.l.b16 %v1017
      %v1085 = vunpack.c.l.b16 %v1018
      %v1086 = vunpack.c.l.b16 %v1019
      %v1087 = vunpack.c.l.b16 %v1020
      %v1088 = vunpack.c.l.b16 %v1021
      %v1089 = vunpack.c.l.b16 %v1022
      %v1090 = vunpack.c.l.b16 %v1023
      %v1091 = vunpack.c.l.b16 %v1024
      %v1092 = vunpack.c.l.b16 %v1025
      %v1093 = vunpack.c.l.b16 %v1026
      %v1094 = vunpack.c.l.b16 %v1027
      %v1095 = vunpack.c.l.b16 %v1028
      %v1096 = vunpack.c.l.b16 %v1029
      %v1097 = vunpack.c.l.b16 %v1030
      %v1098 = vunpack.c.l.b16 %v1031
      %v1099 = vunpack.c.l.b16 %v1032
      %v1100 = vpack.c.b16 %v1069, %v1068
      %v1101 = vpack.c.b16 %v1071, %v1070
      %v1102 = vpack.c.b16 %v1073, %v1072
      %v1103 = vpack.c.b16 %v1075, %v1074
      %v1104 = vpack.c.b16 %v1077, %v1076
      %v1105 = vpack.c.b16 %v1079, %v1078
      %v1106 = vpack.c.b16 %v1081, %v1080
      %v1107 = vpack.c.b16 %v1083, %v1082
      %v1108 = vpack.c.b16 %v1085, %v1084
      %v1109 = vpack.c.b16 %v1087, %v1086
      %v1110 = vpack.c.b16 %v1089, %v1088
      %v1111 = vpack.c.b16 %v1091, %v1090
      %v1112 = vpack.c.b16 %v1093, %v1092
      %v1113 = vpack.c.b16 %v1095, %v1094
      %v1114 = vpack.c.b16 %v1097, %v1096
      %v1115 = vpack.c.b16 %v1099, %v1098
      %v1118 = vunpack.c.l.b16 %v1034
      %v1119 = vunpack.c.l.b16 %v1035
      %v1120 = vpack.c.b16 %v1119, %v1118
      %v1122 = vsel %vm291, %v1100, 0
      %v1125 = vsel %vm291, %v1101, 0
      %v1128 = vsel %vm291, %v1102, 0
      %v1131 = vsel %vm291, %v1103, 0
      %v1134 = vsel %vm291, %v1104, 0
      %v1137 = vsel %vm291, %v1105, 0
      %v1140 = vsel %vm291, %v1106, 0
      %v1143 = vsel %vm291, %v1107, 0
      %v1146 = vsel %vm291, %v1108, 0
      %v1149 = vsel %vm291, %v1109, 0
      %v1152 = vsel %vm291, %v1110, 0
      %v1155 = vsel %vm291, %v1111, 0
      %v1158 = vsel %vm291, %v1112, 0
      %v1161 = vsel %vm291, %v1113, 0
      %v1164 = vsel %vm291, %v1114, 0
      %v1167 = vsel %vm291, %v1115, 0
      %v1170 = vand.u32 %v1120, %v343
      %1172 = vmatprep.subr.bf16.mxu0 0
      %1173 = vmatpush1.bf16.msra.mxu0 %v1170
      %1174 = vmatprep.subr.bf16.mxu0 0
      %1175 = vmatpush1.bf16.msra.mxu0 0
      %1176 = vmatprep.subr.bf16.mxu0 0
      %1177 = vmatpush1.bf16.msra.mxu0 0
      %1178 = vmatprep.subr.bf16.mxu0 0
      %1179 = vmatpush1.bf16.msra.mxu0 0
      %1180 = vmatprep.subr.bf16.mxu0 0
      %1181 = vmatpush1.bf16.msra.mxu0 0
      %1182 = vmatprep.subr.bf16.mxu0 0
      %1183 = vmatpush1.bf16.msra.mxu0 0
      %1184 = vmatprep.subr.bf16.mxu0 0
      %1185 = vmatpush1.bf16.msra.mxu0 0
      %1186 = vmatprep.subr.bf16.mxu0 0
      %1187 = vmatpush1.bf16.msra.mxu0 0
      %1188 = vmatprep.subr.bf16.mxu0 0
      %1189 = vmatpush1.bf16.msra.mxu0 0
      %1190 = vmatprep.subr.bf16.mxu0 0
      %1191 = vmatpush1.bf16.msra.mxu0 0
      %1192 = vmatprep.subr.bf16.mxu0 0
      %1193 = vmatpush1.bf16.msra.mxu0 0
      %1194 = vmatprep.subr.bf16.mxu0 0
      %1195 = vmatpush1.bf16.msra.mxu0 0
      %1196 = vmatprep.subr.bf16.mxu0 0
      %1197 = vmatpush1.bf16.msra.mxu0 0
      %1198 = vmatprep.subr.bf16.mxu0 0
      %1199 = vmatpush1.bf16.msra.mxu0 0
      %1200 = vmatprep.subr.bf16.mxu0 0
      %1201 = vmatpush1.bf16.msra.mxu0 0
      %1202 = vmatprep.subr.bf16.mxu0 0
      %1203 = vmatpush1.bf16.msra.mxu0 0
      %1204 = vmatprep.mubr.bf16.mxu0 0
      %1205 = vmatmul.mubr.bf16.gmra.mrb[0].mxu0 %v1122
      %v1206 = vpop.f32.mrb[0].mxu0
      %v1207 = vadd.f32 0.0, %v1206
      %v1208 = vpop.f32.mrb[0].mxu0
      %v1209 = vpop.f32.mrb[0].mxu0
      %v1210 = vadd.f32 0.0, %v1209
      %v1211 = vpop.f32.mrb[0].mxu0
      %1212 = vmatprep.mubr.bf16.mxu0 0
      %1213 = vmatmul.mubr.bf16.gmra.mrb[0].mxu0 %v1125
      %v1214 = vpop.f32.mrb[0].mxu0
      %v1215 = vadd.f32 0.0, %v1214
      %v1216 = vpop.f32.mrb[0].mxu0
      %v1217 = vpop.f32.mrb[0].mxu0
      %v1218 = vadd.f32 0.0, %v1217
      %v1219 = vpop.f32.mrb[0].mxu0
      %1220 = vmatprep.mubr.bf16.mxu0 0
      %1221 = vmatmul.mubr.bf16.gmra.mrb[0].mxu0 %v1128
      %v1222 = vpop.f32.mrb[0].mxu0
      %v1223 = vadd.f32 0.0, %v1222
      %v1224 = vpop.f32.mrb[0].mxu0
      %v1225 = vpop.f32.mrb[0].mxu0
      %v1226 = vadd.f32 0.0, %v1225
      %v1227 = vpop.f32.mrb[0].mxu0
      %1228 = vmatprep.mubr.bf16.mxu0 0
      %1229 = vmatmul.mubr.bf16.gmra.mrb[0].mxu0 %v1131
      %v1230 = vpop.f32.mrb[0].mxu0
      %v1231 = vadd.f32 0.0, %v1230
      %v1232 = vpop.f32.mrb[0].mxu0
      %v1233 = vpop.f32.mrb[0].mxu0
      %v1234 = vadd.f32 0.0, %v1233
      %v1235 = vpop.f32.mrb[0].mxu0
      %1236 = vmatprep.mubr.bf16.mxu0 0
      %1237 = vmatmul.mubr.bf16.gmra.mrb[0].mxu0 %v1134
      %v1238 = vpop.f32.mrb[0].mxu0
      %v1239 = vadd.f32 0.0, %v1238
      %v1240 = vpop.f32.mrb[0].mxu0
      %v1241 = vpop.f32.mrb[0].mxu0
      %v1242 = vadd.f32 0.0, %v1241
      %v1243 = vpop.f32.mrb[0].mxu0
      %1244 = vmatprep.mubr.bf16.mxu0 0
      %1245 = vmatmul.mubr.bf16.gmra.mrb[0].mxu0 %v1137
      %v1246 = vpop.f32.mrb[0].mxu0
      %v1247 = vadd.f32 0.0, %v1246
      %v1248 = vpop.f32.mrb[0].mxu0
      %v1249 = vpop.f32.mrb[0].mxu0
      %v1250 = vadd.f32 0.0, %v1249
      %v1251 = vpop.f32.mrb[0].mxu0
      %1252 = vmatprep.mubr.bf16.mxu0 0
      %1253 = vmatmul.mubr.bf16.gmra.mrb[0].mxu0 %v1140
      %v1254 = vpop.f32.mrb[0].mxu0
      %v1255 = vadd.f32 0.0, %v1254
      %v1256 = vpop.f32.mrb[0].mxu0
      %v1257 = vpop.f32.mrb[0].mxu0
      %v1258 = vadd.f32 0.0, %v1257
      %v1259 = vpop.f32.mrb[0].mxu0
      %1260 = vmatprep.mubr.bf16.mxu0 0
      %1261 = vmatmul.mubr.bf16.gmra.mrb[0].mxu0 %v1143
      %v1262 = vpop.f32.mrb[0].mxu0
      %v1263 = vadd.f32 0.0, %v1262
      %v1264 = vpop.f32.mrb[0].mxu0
      %v1265 = vpop.f32.mrb[0].mxu0
      %v1266 = vadd.f32 0.0, %v1265
      %v1267 = vpop.f32.mrb[0].mxu0
      %1268 = vmatprep.mubr.bf16.mxu0 0
      %1269 = vmatmul.mubr.bf16.gmra.mrb[0].mxu0 %v1146
      %v1270 = vpop.f32.mrb[0].mxu0
      %v1271 = vadd.f32 0.0, %v1270
      %v1272 = vpop.f32.mrb[0].mxu0
      %v1273 = vpop.f32.mrb[0].mxu0
      %v1274 = vadd.f32 0.0, %v1273
      %v1275 = vpop.f32.mrb[0].mxu0
      %1276 = vmatprep.mubr.bf16.mxu0 0
      %1277 = vmatmul.mubr.bf16.gmra.mrb[0].mxu0 %v1149
      %v1278 = vpop.f32.mrb[0].mxu0
      %v1279 = vadd.f32 0.0, %v1278
      %v1280 = vpop.f32.mrb[0].mxu0
      %v1281 = vpop.f32.mrb[0].mxu0
      %v1282 = vadd.f32 0.0, %v1281
      %v1283 = vpop.f32.mrb[0].mxu0
      %1284 = vmatprep.mubr.bf16.mxu0 0
      %1285 = vmatmul.mubr.bf16.gmra.mrb[0].mxu0 %v1152
      %v1286 = vpop.f32.mrb[0].mxu0
      %v1287 = vadd.f32 0.0, %v1286
      %v1288 = vpop.f32.mrb[0].mxu0
      %v1289 = vpop.f32.mrb[0].mxu0
      %v1290 = vadd.f32 0.0, %v1289
      %v1291 = vpop.f32.mrb[0].mxu0
      %1292 = vmatprep.mubr.bf16.mxu0 0
      %1293 = vmatmul.mubr.bf16.gmra.mrb[0].mxu0 %v1155
      %v1294 = vpop.f32.mrb[0].mxu0
      %v1295 = vadd.f32 0.0, %v1294
      %v1296 = vpop.f32.mrb[0].mxu0
      %v1297 = vpop.f32.mrb[0].mxu0
      %v1298 = vadd.f32 0.0, %v1297
      %v1299 = vpop.f32.mrb[0].mxu0
      %1300 = vmatprep.mubr.bf16.mxu0 0
      %1301 = vmatmul.mubr.bf16.gmra.mrb[0].mxu0 %v1158
      %v1302 = vpop.f32.mrb[0].mxu0
      %v1303 = vadd.f32 0.0, %v1302
      %v1304 = vpop.f32.mrb[0].mxu0
      %v1305 = vpop.f32.mrb[0].mxu0
      %v1306 = vadd.f32 0.0, %v1305
      %v1307 = vpop.f32.mrb[0].mxu0
      %1308 = vmatprep.mubr.bf16.mxu0 0
      %1309 = vmatmul.mubr.bf16.gmra.mrb[0].mxu0 %v1161
      %v1310 = vpop.f32.mrb[0].mxu0
      %v1311 = vadd.f32 0.0, %v1310
      %v1312 = vpop.f32.mrb[0].mxu0
      %v1313 = vpop.f32.mrb[0].mxu0
      %v1314 = vadd.f32 0.0, %v1313
      %v1315 = vpop.f32.mrb[0].mxu0
      %1316 = vmatprep.mubr.bf16.mxu0 0
      %1317 = vmatmul.mubr.bf16.gmra.mrb[0].mxu0 %v1164
      %v1318 = vpop.f32.mrb[0].mxu0
      %v1319 = vadd.f32 0.0, %v1318
      %v1320 = vpop.f32.mrb[0].mxu0
      %v1321 = vpop.f32.mrb[0].mxu0
      %v1322 = vadd.f32 0.0, %v1321
      %v1323 = vpop.f32.mrb[0].mxu0
      %1324 = vmatprep.mubr.bf16.mxu0 0
      %1325 = vmatmul.mubr.bf16.gmra.mrb[0].mxu0 %v1167
      %v1326 = vpop.f32.mrb[0].mxu0
      %v1327 = vadd.f32 0.0, %v1326
      %v1328 = vpop.f32.mrb[0].mxu0
      %v1329 = vpop.f32.mrb[0].mxu0
      %v1330 = vadd.f32 0.0, %v1329
      %v1331 = vpop.f32.mrb[0].mxu0
      %1332 = vdwg.mxu0
      %v1333 = vadd.f32 %v969, %v1207
      %v1334 = vadd.f32 %v970, %v1210
      %v1335 = vadd.f32 %v971, %v1215
      %v1336 = vadd.f32 %v972, %v1218
      %v1337 = vadd.f32 %v973, %v1223
      %v1338 = vadd.f32 %v974, %v1226
      %v1339 = vadd.f32 %v975, %v1231
      %v1340 = vadd.f32 %v976, %v1234
      %v1341 = vadd.f32 %v977, %v1239
      %v1342 = vadd.f32 %v978, %v1242
      %v1343 = vadd.f32 %v979, %v1247
      %v1344 = vadd.f32 %v980, %v1250
      %v1345 = vadd.f32 %v981, %v1255
      %v1346 = vadd.f32 %v982, %v1258
      %v1347 = vadd.f32 %v983, %v1263
      %v1348 = vadd.f32 %v984, %v1266
      %v1349 = vadd.f32 %v985, %v1271
      %v1350 = vadd.f32 %v986, %v1274
      %v1351 = vadd.f32 %v987, %v1279
      %v1352 = vadd.f32 %v988, %v1282
      %v1353 = vadd.f32 %v989, %v1287
      %v1354 = vadd.f32 %v990, %v1290
      %v1355 = vadd.f32 %v991, %v1295
      %v1356 = vadd.f32 %v992, %v1298
      %v1357 = vadd.f32 %v993, %v1303
      %v1358 = vadd.f32 %v994, %v1306
      %v1359 = vadd.f32 %v995, %v1311
      %v1360 = vadd.f32 %v996, %v1314
      %v1361 = vadd.f32 %v997, %v1319
      %v1362 = vadd.f32 %v998, %v1322
      %v1363 = vadd.f32 %v999, %v1327
      %v1364 = vadd.f32 %v1000, %v1330
      %1365 = vst [vmem:[#allocation2] sm:$0xff] %v1333
      %1366 = vst [vmem:[#allocation2 + $0x8] sm:$0xff] %v1334
      %1367 = vst [vmem:[#allocation2 + $0x10] sm:$0xff] %v1335
      %1368 = vst [vmem:[#allocation2 + $0x18] sm:$0xff] %v1336
      %1369 = vst [vmem:[#allocation2 + $0x20] sm:$0xff] %v1337
      %1370 = vst [vmem:[#allocation2 + $0x28] sm:$0xff] %v1338
      %1371 = vst [vmem:[#allocation2 + $0x30] sm:$0xff] %v1339
      %1372 = vst [vmem:[#allocation2 + $0x38] sm:$0xff] %v1340
      %1373 = vst [vmem:[#allocation2 + $0x40] sm:$0xff] %v1341
      %1374 = vst [vmem:[#allocation2 + $0x48] sm:$0xff] %v1342
      %1375 = vst [vmem:[#allocation2 + $0x50] sm:$0xff] %v1343
      %1376 = vst [vmem:[#allocation2 + $0x58] sm:$0xff] %v1344
      %1377 = vst [vmem:[#allocation2 + $0x60] sm:$0xff] %v1345
      %1378 = vst [vmem:[#allocation2 + $0x68] sm:$0xff] %v1346
      %1379 = vst [vmem:[#allocation2 + $0x70] sm:$0xff] %v1347
      %1380 = vst [vmem:[#allocation2 + $0x78] sm:$0xff] %v1348
      %1381 = vst [vmem:[#allocation2 + $0x80] sm:$0xff] %v1349
      %1382 = vst [vmem:[#allocation2 + $0x88] sm:$0xff] %v1350
      %1383 = vst [vmem:[#allocation2 + $0x90] sm:$0xff] %v1351
      %1384 = vst [vmem:[#allocation2 + $0x98] sm:$0xff] %v1352
      %1385 = vst [vmem:[#allocation2 + $0xa0] sm:$0xff] %v1353
      %1386 = vst [vmem:[#allocation2 + $0xa8] sm:$0xff] %v1354
      %1387 = vst [vmem:[#allocation2 + $0xb0] sm:$0xff] %v1355
      %1388 = vst [vmem:[#allocation2 + $0xb8] sm:$0xff] %v1356
      %1389 = vst [vmem:[#allocation2 + $0xc0] sm:$0xff] %v1357
      %1390 = vst [vmem:[#allocation2 + $0xc8] sm:$0xff] %v1358
      %1391 = vst [vmem:[#allocation2 + $0xd0] sm:$0xff] %v1359
      %1392 = vst [vmem:[#allocation2 + $0xd8] sm:$0xff] %v1360
      %1393 = vst [vmem:[#allocation2 + $0xe0] sm:$0xff] %v1361
      %1394 = vst [vmem:[#allocation2 + $0xe8] sm:$0xff] %v1362
      %1395 = vst [vmem:[#allocation2 + $0xf0] sm:$0xff] %v1363
      %1396 = vst [vmem:[#allocation2 + $0xf8] sm:$0xff] %v1364
      %v1397 = vld [vmem:[#allocation2] sm:$0xff]
      %v1398 = vld [vmem:[#allocation2 + $0x8] sm:$0xff]
      %v1399 = vld [vmem:[#allocation2 + $0x10] sm:$0xff]
      %v1400 = vld [vmem:[#allocation2 + $0x18] sm:$0xff]
      %v1401 = vld [vmem:[#allocation2 + $0x20] sm:$0xff]
      %v1402 = vld [vmem:[#allocation2 + $0x28] sm:$0xff]
      %v1403 = vld [vmem:[#allocation2 + $0x30] sm:$0xff]
      %v1404 = vld [vmem:[#allocation2 + $0x38] sm:$0xff]
      %v1405 = vld [vmem:[#allocation2 + $0x40] sm:$0xff]
      %v1406 = vld [vmem:[#allocation2 + $0x48] sm:$0xff]
      %v1407 = vld [vmem:[#allocation2 + $0x50] sm:$0xff]
      %v1408 = vld [vmem:[#allocation2 + $0x58] sm:$0xff]
      %v1409 = vld [vmem:[#allocation2 + $0x60] sm:$0xff]
      %v1410 = vld [vmem:[#allocation2 + $0x68] sm:$0xff]
      %v1411 = vld [vmem:[#allocation2 + $0x70] sm:$0xff]
      %v1412 = vld [vmem:[#allocation2 + $0x78] sm:$0xff]
      %v1413 = vld [vmem:[#allocation2 + $0x80] sm:$0xff]
      %v1414 = vld [vmem:[#allocation2 + $0x88] sm:$0xff]
      %v1415 = vld [vmem:[#allocation2 + $0x90] sm:$0xff]
      %v1416 = vld [vmem:[#allocation2 + $0x98] sm:$0xff]
      %v1417 = vld [vmem:[#allocation2 + $0xa0] sm:$0xff]
      %v1418 = vld [vmem:[#allocation2 + $0xa8] sm:$0xff]
      %v1419 = vld [vmem:[#allocation2 + $0xb0] sm:$0xff]
      %v1420 = vld [vmem:[#allocation2 + $0xb8] sm:$0xff]
      %v1421 = vld [vmem:[#allocation2 + $0xc0] sm:$0xff]
      %v1422 = vld [vmem:[#allocation2 + $0xc8] sm:$0xff]
      %v1423 = vld [vmem:[#allocation2 + $0xd0] sm:$0xff]
      %v1424 = vld [vmem:[#allocation2 + $0xd8] sm:$0xff]
      %v1425 = vld [vmem:[#allocation2 + $0xe0] sm:$0xff]
      %v1426 = vld [vmem:[#allocation2 + $0xe8] sm:$0xff]
      %v1427 = vld [vmem:[#allocation2 + $0xf0] sm:$0xff]
      %v1428 = vld [vmem:[#allocation2 + $0xf8] sm:$0xff]
      %v1429 = vld [vmem:[%s2] sm:$0x1]
      %v1431 = vlaneseq
      %v1432 = vshrl.u32 %v1431, 7
      %v1433 = vsub.s32 0, %v1432
      %v1434 = vrot.slane %v1429, %v1433
      %v1436 = vadd.f32 %v1397, %v1434
      %v1437 = vadd.f32 %v1398, %v1434
      %v1438 = vadd.f32 %v1399, %v1434
      %v1439 = vadd.f32 %v1400, %v1434
      %v1440 = vadd.f32 %v1401, %v1434
      %v1441 = vadd.f32 %v1402, %v1434
      %v1442 = vadd.f32 %v1403, %v1434
      %v1443 = vadd.f32 %v1404, %v1434
      %v1444 = vadd.f32 %v1405, %v1434
      %v1445 = vadd.f32 %v1406, %v1434
      %v1446 = vadd.f32 %v1407, %v1434
      %v1447 = vadd.f32 %v1408, %v1434
      %v1448 = vadd.f32 %v1409, %v1434
      %v1449 = vadd.f32 %v1410, %v1434
      %v1450 = vadd.f32 %v1411, %v1434
      %v1451 = vadd.f32 %v1412, %v1434
      %v1452 = vadd.f32 %v1413, %v1434
      %v1453 = vadd.f32 %v1414, %v1434
      %v1454 = vadd.f32 %v1415, %v1434
      %v1455 = vadd.f32 %v1416, %v1434
      %v1456 = vadd.f32 %v1417, %v1434
      %v1457 = vadd.f32 %v1418, %v1434
      %v1458 = vadd.f32 %v1419, %v1434
      %v1459 = vadd.f32 %v1420, %v1434
      %v1460 = vadd.f32 %v1421, %v1434
      %v1461 = vadd.f32 %v1422, %v1434
      %v1462 = vadd.f32 %v1423, %v1434
      %v1463 = vadd.f32 %v1424, %v1434
      %v1464 = vadd.f32 %v1425, %v1434
      %v1465 = vadd.f32 %v1426, %v1434
      %v1466 = vadd.f32 %v1427, %v1434
      %v1467 = vadd.f32 %v1428, %v1434
      %vm1468 = vcmp.ge.f32.partialorder %v1436, 0.0
      %vm1469 = vcmp.ge.f32.partialorder %v1437, 0.0
      %vm1470 = vcmp.ge.f32.partialorder %v1438, 0.0
      %vm1471 = vcmp.ge.f32.partialorder %v1439, 0.0
      %vm1472 = vcmp.ge.f32.partialorder %v1440, 0.0
      %vm1473 = vcmp.ge.f32.partialorder %v1441, 0.0
      %vm1474 = vcmp.ge.f32.partialorder %v1442, 0.0
      %vm1475 = vcmp.ge.f32.partialorder %v1443, 0.0
      %vm1476 = vcmp.ge.f32.partialorder %v1444, 0.0
      %vm1477 = vcmp.ge.f32.partialorder %v1445, 0.0
      %vm1478 = vcmp.ge.f32.partialorder %v1446, 0.0
      %vm1479 = vcmp.ge.f32.partialorder %v1447, 0.0
      %vm1480 = vcmp.ge.f32.partialorder %v1448, 0.0
      %vm1481 = vcmp.ge.f32.partialorder %v1449, 0.0
      %vm1482 = vcmp.ge.f32.partialorder %v1450, 0.0
      %vm1483 = vcmp.ge.f32.partialorder %v1451, 0.0
      %vm1484 = vcmp.ge.f32.partialorder %v1452, 0.0
      %vm1485 = vcmp.ge.f32.partialorder %v1453, 0.0
      %vm1486 = vcmp.ge.f32.partialorder %v1454, 0.0
      %vm1487 = vcmp.ge.f32.partialorder %v1455, 0.0
      %vm1488 = vcmp.ge.f32.partialorder %v1456, 0.0
      %vm1489 = vcmp.ge.f32.partialorder %v1457, 0.0
      %vm1490 = vcmp.ge.f32.partialorder %v1458, 0.0
      %vm1491 = vcmp.ge.f32.partialorder %v1459, 0.0
      %vm1492 = vcmp.ge.f32.partialorder %v1460, 0.0
      %vm1493 = vcmp.ge.f32.partialorder %v1461, 0.0
      %vm1494 = vcmp.ge.f32.partialorder %v1462, 0.0
      %vm1495 = vcmp.ge.f32.partialorder %v1463, 0.0
      %vm1496 = vcmp.ge.f32.partialorder %v1464, 0.0
      %vm1497 = vcmp.ge.f32.partialorder %v1465, 0.0
      %vm1498 = vcmp.ge.f32.partialorder %v1466, 0.0
      %vm1499 = vcmp.ge.f32.partialorder %v1467, 0.0
      %v1500 = vmul.f32 %v1436, 0.3
      %v1501 = vmul.f32 %v1437, 0.3
      %v1502 = vmul.f32 %v1438, 0.3
      %v1503 = vmul.f32 %v1439, 0.3
      %v1504 = vmul.f32 %v1440, 0.3
      %v1505 = vmul.f32 %v1441, 0.3
      %v1506 = vmul.f32 %v1442, 0.3
      %v1507 = vmul.f32 %v1443, 0.3
      %v1508 = vmul.f32 %v1444, 0.3
      %v1509 = vmul.f32 %v1445, 0.3
      %v1510 = vmul.f32 %v1446, 0.3
      %v1511 = vmul.f32 %v1447, 0.3
      %v1512 = vmul.f32 %v1448, 0.3
      %v1513 = vmul.f32 %v1449, 0.3
      %v1514 = vmul.f32 %v1450, 0.3
      %v1515 = vmul.f32 %v1451, 0.3
      %v1516 = vmul.f32 %v1452, 0.3
      %v1517 = vmul.f32 %v1453, 0.3
      %v1518 = vmul.f32 %v1454, 0.3
      %v1519 = vmul.f32 %v1455, 0.3
      %v1520 = vmul.f32 %v1456, 0.3
      %v1521 = vmul.f32 %v1457, 0.3
      %v1522 = vmul.f32 %v1458, 0.3
      %v1523 = vmul.f32 %v1459, 0.3
      %v1524 = vmul.f32 %v1460, 0.3
      %v1525 = vmul.f32 %v1461, 0.3
      %v1526 = vmul.f32 %v1462, 0.3
      %v1527 = vmul.f32 %v1463, 0.3
      %v1528 = vmul.f32 %v1464, 0.3
      %v1529 = vmul.f32 %v1465, 0.3
      %v1530 = vmul.f32 %v1466, 0.3
      %v1531 = vmul.f32 %v1467, 0.3
      %v1532 = vsel %vm1468, %v1436, %v1500
      %v1533 = vsel %vm1469, %v1437, %v1501
      %v1534 = vsel %vm1470, %v1438, %v1502
      %v1535 = vsel %vm1471, %v1439, %v1503
      %v1536 = vsel %vm1472, %v1440, %v1504
      %v1537 = vsel %vm1473, %v1441, %v1505
      %v1538 = vsel %vm1474, %v1442, %v1506
      %v1539 = vsel %vm1475, %v1443, %v1507
      %v1540 = vsel %vm1476, %v1444, %v1508
      %v1541 = vsel %vm1477, %v1445, %v1509
      %v1542 = vsel %vm1478, %v1446, %v1510
      %v1543 = vsel %vm1479, %v1447, %v1511
      %v1544 = vsel %vm1480, %v1448, %v1512
      %v1545 = vsel %vm1481, %v1449, %v1513
      %v1546 = vsel %vm1482, %v1450, %v1514
      %v1547 = vsel %vm1483, %v1451, %v1515
      %v1548 = vsel %vm1484, %v1452, %v1516
      %v1549 = vsel %vm1485, %v1453, %v1517
      %v1550 = vsel %vm1486, %v1454, %v1518
      %v1551 = vsel %vm1487, %v1455, %v1519
      %v1552 = vsel %vm1488, %v1456, %v1520
      %v1553 = vsel %vm1489, %v1457, %v1521
      %v1554 = vsel %vm1490, %v1458, %v1522
      %v1555 = vsel %vm1491, %v1459, %v1523
      %v1556 = vsel %vm1492, %v1460, %v1524
      %v1557 = vsel %vm1493, %v1461, %v1525
      %v1558 = vsel %vm1494, %v1462, %v1526
      %v1559 = vsel %vm1495, %v1463, %v1527
      %v1560 = vsel %vm1496, %v1464, %v1528
      %v1561 = vsel %vm1497, %v1465, %v1529
      %v1562 = vsel %vm1498, %v1466, %v1530
      %v1563 = vsel %vm1499, %v1467, %v1531
      %v1564 = vpack.c.bf16 %v1533, %v1532
      %v1565 = vpack.c.bf16 %v1535, %v1534
      %v1566 = vpack.c.bf16 %v1537, %v1536
      %v1567 = vpack.c.bf16 %v1539, %v1538
      %v1568 = vpack.c.bf16 %v1541, %v1540
      %v1569 = vpack.c.bf16 %v1543, %v1542
      %v1570 = vpack.c.bf16 %v1545, %v1544
      %v1571 = vpack.c.bf16 %v1547, %v1546
      %v1572 = vpack.c.bf16 %v1549, %v1548
      %v1573 = vpack.c.bf16 %v1551, %v1550
      %v1574 = vpack.c.bf16 %v1553, %v1552
      %v1575 = vpack.c.bf16 %v1555, %v1554
      %v1576 = vpack.c.bf16 %v1557, %v1556
      %v1577 = vpack.c.bf16 %v1559, %v1558
      %v1578 = vpack.c.bf16 %v1561, %v1560
      %v1579 = vpack.c.bf16 %v1563, %v1562
      %v1596 = vunpack.c.l.b16 %v1564
      %v1597 = vunpack.c.h.b16 %v1564
      %v1598 = vunpack.c.l.b16 %v1565
      %v1599 = vunpack.c.h.b16 %v1565
      %v1600 = vunpack.c.l.b16 %v1566
      %v1601 = vunpack.c.h.b16 %v1566
      %v1602 = vunpack.c.l.b16 %v1567
      %v1603 = vunpack.c.h.b16 %v1567
      %v1604 = vunpack.c.l.b16 %v1568
      %v1605 = vunpack.c.h.b16 %v1568
      %v1606 = vunpack.c.l.b16 %v1569
      %v1607 = vunpack.c.h.b16 %v1569
      %v1608 = vunpack.c.l.b16 %v1570
      %v1609 = vunpack.c.h.b16 %v1570
      %v1610 = vunpack.c.l.b16 %v1571
      %v1611 = vunpack.c.h.b16 %v1571
      %v1612 = vunpack.c.l.b16 %v1572
      %v1613 = vunpack.c.h.b16 %v1572
      %v1614 = vunpack.c.l.b16 %v1573
      %v1615 = vunpack.c.h.b16 %v1573
      %v1616 = vunpack.c.l.b16 %v1574
      %v1617 = vunpack.c.h.b16 %v1574
      %v1618 = vunpack.c.l.b16 %v1575
      %v1619 = vunpack.c.h.b16 %v1575
      %v1620 = vunpack.c.l.b16 %v1576
      %v1621 = vunpack.c.h.b16 %v1576
      %v1622 = vunpack.c.l.b16 %v1577
      %v1623 = vunpack.c.h.b16 %v1577
      %v1624 = vunpack.c.l.b16 %v1578
      %v1625 = vunpack.c.h.b16 %v1578
      %v1626 = vunpack.c.l.b16 %v1579
      %v1627 = vunpack.c.h.b16 %v1579
      %v1628 = vpack.c.b16 %v1596, %v1596
      %v1629 = vpack.c.b16 %v1597, %v1597
      %v1630 = vpack.c.b16 %v1598, %v1598
      %v1631 = vpack.c.b16 %v1599, %v1599
      %v1632 = vpack.c.b16 %v1600, %v1600
      %v1633 = vpack.c.b16 %v1601, %v1601
      %v1634 = vpack.c.b16 %v1602, %v1602
      %v1635 = vpack.c.b16 %v1603, %v1603
      %v1636 = vpack.c.b16 %v1604, %v1604
      %v1637 = vpack.c.b16 %v1605, %v1605
      %v1638 = vpack.c.b16 %v1606, %v1606
      %v1639 = vpack.c.b16 %v1607, %v1607
      %v1640 = vpack.c.b16 %v1608, %v1608
      %v1641 = vpack.c.b16 %v1609, %v1609
      %v1642 = vpack.c.b16 %v1610, %v1610
      %v1643 = vpack.c.b16 %v1611, %v1611
      %v1644 = vpack.c.b16 %v1612, %v1612
      %v1645 = vpack.c.b16 %v1613, %v1613
      %v1646 = vpack.c.b16 %v1614, %v1614
      %v1647 = vpack.c.b16 %v1615, %v1615
      %v1648 = vpack.c.b16 %v1616, %v1616
      %v1649 = vpack.c.b16 %v1617, %v1617
      %v1650 = vpack.c.b16 %v1618, %v1618
      %v1651 = vpack.c.b16 %v1619, %v1619
      %v1652 = vpack.c.b16 %v1620, %v1620
      %v1653 = vpack.c.b16 %v1621, %v1621
      %v1654 = vpack.c.b16 %v1622, %v1622
      %v1655 = vpack.c.b16 %v1623, %v1623
      %v1656 = vpack.c.b16 %v1624, %v1624
      %v1657 = vpack.c.b16 %v1625, %v1625
      %v1658 = vpack.c.b16 %v1626, %v1626
      %v1659 = vpack.c.b16 %v1627, %v1627
      %1692 = vst [vmem:[%s170] sm:$0xf] %v1628
      %1693 = vst [vmem:[%s170 + $0x4] sm:$0xf] %v1629
      %1694 = vst [vmem:[%s170 + $0x8] sm:$0xf] %v1630
      %1695 = vst [vmem:[%s170 + $0xc] sm:$0xf] %v1631
      %1696 = vst [vmem:[%s170 + $0x10] sm:$0xf] %v1632
      %1697 = vst [vmem:[%s170 + $0x14] sm:$0xf] %v1633
      %1698 = vst [vmem:[%s170 + $0x18] sm:$0xf] %v1634
      %1699 = vst [vmem:[%s170 + $0x1c] sm:$0xf] %v1635
      %1700 = vst [vmem:[%s170 + $0x20] sm:$0xf] %v1636
      %1701 = vst [vmem:[%s170 + $0x24] sm:$0xf] %v1637
      %1702 = vst [vmem:[%s170 + $0x28] sm:$0xf] %v1638
      %1703 = vst [vmem:[%s170 + $0x2c] sm:$0xf] %v1639
      %1704 = vst [vmem:[%s170 + $0x30] sm:$0xf] %v1640
      %1705 = vst [vmem:[%s170 + $0x34] sm:$0xf] %v1641
      %1706 = vst [vmem:[%s170 + $0x38] sm:$0xf] %v1642
      %1707 = vst [vmem:[%s170 + $0x3c] sm:$0xf] %v1643
      %1708 = vst [vmem:[%s170 + $0x40] sm:$0xf] %v1644
      %1709 = vst [vmem:[%s170 + $0x44] sm:$0xf] %v1645
      %1710 = vst [vmem:[%s170 + $0x48] sm:$0xf] %v1646
      %1711 = vst [vmem:[%s170 + $0x4c] sm:$0xf] %v1647
      %1712 = vst [vmem:[%s170 + $0x50] sm:$0xf] %v1648
      %1713 = vst [vmem:[%s170 + $0x54] sm:$0xf] %v1649
      %1714 = vst [vmem:[%s170 + $0x58] sm:$0xf] %v1650
      %1715 = vst [vmem:[%s170 + $0x5c] sm:$0xf] %v1651
      %1716 = vst [vmem:[%s170 + $0x60] sm:$0xf] %v1652
      %1717 = vst [vmem:[%s170 + $0x64] sm:$0xf] %v1653
      %1718 = vst [vmem:[%s170 + $0x68] sm:$0xf] %v1654
      %1719 = vst [vmem:[%s170 + $0x6c] sm:$0xf] %v1655
      %1720 = vst [vmem:[%s170 + $0x70] sm:$0xf] %v1656
      %1721 = vst [vmem:[%s170 + $0x74] sm:$0xf] %v1657
      %1722 = vst [vmem:[%s170 + $0x78] sm:$0xf] %v1658
      %1723 = vst [vmem:[%s170 + $0x7c] sm:$0xf] %v1659
      %p1724 = scmp.lt.s32.totalorder %s14, 1
      %s1725 = scalar_select %p1724, %s14, 1
      %s1726 = smul.addr %s1725, 32
      %s1727 = smul.addr %s1726, 4
      %s1728 = scalar_lea.vmem %s3, %s1727
      // Predicated region
      $region33: #{discriminator_forward.4} parent=31 // pred_check
        %p1729 = pneg %p100
      $region34: #{discriminator_forward.4} parent=31 // pred_check_branch
        %1731 = sbr.rel (%p1729) target = $region36
      $region35: #{discriminator_forward.4} parent=31 // pred_region
        _
      $region36: #{discriminator_forward.4} parent=31 // pred_fallthru
        _
    $region32: #{discriminator_forward.4} parent=5 // pred_fallthru
      _
    %p1732 = scmp.le.s32.totalorder 2, %s9
    // Predicated region
    $region37: #{discriminator_forward.4} parent=5 // pred_check
      %p1733 = pneg %p1732
    $region38: #{discriminator_forward.4} parent=5 // pred_check_branch
      %1735 = sbr.rel (%p1733) target = $region40
    $region39: #{discriminator_forward.4} parent=5 // pred_region
      %s1736 = ssub.s32 %s9, 2
      // Predicated region
      $region41: #{discriminator_forward.4} parent=39 // pred_check
        %p1737 = pneg %p106
      $region42: #{discriminator_forward.4} parent=39 // pred_check_branch
        %1739 = sbr.rel (%p1737) target = $region44
      $region43: #{discriminator_forward.4} parent=39 // pred_region
        %p1740 = scmp.lt.s32.totalorder %s15, 1
        %s1741 = scalar_select %p1740, %s15, 1
        %s1742 = smul.addr %s1741, 32
        %s1743 = smul.addr %s1742, 4
        %s1744 = scalar_lea.vmem %s3, %s1743
      $region44: #{discriminator_forward.4} parent=39 // pred_fallthru
        _
    $region40: #{discriminator_forward.4} parent=5 // pred_fallthru
      _
  $region6: #{discriminator_forward.4} parent=0 // loop_footer
    %s13 = sadd.s32 1, %s9
  $region7: #{discriminator_forward.4} parent=0 // loop_footer_branch
    %8 = sbr.rel target = $region3
  $region8: #{discriminator_forward.4} parent=0 // loop_exit
    _

// kernel: discriminator_forward.5
$region0: #{discriminator_forward.5}
  #allocation0 [shape = 'u32[]', space=smem, size = 0x4, offset = 0x4, fixed_abs, tag = 'smem constant byte address 0x4 - core index']
  #allocation1 [shape = 'u32[144,128]{1,0:T(1,128)}', space=vmem, size = 0x12000, scoped, tag = 'internal scratch']
  #allocation2 [shape = 'f32[64,128]{1,0:T(8,128)}', space=vmem, size = 0x8000, scoped, tag = 'scratch operand']
  %s0 = inlined_call_operand.vmem [shape: bf16[2,2,72,384], index: 0, kind: input, shape index: {}]
  %s1 = inlined_call_operand.vmem [shape: bf16[3,384,128], index: 1, kind: input, shape index: {}]
  %s2 = inlined_call_operand.vmem [shape: f32[1,128], index: 2, kind: input, shape index: {}]
  %s3 = inlined_call_operand.vmem [shape: bf16[2,64,128], index: 3, kind: output, shape index: {}]
  %s4 = sld [smem:[#allocation0]]
  $region45: #{discriminator_forward.5} parent=0
    _
  %s6 = ssub.s32 1, %s4
  %s7 = scalar_select 0, %s6, %s4
  loop: start=0, step=1, limit=4
  $region2: #{discriminator_forward.5} parent=0 // loop_pre_header
    _
  $region3: #{discriminator_forward.5} parent=0 // loop_header
    %s9 = sphi 0, %s13
    %p10 = scmp.ge.s32.totalorder %s9, 4
    %s19 = sphi 0, %s21
    %s22 = sphi 0, %s19
    %s23 = sphi 0, %s22
    %s39 = sphi 0, %s23
    %s43 = sphi 0, %s43
    %s45 = sphi 0, %s43
    %s46 = sphi 0, %s45
    %s60 = sphi 0, %s46
    %s64 = sphi 0, %s64
    %s66 = sphi 0, %s64
    %s67 = sphi 0, %s66
    %s81 = sphi 0, %s67
    %s87 = sphi 0, %s89
    %s90 = sphi 0, %s87
    %s91 = sphi 0, %s90
    %s107 = sphi 0, %s91
  $region4: #{discriminator_forward.5} parent=0 // loop_header_branch
    %12 = sbr.rel (%p10) target = $region8
  $region5: #{discriminator_forward.5} parent=0 // loop_body
    %s14 = ssub.s32 %s9, 1
    %s15 = ssub.s32 %s9, 2
    %s16 = sadd.s32 %s9, 1
    %s17 = ssub.s32 %s9, %s16
    %p18 = scmp.eq.s32.totalorder %s17, 0
    %s20 = sadd.s32 %s19, 1
    %s21 = scalar_select %p18, %s19, %s20
    %p24 = pneg %p18
    %p25 = scmp.eq.s32.totalorder %s9, 1
    %p26 = por %p24, %p25
    %p27 = scmp.ne.s32.totalorder %s19, %s22
    %p28 = scmp.eq.s32.totalorder %s9, 0
    %p29 = por %p27, %p28
    %p30 = scmp.ne.s32.totalorder %s19, %s22
    %p31 = scmp.eq.s32.totalorder %s14, 1
    %p32 = por %p30, %p31
    %p33 = scmp.ne.s32.totalorder %s22, %s23
    %p34 = scmp.eq.s32.totalorder %s14, 0
    %p35 = por %p33, %p34
    %p36 = scmp.ne.s32.totalorder %s22, %s23
    %p37 = scmp.eq.s32.totalorder %s15, 1
    %p38 = por %p36, %p37
    %p40 = scmp.ne.s32.totalorder %s23, %s39
    %p41 = scmp.eq.s32.totalorder %s15, 0
    %p42 = por %p40, %p41
    %s44 = sadd.s32 %s43, 1
    %p47 = scmp.eq.s32.totalorder %s9, 1
    %p48 = scmp.ne.s32.totalorder %s43, %s45
    %p49 = scmp.eq.s32.totalorder %s9, 0
    %p50 = por %p48, %p49
    %p51 = scmp.ne.s32.totalorder %s43, %s45
    %p52 = scmp.eq.s32.totalorder %s14, 1
    %p53 = por %p51, %p52
    %p54 = scmp.ne.s32.totalorder %s45, %s46
    %p55 = scmp.eq.s32.totalorder %s14, 0
    %p56 = por %p54, %p55
    %p57 = scmp.ne.s32.totalorder %s45, %s46
    %p58 = scmp.eq.s32.totalorder %s15, 1
    %p59 = por %p57, %p58
    %p61 = scmp.ne.s32.totalorder %s46, %s60
    %p62 = scmp.eq.s32.totalorder %s15, 0
    %p63 = por %p61, %p62
    %s65 = sadd.s32 %s64, 1
    %p68 = scmp.eq.s32.totalorder %s9, 1
    %p69 = scmp.ne.s32.totalorder %s64, %s66
    %p70 = scmp.eq.s32.totalorder %s9, 0
    %p71 = por %p69, %p70
    %p72 = scmp.ne.s32.totalorder %s64, %s66
    %p73 = scmp.eq.s32.totalorder %s14, 1
    %p74 = por %p72, %p73
    %p75 = scmp.ne.s32.totalorder %s66, %s67
    %p76 = scmp.eq.s32.totalorder %s14, 0
    %p77 = por %p75, %p76
    %p78 = scmp.ne.s32.totalorder %s66, %s67
    %p79 = scmp.eq.s32.totalorder %s15, 1
    %p80 = por %p78, %p79
    %p82 = scmp.ne.s32.totalorder %s67, %s81
    %p83 = scmp.eq.s32.totalorder %s15, 0
    %p84 = por %p82, %p83
    %s85 = ssub.s32 %s9, %s16
    %p86 = scmp.eq.s32.totalorder %s85, 0
    %s88 = sadd.s32 %s87, 1
    %s89 = scalar_select %p86, %s87, %s88
    %p92 = pneg %p86
    %p93 = scmp.eq.s32.totalorder %s9, 1
    %p94 = por %p92, %p93
    %p95 = scmp.ne.s32.totalorder %s87, %s90
    %p96 = scmp.eq.s32.totalorder %s9, 0
    %p97 = por %p95, %p96
    %p98 = scmp.ne.s32.totalorder %s87, %s90
    %p99 = scmp.eq.s32.totalorder %s14, 1
    %p100 = por %p98, %p99
    %p101 = scmp.ne.s32.totalorder %s90, %s91
    %p102 = scmp.eq.s32.totalorder %s14, 0
    %p103 = por %p101, %p102
    %p104 = scmp.ne.s32.totalorder %s90, %s91
    %p105 = scmp.eq.s32.totalorder %s15, 1
    %p106 = por %p104, %p105
    %p108 = scmp.ne.s32.totalorder %s91, %s107
    %p109 = scmp.eq.s32.totalorder %s15, 0
    %p110 = por %p108, %p109
    %p111 = scmp.le.s32.totalorder 1, %s9
    %p112 = scmp.lt.s32.totalorder %s9, 3
    %p113 = pnand %p111, %p112
    %p114 = pneg %p113
    // Predicated region
    $region9: #{discriminator_forward.5} parent=5 // pred_check
      _
    $region10: #{discriminator_forward.5} parent=5 // pred_check_branch
      %116 = sbr.rel (%p113) target = $region12
    $region11: #{discriminator_forward.5} parent=5 // pred_region
      %s117 = ssub.s32 %s9, 1
      // Predicated region
      $region13: #{discriminator_forward.5} parent=11 // pred_check
        %p118 = pneg %p56
      $region14: #{discriminator_forward.5} parent=11 // pred_check_branch
        %120 = sbr.rel (%p118) target = $region16
      $region15: #{discriminator_forward.5} parent=11 // pred_region
        _
      $region16: #{discriminator_forward.5} parent=11 // pred_fallthru
        _
      // Predicated region
      $region17: #{discriminator_forward.5} parent=11 // pred_check
        %p121 = pneg %p77
      $region18: #{discriminator_forward.5} parent=11 // pred_check_branch
        %123 = sbr.rel (%p121) target = $region20
      $region19: #{discriminator_forward.5} parent=11 // pred_region
        _
      $region20: #{discriminator_forward.5} parent=11 // pred_fallthru
        _
    $region12: #{discriminator_forward.5} parent=5 // pred_fallthru
      _
    %p124 = scmp.lt.s32.totalorder %s9, 2
    // Predicated region
    $region21: #{discriminator_forward.5} parent=5 // pred_check
      %p125 = pneg %p124
    $region22: #{discriminator_forward.5} parent=5 // pred_check_branch
      %127 = sbr.rel (%p125) target = $region24
    $region23: #{discriminator_forward.5} parent=5 // pred_region
      // Predicated region
      $region25: #{discriminator_forward.5} parent=23 // pred_check
        %p128 = pneg %p29
      $region26: #{discriminator_forward.5} parent=23 // pred_check_branch
        %130 = sbr.rel (%p128) target = $region28
      $region27: #{discriminator_forward.5} parent=23 // pred_region
        %p131 = scmp.lt.s32.totalorder %s9, 1
        %s132 = scalar_select %p131, %s9, 1
        %s133 = smul.addr %s132, 54
        %s134 = smul.addr %s133, 4
        %s135 = scalar_lea.vmem %s0, %s134
      $region28: #{discriminator_forward.5} parent=23 // pred_fallthru
        _
    $region24: #{discriminator_forward.5} parent=5 // pred_fallthru
      _
    %p136 = scmp.le.s32.totalorder 1, %s9
    %p137 = scmp.lt.s32.totalorder %s9, 3
    %p138 = pnand %p136, %p137
    %p139 = pneg %p138
    // Predicated region
    $region29: #{discriminator_forward.5} parent=5 // pred_check
      _
    $region30: #{discriminator_forward.5} parent=5 // pred_check_branch
      %141 = sbr.rel (%p138) target = $region32
    $region31: #{discriminator_forward.5} parent=5 // pred_region
      %s142 = ssub.s32 %s9, 1
      %p143 = scmp.lt.s32.totalorder %s14, 1
      %s144 = scalar_select %p143, %s14, 1
      %s145 = smul.addr %s144, 54
      %s146 = smul.addr %s145, 4
      %s147 = scalar_lea.vmem %s0, %s146
      %p148 = pneg %p35
      %p149 = pneg %p32
      %p150 = pneg %p56
      %p151 = pneg %p53
      %p152 = pneg %p77
      %p153 = pneg %p74
      %p154 = pneg %p103
      %p155 = pneg %p100
      %p156 = scmp.lt.s32.totalorder %s14, 1
      %s157 = scalar_select %p156, %s14, 1
      %s158 = smul.addr %s157, 8
      %s159 = smul.addr %s158, 4
      %s160 = scalar_lea.vmem %s3, %s159
      %p161 = scmp.lt.s32.totalorder %s14, 1
      %s162 = scalar_select %p161, %s14, 1
      %s163 = smul.addr %s162, 54
      %s164 = smul.addr %s163, 4
      %s165 = scalar_lea.vmem %s0, %s164
      %p166 = scmp.lt.s32.totalorder %s14, 1
      %s167 = scalar_select %p166, %s14, 1
      %s168 = smul.addr %s167, 8
      %s169 = smul.addr %s168, 4
      %s170 = scalar_lea.vmem %s3, %s169
      %v172 = vld [vmem:[%s165] sm:$0xff]
      %v173 = vld [vmem:[%s165 + $0x8] sm:$0xf]
      %v174 = vld [vmem:[%s165 + $0xc] sm:$0xff]
      %v175 = vld [vmem:[%s165 + $0x14] sm:$0xf]
      %v176 = vld [vmem:[%s165 + $0x18] sm:$0xff]
      %v177 = vld [vmem:[%s165 + $0x20] sm:$0xf]
      %v178 = vld [vmem:[%s165 + $0x24] sm:$0xff]
      %v179 = vld [vmem:[%s165 + $0x2c] sm:$0xf]
      %v180 = vld [vmem:[%s165 + $0x30] sm:$0xff]
      %v181 = vld [vmem:[%s165 + $0x38] sm:$0xf]
      %v182 = vld [vmem:[%s165 + $0x3c] sm:$0xff]
      %v183 = vld [vmem:[%s165 + $0x44] sm:$0xf]
      %v184 = vld [vmem:[%s165 + $0x48] sm:$0xff]
      %v185 = vld [vmem:[%s165 + $0x50] sm:$0xf]
      %v186 = vld [vmem:[%s165 + $0x54] sm:$0xff]
      %v187 = vld [vmem:[%s165 + $0x5c] sm:$0xf]
      %v188 = vld [vmem:[%s1] sm:$0xf]
      %v189 = vld [vmem:[%s1 + $0x4] sm:$0xf]
      %v190 = vld [vmem:[%s1 + $0x8] sm:$0xf]
      %v191 = vld [vmem:[%s1 + $0xc] sm:$0xf]
      %v192 = vld [vmem:[%s1 + $0x10] sm:$0xf]
      %v193 = vld [vmem:[%s1 + $0x14] sm:$0xf]
      %v194 = vld [vmem:[%s1 + $0x18] sm:$0xf]
      %v195 = vld [vmem:[%s1 + $0x1c] sm:$0xf]
      %v196 = vld [vmem:[%s1 + $0x20] sm:$0xf]
      %v197 = vld [vmem:[%s1 + $0x24] sm:$0xf]
      %v198 = vld [vmem:[%s1 + $0x28] sm:$0xf]
      %v199 = vld [vmem:[%s1 + $0x2c] sm:$0xf]
      %v200 = vld [vmem:[%s1 + $0x30] sm:$0xf]
      %v201 = vld [vmem:[%s1 + $0x34] sm:$0xf]
      %v202 = vld [vmem:[%s1 + $0x38] sm:$0xf]
      %v203 = vld [vmem:[%s1 + $0x3c] sm:$0xf]
      %v204 = vld [vmem:[%s1 + $0x40] sm:$0xf]
      %v205 = vld [vmem:[%s1 + $0x44] sm:$0xf]
      %v206 = vld [vmem:[%s1 + $0x48] sm:$0xf]
      %v207 = vld [vmem:[%s1 + $0x4c] sm:$0xf]
      %v208 = vld [vmem:[%s1 + $0x50] sm:$0xf]
      %v209 = vld [vmem:[%s1 + $0x54] sm:$0xf]
      %v210 = vld [vmem:[%s1 + $0x58] sm:$0xf]
      %v211 = vld [vmem:[%s1 + $0x5c] sm:$0xf]
      %v212 = vld [vmem:[%s1 + $0x60] sm:$0xf]
      %v213 = vld [vmem:[%s1 + $0x64] sm:$0xf]
      %v214 = vld [vmem:[%s1 + $0x68] sm:$0xf]
      %v215 = vld [vmem:[%s1 + $0x6c] sm:$0xf]
      %v216 = vld [vmem:[%s1 + $0x70] sm:$0xf]
      %v217 = vld [vmem:[%s1 + $0x74] sm:$0xf]
      %v218 = vld [vmem:[%s1 + $0x78] sm:$0xf]
      %v219 = vld [vmem:[%s1 + $0x7c] sm:$0xf]
      %v220 = vld [vmem:[%s1 + $0x80] sm:$0xf]
      %v221 = vld [vmem:[%s1 + $0x84] sm:$0xf]
      %v222 = vld [vmem:[%s1 + $0x88] sm:$0xf]
      %v223 = vld [vmem:[%s1 + $0x8c] sm:$0xf]
      %v224 = vld [vmem:[%s1 + $0x90] sm:$0xf]
      %v225 = vld [vmem:[%s1 + $0x94] sm:$0xf]
      %v226 = vld [vmem:[%s1 + $0x98] sm:$0xf]
      %v227 = vld [vmem:[%s1 + $0x9c] sm:$0xf]
      %v228 = vld [vmem:[%s1 + $0xa0] sm:$0xf]
      %v229 = vld [vmem:[%s1 + $0xa4] sm:$0xf]
      %v230 = vld [vmem:[%s1 + $0xa8] sm:$0xf]
      %v231 = vld [vmem:[%s1 + $0xac] sm:$0xf]
      %v232 = vld [vmem:[%s1 + $0xb0] sm:$0xf]
      %v233 = vld [vmem:[%s1 + $0xb4] sm:$0xf]
      %v234 = vld [vmem:[%s1 + $0xb8] sm:$0xf]
      %v235 = vld [vmem:[%s1 + $0xbc] sm:$0xf]
      %v252 = vunpack.c.l.b16 %v172
      %v253 = vunpack.c.h.b16 %v172
      %v254 = vunpack.c.l.b16 %v173
      %v255 = vunpack.c.l.b16 %v174
      %v256 = vunpack.c.h.b16 %v174
      %v257 = vunpack.c.l.b16 %v175
      %v258 = vunpack.c.l.b16 %v176
      %v259 = vunpack.c.h.b16 %v176
      %v260 = vunpack.c.l.b16 %v177
      %v261 = vunpack.c.l.b16 %v178
      %v262 = vunpack.c.h.b16 %v178
      %v263 = vunpack.c.l.b16 %v179
      %v264 = vunpack.c.l.b16 %v180
      %v265 = vunpack.c.h.b16 %v180
      %v266 = vunpack.c.l.b16 %v181
      %v267 = vunpack.c.l.b16 %v182
      %v268 = vunpack.c.h.b16 %v182
      %v269 = vunpack.c.l.b16 %v183
      %v270 = vunpack.c.l.b16 %v184
      %v271 = vunpack.c.h.b16 %v184
      %v272 = vunpack.c.l.b16 %v185
      %v273 = vunpack.c.l.b16 %v186
      %v274 = vunpack.c.h.b16 %v186
      %v275 = vunpack.c.l.b16 %v187
      %v276 = vpack.c.b16 %v255, %v252
      %v277 = vpack.c.b16 %v256, %v253
      %v278 = vpack.c.b16 %v257, %v254
      %v279 = vpack.c.b16 %v261, %v258
      %v280 = vpack.c.b16 %v262, %v259
      %v281 = vpack.c.b16 %v263, %v260
      %v282 = vpack.c.b16 %v267, %v264
      %v283 = vpack.c.b16 %v268, %v265
      %v284 = vpack.c.b16 %v269, %v266
      %v285 = vpack.c.b16 %v273, %v270
      %v286 = vpack.c.b16 %v274, %v271
      %v287 = vpack.c.b16 %v275, %v272
      %v348 = vunpack.c.l.b16 %v188
      %v349 = vunpack.c.l.b16 %v189
      %v350 = vunpack.c.l.b16 %v190
      %v351 = vunpack.c.l.b16 %v191
      %v352 = vunpack.c.l.b16 %v192
      %v353 = vunpack.c.l.b16 %v193
      %v354 = vunpack.c.l.b16 %v194
      %v355 = vunpack.c.l.b16 %v195
      %v356 = vunpack.c.l.b16 %v196
      %v357 = vunpack.c.l.b16 %v197
      %v358 = vunpack.c.l.b16 %v198
      %v359 = vunpack.c.l.b16 %v199
      %v360 = vunpack.c.l.b16 %v200
      %v361 = vunpack.c.l.b16 %v201
      %v362 = vunpack.c.l.b16 %v202
      %v363 = vunpack.c.l.b16 %v203
      %v364 = vunpack.c.l.b16 %v204
      %v365 = vunpack.c.l.b16 %v205
      %v366 = vunpack.c.l.b16 %v206
      %v367 = vunpack.c.l.b16 %v207
      %v368 = vunpack.c.l.b16 %v208
      %v369 = vunpack.c.l.b16 %v209
      %v370 = vunpack.c.l.b16 %v210
      %v371 = vunpack.c.l.b16 %v211
      %v372 = vunpack.c.l.b16 %v212
      %v373 = vunpack.c.l.b16 %v213
      %v374 = vunpack.c.l.b16 %v214
      %v375 = vunpack.c.l.b16 %v215
      %v376 = vunpack.c.l.b16 %v216
      %v377 = vunpack.c.l.b16 %v217
      %v378 = vunpack.c.l.b16 %v218
      %v379 = vunpack.c.l.b16 %v219
      %v380 = vunpack.c.l.b16 %v220
      %v381 = vunpack.c.l.b16 %v221
      %v382 = vunpack.c.l.b16 %v222
      %v383 = vunpack.c.l.b16 %v223
      %v384 = vunpack.c.l.b16 %v224
      %v385 = vunpack.c.l.b16 %v225
      %v386 = vunpack.c.l.b16 %v226
      %v387 = vunpack.c.l.b16 %v227
      %v388 = vunpack.c.l.b16 %v228
      %v389 = vunpack.c.l.b16 %v229
      %v390 = vunpack.c.l.b16 %v230
      %v391 = vunpack.c.l.b16 %v231
      %v392 = vunpack.c.l.b16 %v232
      %v393 = vunpack.c.l.b16 %v233
      %v394 = vunpack.c.l.b16 %v234
      %v395 = vunpack.c.l.b16 %v235
      %v396 = vpack.c.b16 %v349, %v348
      %v397 = vpack.c.b16 %v351, %v350
      %v398 = vpack.c.b16 %v353, %v352
      %v399 = vpack.c.b16 %v355, %v354
      %v400 = vpack.c.b16 %v357, %v356
      %v401 = vpack.c.b16 %v359, %v358
      %v402 = vpack.c.b16 %v361, %v360
      %v403 = vpack.c.b16 %v363, %v362
      %v404 = vpack.c.b16 %v365, %v364
      %v405 = vpack.c.b16 %v367, %v366
      %v406 = vpack.c.b16 %v369, %v368
      %v407 = vpack.c.b16 %v371, %v370
      %v408 = vpack.c.b16 %v373, %v372
      %v409 = vpack.c.b16 %v375, %v374
      %v410 = vpack.c.b16 %v377, %v376
      %v411 = vpack.c.b16 %v379, %v378
      %v412 = vpack.c.b16 %v381, %v380
      %v413 = vpack.c.b16 %v383, %v382
      %v414 = vpack.c.b16 %v385, %v384
      %v415 = vpack.c.b16 %v387, %v386
      %v416 = vpack.c.b16 %v389, %v388
      %v417 = vpack.c.b16 %v391, %v390
      %v418 = vpack.c.b16 %v393, %v392
      %v419 = vpack.c.b16 %v395, %v394
      %444 = vmatprep.subr.bf16.mxu0 0
      %445 = vmatpush1.bf16.msra.mxu0 %v396
      %446 = vmatprep.subr.bf16.mxu0 0
      %447 = vmatpush1.bf16.msra.mxu0 %v397
      %448 = vmatprep.subr.bf16.mxu0 0
      %449 = vmatpush1.bf16.msra.mxu0 %v398
      %450 = vmatprep.subr.bf16.mxu0 0
      %451 = vmatpush1.bf16.msra.mxu0 %v399
      %452 = vmatprep.subr.bf16.mxu0 0
      %453 = vmatpush1.bf16.msra.mxu0 %v400
      %454 = vmatprep.subr.bf16.mxu0 0
      %455 = vmatpush1.bf16.msra.mxu0 %v401
      %456 = vmatprep.subr.bf16.mxu0 0
      %457 = vmatpush1.bf16.msra.mxu0 %v402
      %458 = vmatprep.subr.bf16.mxu0 0
      %459 = vmatpush1.bf16.msra.mxu0 %v403
      %460 = vmatprep.subr.bf16.mxu0 0
      %461 = vmatpush1.bf16.msra.mxu0 %v404
      %462 = vmatprep.subr.bf16.mxu0 0
      %463 = vmatpush1.bf16.msra.mxu0 %v405
      %464 = vmatprep.subr.bf16.mxu0 0
      %465 = vmatpush1.bf16.msra.mxu0 %v406
      %466 = vmatprep.subr.bf16.mxu0 0
      %467 = vmatpush1.bf16.msra.mxu0 %v407
      %468 = vmatprep.subr.bf16.mxu0 0
      %469 = vmatpush1.bf16.msra.mxu0 %v408
      %470 = vmatprep.subr.bf16.mxu0 0
      %471 = vmatpush1.bf16.msra.mxu0 %v409
      %472 = vmatprep.subr.bf16.mxu0 0
      %473 = vmatpush1.bf16.msra.mxu0 %v410
      %474 = vmatprep.subr.bf16.mxu0 0
      %475 = vmatpush1.bf16.msra.mxu0 %v411
      %476 = vmatprep.mubr.bf16.mxu0 %v277
      %477 = vmatmul.mubr.bf16.gmra.mrb[0].mxu0 %v276
      %v478 = vpop.f32.mrb[0].mxu0
      %v479 = vadd.f32 0.0, %v478
      %v480 = vpop.f32.mrb[0].mxu0
      %v481 = vpop.f32.mrb[0].mxu0
      %v482 = vadd.f32 0.0, %v481
      %v483 = vpop.f32.mrb[0].mxu0
      %484 = vmatprep.mubr.bf16.mxu0 %v280
      %485 = vmatmul.mubr.bf16.gmra.mrb[0].mxu0 %v279
      %v486 = vpop.f32.mrb[0].mxu0
      %v487 = vadd.f32 0.0, %v486
      %v488 = vpop.f32.mrb[0].mxu0
      %v489 = vpop.f32.mrb[0].mxu0
      %v490 = vadd.f32 0.0, %v489
      %v491 = vpop.f32.mrb[0].mxu0
      %492 = vmatprep.mubr.bf16.mxu0 %v283
      %493 = vmatmul.mubr.bf16.gmra.mrb[0].mxu0 %v282
      %v494 = vpop.f32.mrb[0].mxu0
      %v495 = vadd.f32 0.0, %v494
      %v496 = vpop.f32.mrb[0].mxu0
      %v497 = vpop.f32.mrb[0].mxu0
      %v498 = vadd.f32 0.0, %v497
      %v499 = vpop.f32.mrb[0].mxu0
      %500 = vmatprep.mubr.bf16.mxu0 %v286
      %501 = vmatmul.mubr.bf16.gmra.mrb[0].mxu0 %v285
      %v502 = vpop.f32.mrb[0].mxu0
      %v503 = vadd.f32 0.0, %v502
      %v504 = vpop.f32.mrb[0].mxu0
      %v505 = vpop.f32.mrb[0].mxu0
      %v506 = vadd.f32 0.0, %v505
      %v507 = vpop.f32.mrb[0].mxu0
      %508 = vdwg.mxu0
      %509 = vmatprep.subr.bf16.mxu0 0
      %510 = vmatpush1.bf16.msra.mxu0 %v412
      %511 = vmatprep.subr.bf16.mxu0 0
      %512 = vmatpush1.bf16.msra.mxu0 %v413
      %513 = vmatprep.subr.bf16.mxu0 0
      %514 = vmatpush1.bf16.msra.mxu0 %v414
      %515 = vmatprep.subr.bf16.mxu0 0
      %516 = vmatpush1.bf16.msra.mxu0 %v415
      %517 = vmatprep.subr.bf16.mxu0 0
      %518 = vmatpush1.bf16.msra.mxu0 %v416
      %519 = vmatprep.subr.bf16.mxu0 0
      %520 = vmatpush1.bf16.msra.mxu0 %v417
      %521 = vmatprep.subr.bf16.mxu0 0
      %522 = vmatpush1.bf16.msra.mxu0 %v418
      %523 = vmatprep.subr.bf16.mxu0 0
      %524 = vmatpush1.bf16.msra.mxu0 %v419
      %525 = vmatprep.subr.bf16.mxu0 0
      %526 = vmatpush1.bf16.msra.mxu0 0
      %527 = vmatprep.subr.bf16.mxu0 0
      %528 = vmatpush1.bf16.msra.mxu0 0
      %529 = vmatprep.subr.bf16.mxu0 0
      %530 = vmatpush1.bf16.msra.mxu0 0
      %531 = vmatprep.subr.bf16.mxu0 0
      %532 = vmatpush1.bf16.msra.mxu0 0
      %533 = vmatprep.subr.bf16.mxu0 0
      %534 = vmatpush1.bf16.msra.mxu0 0
      %535 = vmatprep.subr.bf16.mxu0 0
      %536 = vmatpush1.bf16.msra.mxu0 0
      %537 = vmatprep.subr.bf16.mxu0 0
      %538 = vmatpush1.bf16.msra.mxu0 0
      %539 = vmatprep.subr.bf16.mxu0 0
      %540 = vmatpush1.bf16.msra.mxu0 0
      %541 = vmatprep.mubr.bf16.mxu0 0
      %542 = vmatmul.mubr.bf16.gmra.mrb[0].mxu0 %v278
      %v543 = vpop.f32.mrb[0].mxu0
      %v544 = vadd.f32 %v479, %v543
      %v545 = vpop.f32.mrb[0].mxu0
      %v546 = vpop.f32.mrb[0].mxu0
      %v547 = vadd.f32 %v482, %v546
      %v548 = vpop.f32.mrb[0].mxu0
      %549 = vmatprep.mubr.bf16.mxu0 0
      %550 = vmatmul.mubr.bf16.gmra.mrb[0].mxu0 %v281
      %v551 = vpop.f32.mrb[0].mxu0
      %v552 = vadd.f32 %v487, %v551
      %v553 = vpop.f32.mrb[0].mxu0
      %v554 = vpop.f32.mrb[0].mxu0
      %v555 = vadd.f32 %v490, %v554
      %v556 = vpop.f32.mrb[0].mxu0
      %557 = vmatprep.mubr.bf16.mxu0 0
      %558 = vmatmul.mubr.bf16.gmra.mrb[0].mxu0 %v284
      %v559 = vpop.f32.mrb[0].mxu0
      %v560 = vadd.f32 %v495, %v559
      %v561 = vpop.f32.mrb[0].mxu0
      %v562 = vpop.f32.mrb[0].mxu0
      %v563 = vadd.f32 %v498, %v562
      %v564 = vpop.f32.mrb[0].mxu0
      %565 = vmatprep.mubr.bf16.mxu0 0
      %566 = vmatmul.mubr.bf16.gmra.mrb[0].mxu0 %v287
      %v567 = vpop.f32.mrb[0].mxu0
      %v568 = vadd.f32 %v503, %v567
      %v569 = vpop.f32.mrb[0].mxu0
      %v570 = vpop.f32.mrb[0].mxu0
      %v571 = vadd.f32 %v506, %v570
      %v572 = vpop.f32.mrb[0].mxu0
      %573 = vdwg.mxu0
      %574 = vst [vmem:[#allocation2] sm:$0xff] %v544
      %575 = vst [vmem:[#allocation2 + $0x8] sm:$0xff] %v547
      %576 = vst [vmem:[#allocation2 + $0x10] sm:$0xff] %v552
      %577 = vst [vmem:[#allocation2 + $0x18] sm:$0xff] %v555
      %578 = vst [vmem:[#allocation2 + $0x20] sm:$0xff] %v560
      %579 = vst [vmem:[#allocation2 + $0x28] sm:$0xff] %v563
      %580 = vst [vmem:[#allocation2 + $0x30] sm:$0xff] %v568
      %581 = vst [vmem:[#allocation2 + $0x38] sm:$0xff] %v571
      %v582 = vld [vmem:[#allocation2] sm:$0xff]
      %v583 = vld [vmem:[#allocation2 + $0x8] sm:$0xff]
      %v584 = vld [vmem:[#allocation2 + $0x10] sm:$0xff]
      %v585 = vld [vmem:[#allocation2 + $0x18] sm:$0xff]
      %v586 = vld [vmem:[#allocation2 + $0x20] sm:$0xff]
      %v587 = vld [vmem:[#allocation2 + $0x28] sm:$0xff]
      %v588 = vld [vmem:[#allocation2 + $0x30] sm:$0xff]
      %v589 = vld [vmem:[#allocation2 + $0x38] sm:$0xff]
      %s590 = scalar_lea.vmem %s165, 108
      %v591 = vld [vmem:[%s590] sm:$0xff]
      %v592 = vld [vmem:[%s590 + $0x8] sm:$0xf]
      %v593 = vld [vmem:[%s590 + $0xc] sm:$0xff]
      %v594 = vld [vmem:[%s590 + $0x14] sm:$0xf]
      %v595 = vld [vmem:[%s590 + $0x18] sm:$0xff]
      %v596 = vld [vmem:[%s590 + $0x20] sm:$0xf]
      %v597 = vld [vmem:[%s590 + $0x24] sm:$0xff]
      %v598 = vld [vmem:[%s590 + $0x2c] sm:$0xf]
      %v599 = vld [vmem:[%s590 + $0x30] sm:$0xff]
      %v600 = vld [vmem:[%s590 + $0x38] sm:$0xf]
      %v601 = vld [vmem:[%s590 + $0x3c] sm:$0xff]
      %v602 = vld [vmem:[%s590 + $0x44] sm:$0xf]
      %v603 = vld [vmem:[%s590 + $0x48] sm:$0xff]
      %v604 = vld [vmem:[%s590 + $0x50] sm:$0xf]
      %v605 = vld [vmem:[%s590 + $0x54] sm:$0xff]
      %v606 = vld [vmem:[%s590 + $0x5c] sm:$0xf]
      %s607 = scalar_lea.vmem %s1, 192
      %v608 = vld [vmem:[%s607] sm:$0xf]
      %v609 = vld [vmem:[%s607 + $0x4] sm:$0xf]
      %v610 = vld [vmem:[%s607 + $0x8] sm:$0xf]
      %v611 = vld [vmem:[%s607 + $0xc] sm:$0xf]
      %v612 = vld [vmem:[%s607 + $0x10] sm:$0xf]
      %v613 = vld [vmem:[%s607 + $0x14] sm:$0xf]
      %v614 = vld [vmem:[%s607 + $0x18] sm:$0xf]
      %v615 = vld [vmem:[%s607 + $0x1c] sm:$0xf]
      %v616 = vld [vmem:[%s607 + $0x20] sm:$0xf]
      %v617 = vld [vmem:[%s607 + $0x24] sm:$0xf]
      %v618 = vld [vmem:[%s607 + $0x28] sm:$0xf]
      %v619 = vld [vmem:[%s607 + $0x2c] sm:$0xf]
      %v620 = vld [vmem:[%s607 + $0x30] sm:$0xf]
      %v621 = vld [vmem:[%s607 + $0x34] sm:$0xf]
      %v622 = vld [vmem:[%s607 + $0x38] sm:$0xf]
      %v623 = vld [vmem:[%s607 + $0x3c] sm:$0xf]
      %v624 = vld [vmem:[%s607 + $0x40] sm:$0xf]
      %v625 = vld [vmem:[%s607 + $0x44] sm:$0xf]
      %v626 = vld [vmem:[%s607 + $0x48] sm:$0xf]
      %v627 = vld [vmem:[%s607 + $0x4c] sm:$0xf]
      %v628 = vld [vmem:[%s607 + $0x50] sm:$0xf]
      %v629 = vld [vmem:[%s607 + $0x54] sm:$0xf]
      %v630 = vld [vmem:[%s607 + $0x58] sm:$0xf]
      %v631 = vld [vmem:[%s607 + $0x5c] sm:$0xf]
      %v632 = vld [vmem:[%s607 + $0x60] sm:$0xf]
      %v633 = vld [vmem:[%s607 + $0x64] sm:$0xf]
      %v634 = vld [vmem:[%s607 + $0x68] sm:$0xf]
      %v635 = vld [vmem:[%s607 + $0x6c] sm:$0xf]
      %v636 = vld [vmem:[%s607 + $0x70] sm:$0xf]
      %v637 = vld [vmem:[%s607 + $0x74] sm:$0xf]
      %v638 = vld [vmem:[%s607 + $0x78] sm:$0xf]
      %v639 = vld [vmem:[%s607 + $0x7c] sm:$0xf]
      %v640 = vld [vmem:[%s607 + $0x80] sm:$0xf]
      %v641 = vld [vmem:[%s607 + $0x84] sm:$0xf]
      %v642 = vld [vmem:[%s607 + $0x88] sm:$0xf]
      %v643 = vld [vmem:[%s607 + $0x8c] sm:$0xf]
      %v644 = vld [vmem:[%s607 + $0x90] sm:$0xf]
      %v645 = vld [vmem:[%s607 + $0x94] sm:$0xf]
      %v646 = vld [vmem:[%s607 + $0x98] sm:$0xf]
      %v647 = vld [vmem:[%s607 + $0x9c] sm:$0xf]
      %v648 = vld [vmem:[%s607 + $0xa0] sm:$0xf]
      %v649 = vld [vmem:[%s607 + $0xa4] sm:$0xf]
      %v650 = vld [vmem:[%s607 + $0xa8] sm:$0xf]
      %v651 = vld [vmem:[%s607 + $0xac] sm:$0xf]
      %v652 = vld [vmem:[%s607 + $0xb0] sm:$0xf]
      %v653 = vld [vmem:[%s607 + $0xb4] sm:$0xf]
      %v654 = vld [vmem:[%s607 + $0xb8] sm:$0xf]
      %v655 = vld [vmem:[%s607 + $0xbc] sm:$0xf]
      %v672 = vunpack.c.l.b16 %v591
      %v673 = vunpack.c.h.b16 %v591
      %v674 = vunpack.c.l.b16 %v592
      %v675 = vunpack.c.l.b16 %v593
      %v676 = vunpack.c.h.b16 %v593
      %v677 = vunpack.c.l.b16 %v594
      %v678 = vunpack.c.l.b16 %v595
      %v679 = vunpack.c.h.b16 %v595
      %v680 = vunpack.c.l.b16 %v596
      %v681 = vunpack.c.l.b16 %v597
      %v682 = vunpack.c.h.b16 %v597
      %v683 = vunpack.c.l.b16 %v598
      %v684 = vunpack.c.l.b16 %v599
      %v685 = vunpack.c.h.b16 %v599
      %v686 = vunpack.c.l.b16 %v600
      %v687 = vunpack.c.l.b16 %v601
      %v688 = vunpack.c.h.b16 %v601
      %v689 = vunpack.c.l.b16 %v602
      %v690 = vunpack.c.l.b16 %v603
      %v691 = vunpack.c.h.b16 %v603
      %v692 = vunpack.c.l.b16 %v604
      %v693 = vunpack.c.l.b16 %v605
      %v694 = vunpack.c.h.b16 %v605
      %v695 = vunpack.c.l.b16 %v606
      %v696 = vpack.c.b16 %v675, %v672
      %v697 = vpack.c.b16 %v676, %v673
      %v698 = vpack.c.b16 %v677, %v674
      %v699 = vpack.c.b16 %v681, %v678
      %v700 = vpack.c.b16 %v682, %v679
      %v701 = vpack.c.b16 %v683, %v680
      %v702 = vpack.c.b16 %v687, %v684
      %v703 = vpack.c.b16 %v688, %v685
      %v704 = vpack.c.b16 %v689, %v686
      %v705 = vpack.c.b16 %v693, %v690
      %v706 = vpack.c.b16 %v694, %v691
      %v707 = vpack.c.b16 %v695, %v692
      %v768 = vunpack.c.l.b16 %v608
      %v769 = vunpack.c.l.b16 %v609
      %v770 = vunpack.c.l.b16 %v610
      %v771 = vunpack.c.l.b16 %v611
      %v772 = vunpack.c.l.b16 %v612
      %v773 = vunpack.c.l.b16 %v613
      %v774 = vunpack.c.l.b16 %v614
      %v775 = vunpack.c.l.b16 %v615
      %v776 = vunpack.c.l.b16 %v616
      %v777 = vunpack.c.l.b16 %v617
      %v778 = vunpack.c.l.b16 %v618
      %v779 = vunpack.c.l.b16 %v619
      %v780 = vunpack.c.l.b16 %v620
      %v781 = vunpack.c.l.b16 %v621
      %v782 = vunpack.c.l.b16 %v622
      %v783 = vunpack.c.l.b16 %v623
      %v784 = vunpack.c.l.b16 %v624
      %v785 = vunpack.c.l.b16 %v625
      %v786 = vunpack.c.l.b16 %v626
      %v787 = vunpack.c.l.b16 %v627
      %v788 = vunpack.c.l.b16 %v628
      %v789 = vunpack.c.l.b16 %v629
      %v790 = vunpack.c.l.b16 %v630
      %v791 = vunpack.c.l.b16 %v631
      %v792 = vunpack.c.l.b16 %v632
      %v793 = vunpack.c.l.b16 %v633
      %v794 = vunpack.c.l.b16 %v634
      %v795 = vunpack.c.l.b16 %v635
      %v796 = vunpack.c.l.b16 %v636
      %v797 = vunpack.c.l.b16 %v637
      %v798 = vunpack.c.l.b16 %v638
      %v799 = vunpack.c.l.b16 %v639
      %v800 = vunpack.c.l.b16 %v640
      %v801 = vunpack.c.l.b16 %v641
      %v802 = vunpack.c.l.b16 %v642
      %v803 = vunpack.c.l.b16 %v643
      %v804 = vunpack.c.l.b16 %v644
      %v805 = vunpack.c.l.b16 %v645
      %v806 = vunpack.c.l.b16 %v646
      %v807 = vunpack.c.l.b16 %v647
      %v808 = vunpack.c.l.b16 %v648
      %v809 = vunpack.c.l.b16 %v649
      %v810 = vunpack.c.l.b16 %v650
      %v811 = vunpack.c.l.b16 %v651
      %v812 = vunpack.c.l.b16 %v652
      %v813 = vunpack.c.l.b16 %v653
      %v814 = vunpack.c.l.b16 %v654
      %v815 = vunpack.c.l.b16 %v655
      %v816 = vpack.c.b16 %v769, %v768
      %v817 = vpack.c.b16 %v771, %v770
      %v818 = vpack.c.b16 %v773, %v772
      %v819 = vpack.c.b16 %v775, %v774
      %v820 = vpack.c.b16 %v777, %v776
      %v821 = vpack.c.b16 %v779, %v778
      %v822 = vpack.c.b16 %v781, %v780
      %v823 = vpack.c.b16 %v783, %v782
      %v824 = vpack.c.b16 %v785, %v784
      %v825 = vpack.c.b16 %v787, %v786
      %v826 = vpack.c.b16 %v789, %v788
      %v827 = vpack.c.b16 %v791, %v790
      %v828 = vpack.c.b16 %v793, %v792
      %v829 = vpack.c.b16 %v795, %v794
      %v830 = vpack.c.b16 %v797, %v796
      %v831 = vpack.c.b16 %v799, %v798
      %v832 = vpack.c.b16 %v801, %v800
      %v833 = vpack.c.b16 %v803, %v802
      %v834 = vpack.c.b16 %v805, %v804
      %v835 = vpack.c.b16 %v807, %v806
      %v836 = vpack.c.b16 %v809, %v808
      %v837 = vpack.c.b16 %v811, %v810
      %v838 = vpack.c.b16 %v813, %v812
      %v839 = vpack.c.b16 %v815, %v814
      %864 = vmatprep.subr.bf16.mxu0 0
      %865 = vmatpush1.bf16.msra.mxu0 %v816
      %866 = vmatprep.subr.bf16.mxu0 0
      %867 = vmatpush1.bf16.msra.mxu0 %v817
      %868 = vmatprep.subr.bf16.mxu0 0
      %869 = vmatpush1.bf16.msra.mxu0 %v818
      %870 = vmatprep.subr.bf16.mxu0 0
      %871 = vmatpush1.bf16.msra.mxu0 %v819
      %872 = vmatprep.subr.bf16.mxu0 0
      %873 = vmatpush1.bf16.msra.mxu0 %v820
      %874 = vmatprep.subr.bf16.mxu0 0
      %875 = vmatpush1.bf16.msra.mxu0 %v821
      %876 = vmatprep.subr.bf16.mxu0 0
      %877 = vmatpush1.bf16.msra.mxu0 %v822
      %878 = vmatprep.subr.bf16.mxu0 0
      %879 = vmatpush1.bf16.msra.mxu0 %v823
      %880 = vmatprep.subr.bf16.mxu0 0
      %881 = vmatpush1.bf16.msra.mxu0 %v824
      %882 = vmatprep.subr.bf16.mxu0 0
      %883 = vmatpush1.bf16.msra.mxu0 %v825
      %884 = vmatprep.subr.bf16.mxu0 0
      %885 = vmatpush1.bf16.msra.mxu0 %v826
      %886 = vmatprep.subr.bf16.mxu0 0
      %887 = vmatpush1.bf16.msra.mxu0 %v827
      %888 = vmatprep.subr.bf16.mxu0 0
      %889 = vmatpush1.bf16.msra.mxu0 %v828
      %890 = vmatprep.subr.bf16.mxu0 0
      %891 = vmatpush1.bf16.msra.mxu0 %v829
      %892 = vmatprep.subr.bf16.mxu0 0
      %893 = vmatpush1.bf16.msra.mxu0 %v830
      %894 = vmatprep.subr.bf16.mxu0 0
      %895 = vmatpush1.bf16.msra.mxu0 %v831
      %896 = vmatprep.mubr.bf16.mxu0 %v697
      %897 = vmatmul.mubr.bf16.gmra.mrb[0].mxu0 %v696
      %v898 = vpop.f32.mrb[0].mxu0
      %v899 = vadd.f32 0.0, %v898
      %v900 = vpop.f32.mrb[0].mxu0
      %v901 = vpop.f32.mrb[0].mxu0
      %v902 = vadd.f32 0.0, %v901
      %v903 = vpop.f32.mrb[0].mxu0
      %904 = vmatprep.mubr.bf16.mxu0 %v700
      %905 = vmatmul.mubr.bf16.gmra.mrb[0].mxu0 %v699
      %v906 = vpop.f32.mrb[0].mxu0
      %v907 = vadd.f32 0.0, %v906
      %v908 = vpop.f32.mrb[0].mxu0
      %v909 = vpop.f32.mrb[0].mxu0
      %v910 = vadd.f32 0.0, %v909
      %v911 = vpop.f32.mrb[0].mxu0
      %912 = vmatprep.mubr.bf16.mxu0 %v703
      %913 = vmatmul.mubr.bf16.gmra.mrb[0].mxu0 %v702
      %v914 = vpop.f32.mrb[0].mxu0
      %v915 = vadd.f32 0.0, %v914
      %v916 = vpop.f32.mrb[0].mxu0
      %v917 = vpop.f32.mrb[0].mxu0
      %v918 = vadd.f32 0.0, %v917
      %v919 = vpop.f32.mrb[0].mxu0
      %920 = vmatprep.mubr.bf16.mxu0 %v706
      %921 = vmatmul.mubr.bf16.gmra.mrb[0].mxu0 %v705
      %v922 = vpop.f32.mrb[0].mxu0
      %v923 = vadd.f32 0.0, %v922
      %v924 = vpop.f32.mrb[0].mxu0
      %v925 = vpop.f32.mrb[0].mxu0
      %v926 = vadd.f32 0.0, %v925
      %v927 = vpop.f32.mrb[0].mxu0
      %928 = vdwg.mxu0
      %929 = vmatprep.subr.bf16.mxu0 0
      %930 = vmatpush1.bf16.msra.mxu0 %v832
      %931 = vmatprep.subr.bf16.mxu0 0
      %932 = vmatpush1.bf16.msra.mxu0 %v833
      %933 = vmatprep.subr.bf16.mxu0 0
      %934 = vmatpush1.bf16.msra.mxu0 %v834
      %935 = vmatprep.subr.bf16.mxu0 0
      %936 = vmatpush1.bf16.msra.mxu0 %v835
      %937 = vmatprep.subr.bf16.mxu0 0
      %938 = vmatpush1.bf16.msra.mxu0 %v836
      %939 = vmatprep.subr.bf16.mxu0 0
      %940 = vmatpush1.bf16.msra.mxu0 %v837
      %941 = vmatprep.subr.bf16.mxu0 0
      %942 = vmatpush1.bf16.msra.mxu0 %v838
      %943 = vmatprep.subr.bf16.mxu0 0
      %944 = vmatpush1.bf16.msra.mxu0 %v839
      %945 = vmatprep.subr.bf16.mxu0 0
      %946 = vmatpush1.bf16.msra.mxu0 0
      %947 = vmatprep.subr.bf16.mxu0 0
      %948 = vmatpush1.bf16.msra.mxu0 0
      %949 = vmatprep.subr.bf16.mxu0 0
      %950 = vmatpush1.bf16.msra.mxu0 0
      %951 = vmatprep.subr.bf16.mxu0 0
      %952 = vmatpush1.bf16.msra.mxu0 0
      %953 = vmatprep.subr.bf16.mxu0 0
      %954 = vmatpush1.bf16.msra.mxu0 0
      %955 = vmatprep.subr.bf16.mxu0 0
      %956 = vmatpush1.bf16.msra.mxu0 0
      %957 = vmatprep.subr.bf16.mxu0 0
      %958 = vmatpush1.bf16.msra.mxu0 0
      %959 = vmatprep.subr.bf16.mxu0 0
      %960 = vmatpush1.bf16.msra.mxu0 0
      %961 = vmatprep.mubr.bf16.mxu0 0
      %962 = vmatmul.mubr.bf16.gmra.mrb[0].mxu0 %v698
      %v963 = vpop.f32.mrb[0].mxu0
      %v964 = vadd.f32 %v899, %v963
      %v965 = vpop.f32.mrb[0].mxu0
      %v966 = vpop.f32.mrb[0].mxu0
      %v967 = vadd.f32 %v902, %v966
      %v968 = vpop.f32.mrb[0].mxu0
      %969 = vmatprep.mubr.bf16.mxu0 0
      %970 = vmatmul.mubr.bf16.gmra.mrb[0].mxu0 %v701
      %v971 = vpop.f32.mrb[0].mxu0
      %v972 = vadd.f32 %v907, %v971
      %v973 = vpop.f32.mrb[0].mxu0
      %v974 = vpop.f32.mrb[0].mxu0
      %v975 = vadd.f32 %v910, %v974
      %v976 = vpop.f32.mrb[0].mxu0
      %977 = vmatprep.mubr.bf16.mxu0 0
      %978 = vmatmul.mubr.bf16.gmra.mrb[0].mxu0 %v704
      %v979 = vpop.f32.mrb[0].mxu0
      %v980 = vadd.f32 %v915, %v979
      %v981 = vpop.f32.mrb[0].mxu0
      %v982 = vpop.f32.mrb[0].mxu0
      %v983 = vadd.f32 %v918, %v982
      %v984 = vpop.f32.mrb[0].mxu0
      %985 = vmatprep.mubr.bf16.mxu0 0
      %986 = vmatmul.mubr.bf16.gmra.mrb[0].mxu0 %v707
      %v987 = vpop.f32.mrb[0].mxu0
      %v988 = vadd.f32 %v923, %v987
      %v989 = vpop.f32.mrb[0].mxu0
      %v990 = vpop.f32.mrb[0].mxu0
      %v991 = vadd.f32 %v926, %v990
      %v992 = vpop.f32.mrb[0].mxu0
      %993 = vdwg.mxu0
      %v994 = vadd.f32 %v582, %v964
      %v995 = vadd.f32 %v583, %v967
      %v996 = vadd.f32 %v584, %v972
      %v997 = vadd.f32 %v585, %v975
      %v998 = vadd.f32 %v586, %v980
      %v999 = vadd.f32 %v587, %v983
      %v1000 = vadd.f32 %v588, %v988
      %v1001 = vadd.f32 %v589, %v991
      %1002 = vst [vmem:[#allocation2] sm:$0xff] %v994
      %1003 = vst [vmem:[#allocation2 + $0x8] sm:$0xff] %v995
      %1004 = vst [vmem:[#allocation2 + $0x10] sm:$0xff] %v996
      %1005 = vst [vmem:[#allocation2 + $0x18] sm:$0xff] %v997
      %1006 = vst [vmem:[#allocation2 + $0x20] sm:$0xff] %v998
      %1007 = vst [vmem:[#allocation2 + $0x28] sm:$0xff] %v999
      %1008 = vst [vmem:[#allocation2 + $0x30] sm:$0xff] %v1000
      %1009 = vst [vmem:[#allocation2 + $0x38] sm:$0xff] %v1001
      %v1010 = vld [vmem:[#allocation2] sm:$0xff]
      %v1011 = vld [vmem:[#allocation2 + $0x8] sm:$0xff]
      %v1012 = vld [vmem:[#allocation2 + $0x10] sm:$0xff]
      %v1013 = vld [vmem:[#allocation2 + $0x18] sm:$0xff]
      %v1014 = vld [vmem:[#allocation2 + $0x20] sm:$0xff]
      %v1015 = vld [vmem:[#allocation2 + $0x28] sm:$0xff]
      %v1016 = vld [vmem:[#allocation2 + $0x30] sm:$0xff]
      %v1017 = vld [vmem:[#allocation2 + $0x38] sm:$0xff]
      %v1018 = vld [vmem:[%s165 + $0xc] sm:$0xff]
      %v1019 = vld [vmem:[%s165 + $0x14] sm:$0xf]
      %v1020 = vld [vmem:[%s165 + $0x18] sm:$0xff]
      %v1021 = vld [vmem:[%s165 + $0x20] sm:$0xf]
      %v1022 = vld [vmem:[%s165 + $0x24] sm:$0xff]
      %v1023 = vld [vmem:[%s165 + $0x2c] sm:$0xf]
      %v1024 = vld [vmem:[%s165 + $0x30] sm:$0xff]
      %v1025 = vld [vmem:[%s165 + $0x38] sm:$0xf]
      %v1026 = vld [vmem:[%s165 + $0x3c] sm:$0xff]
      %v1027 = vld [vmem:[%s165 + $0x44] sm:$0xf]
      %v1028 = vld [vmem:[%s165 + $0x48] sm:$0xff]
      %v1029 = vld [vmem:[%s165 + $0x50] sm:$0xf]
      %v1030 = vld [vmem:[%s165 + $0x54] sm:$0xff]
      %v1031 = vld [vmem:[%s165 + $0x5c] sm:$0xf]
      %v1032 = vld [vmem:[%s165 + $0x60] sm:$0xff]
      %v1033 = vld [vmem:[%s165 + $0x68] sm:$0xf]
      %s1034 = scalar_lea.vmem %s1, 384
      %v1035 = vld [vmem:[%s1034] sm:$0xf]
      %v1036 = vld [vmem:[%s1034 + $0x4] sm:$0xf]
      %v1037 = vld [vmem:[%s1034 + $0x8] sm:$0xf]
      %v1038 = vld [vmem:[%s1034 + $0xc] sm:$0xf]
      %v1039 = vld [vmem:[%s1034 + $0x10] sm:$0xf]
      %v1040 = vld [vmem:[%s1034 + $0x14] sm:$0xf]
      %v1041 = vld [vmem:[%s1034 + $0x18] sm:$0xf]
      %v1042 = vld [vmem:[%s1034 + $0x1c] sm:$0xf]
      %v1043 = vld [vmem:[%s1034 + $0x20] sm:$0xf]
      %v1044 = vld [vmem:[%s1034 + $0x24] sm:$0xf]
      %v1045 = vld [vmem:[%s1034 + $0x28] sm:$0xf]
      %v1046 = vld [vmem:[%s1034 + $0x2c] sm:$0xf]
      %v1047 = vld [vmem:[%s1034 + $0x30] sm:$0xf]
      %v1048 = vld [vmem:[%s1034 + $0x34] sm:$0xf]
      %v1049 = vld [vmem:[%s1034 + $0x38] sm:$0xf]
      %v1050 = vld [vmem:[%s1034 + $0x3c] sm:$0xf]
      %v1051 = vld [vmem:[%s1034 + $0x40] sm:$0xf]
      %v1052 = vld [vmem:[%s1034 + $0x44] sm:$0xf]
      %v1053 = vld [vmem:[%s1034 + $0x48] sm:$0xf]
      %v1054 = vld [vmem:[%s1034 + $0x4c] sm:$0xf]
      %v1055 = vld [vmem:[%s1034 + $0x50] sm:$0xf]
      %v1056 = vld [vmem:[%s1034 + $0x54] sm:$0xf]
      %v1057 = vld [vmem:[%s1034 + $0x58] sm:$0xf]
      %v1058 = vld [vmem:[%s1034 + $0x5c] sm:$0xf]
      %v1059 = vld [vmem:[%s1034 + $0x60] sm:$0xf]
      %v1060 = vld [vmem:[%s1034 + $0x64] sm:$0xf]
      %v1061 = vld [vmem:[%s1034 + $0x68] sm:$0xf]
      %v1062 = vld [vmem:[%s1034 + $0x6c] sm:$0xf]
      %v1063 = vld [vmem:[%s1034 + $0x70] sm:$0xf]
      %v1064 = vld [vmem:[%s1034 + $0x74] sm:$0xf]
      %v1065 = vld [vmem:[%s1034 + $0x78] sm:$0xf]
      %v1066 = vld [vmem:[%s1034 + $0x7c] sm:$0xf]
      %v1067 = vld [vmem:[%s1034 + $0x80] sm:$0xf]
      %v1068 = vld [vmem:[%s1034 + $0x84] sm:$0xf]
      %v1069 = vld [vmem:[%s1034 + $0x88] sm:$0xf]
      %v1070 = vld [vmem:[%s1034 + $0x8c] sm:$0xf]
      %v1071 = vld [vmem:[%s1034 + $0x90] sm:$0xf]
      %v1072 = vld [vmem:[%s1034 + $0x94] sm:$0xf]
      %v1073 = vld [vmem:[%s1034 + $0x98] sm:$0xf]
      %v1074 = vld [vmem:[%s1034 + $0x9c] sm:$0xf]
      %v1075 = vld [vmem:[%s1034 + $0xa0] sm:$0xf]
      %v1076 = vld [vmem:[%s1034 + $0xa4] sm:$0xf]
      %v1077 = vld [vmem:[%s1034 + $0xa8] sm:$0xf]
      %v1078 = vld [vmem:[%s1034 + $0xac] sm:$0xf]
      %v1079 = vld [vmem:[%s1034 + $0xb0] sm:$0xf]
      %v1080 = vld [vmem:[%s1034 + $0xb4] sm:$0xf]
      %v1081 = vld [vmem:[%s1034 + $0xb8] sm:$0xf]
      %v1082 = vld [vmem:[%s1034 + $0xbc] sm:$0xf]
      %v1099 = vunpack.c.l.b16 %v1018
      %v1100 = vunpack.c.h.b16 %v1018
      %v1101 = vunpack.c.l.b16 %v1019
      %v1102 = vunpack.c.l.b16 %v1020
      %v1103 = vunpack.c.h.b16 %v1020
      %v1104 = vunpack.c.l.b16 %v1021
      %v1105 = vunpack.c.l.b16 %v1022
      %v1106 = vunpack.c.h.b16 %v1022
      %v1107 = vunpack.c.l.b16 %v1023
      %v1108 = vunpack.c.l.b16 %v1024
      %v1109 = vunpack.c.h.b16 %v1024
      %v1110 = vunpack.c.l.b16 %v1025
      %v1111 = vunpack.c.l.b16 %v1026
      %v1112 = vunpack.c.h.b16 %v1026
      %v1113 = vunpack.c.l.b16 %v1027
      %v1114 = vunpack.c.l.b16 %v1028
      %v1115 = vunpack.c.h.b16 %v1028
      %v1116 = vunpack.c.l.b16 %v1029
      %v1117 = vunpack.c.l.b16 %v1030
      %v1118 = vunpack.c.h.b16 %v1030
      %v1119 = vunpack.c.l.b16 %v1031
      %v1120 = vunpack.c.l.b16 %v1032
      %v1121 = vunpack.c.h.b16 %v1032
      %v1122 = vunpack.c.l.b16 %v1033
      %v1123 = vpack.c.b16 %v1102, %v1099
      %v1124 = vpack.c.b16 %v1103, %v1100
      %v1125 = vpack.c.b16 %v1104, %v1101
      %v1126 = vpack.c.b16 %v1108, %v1105
      %v1127 = vpack.c.b16 %v1109, %v1106
      %v1128 = vpack.c.b16 %v1110, %v1107
      %v1129 = vpack.c.b16 %v1114, %v1111
      %v1130 = vpack.c.b16 %v1115, %v1112
      %v1131 = vpack.c.b16 %v1116, %v1113
      %v1132 = vpack.c.b16 %v1120, %v1117
      %v1133 = vpack.c.b16 %v1121, %v1118
      %v1134 = vpack.c.b16 %v1122, %v1119
      %v1195 = vunpack.c.l.b16 %v1035
      %v1196 = vunpack.c.l.b16 %v1036
      %v1197 = vunpack.c.l.b16 %v1037
      %v1198 = vunpack.c.l.b16 %v1038
      %v1199 = vunpack.c.l.b16 %v1039
      %v1200 = vunpack.c.l.b16 %v1040
      %v1201 = vunpack.c.l.b16 %v1041
      %v1202 = vunpack.c.l.b16 %v1042
      %v1203 = vunpack.c.l.b16 %v1043
      %v1204 = vunpack.c.l.b16 %v1044
      %v1205 = vunpack.c.l.b16 %v1045
      %v1206 = vunpack.c.l.b16 %v1046
      %v1207 = vunpack.c.l.b16 %v1047
      %v1208 = vunpack.c.l.b16 %v1048
      %v1209 = vunpack.c.l.b16 %v1049
      %v1210 = vunpack.c.l.b16 %v1050
      %v1211 = vunpack.c.l.b16 %v1051
      %v1212 = vunpack.c.l.b16 %v1052
      %v1213 = vunpack.c.l.b16 %v1053
      %v1214 = vunpack.c.l.b16 %v1054
      %v1215 = vunpack.c.l.b16 %v1055
      %v1216 = vunpack.c.l.b16 %v1056
      %v1217 = vunpack.c.l.b16 %v1057
      %v1218 = vunpack.c.l.b16 %v1058
      %v1219 = vunpack.c.l.b16 %v1059
      %v1220 = vunpack.c.l.b16 %v1060
      %v1221 = vunpack.c.l.b16 %v1061
      %v1222 = vunpack.c.l.b16 %v1062
      %v1223 = vunpack.c.l.b16 %v1063
      %v1224 = vunpack.c.l.b16 %v1064
      %v1225 = vunpack.c.l.b16 %v1065
      %v1226 = vunpack.c.l.b16 %v1066
      %v1227 = vunpack.c.l.b16 %v1067
      %v1228 = vunpack.c.l.b16 %v1068
      %v1229 = vunpack.c.l.b16 %v1069
      %v1230 = vunpack.c.l.b16 %v1070
      %v1231 = vunpack.c.l.b16 %v1071
      %v1232 = vunpack.c.l.b16 %v1072
      %v1233 = vunpack.c.l.b16 %v1073
      %v1234 = vunpack.c.l.b16 %v1074
      %v1235 = vunpack.c.l.b16 %v1075
      %v1236 = vunpack.c.l.b16 %v1076
      %v1237 = vunpack.c.l.b16 %v1077
      %v1238 = vunpack.c.l.b16 %v1078
      %v1239 = vunpack.c.l.b16 %v1079
      %v1240 = vunpack.c.l.b16 %v1080
      %v1241 = vunpack.c.l.b16 %v1081
      %v1242 = vunpack.c.l.b16 %v1082
      %v1243 = vpack.c.b16 %v1196, %v1195
      %v1244 = vpack.c.b16 %v1198, %v1197
      %v1245 = vpack.c.b16 %v1200, %v1199
      %v1246 = vpack.c.b16 %v1202, %v1201
      %v1247 = vpack.c.b16 %v1204, %v1203
      %v1248 = vpack.c.b16 %v1206, %v1205
      %v1249 = vpack.c.b16 %v1208, %v1207
      %v1250 = vpack.c.b16 %v1210, %v1209
      %v1251 = vpack.c.b16 %v1212, %v1211
      %v1252 = vpack.c.b16 %v1214, %v1213
      %v1253 = vpack.c.b16 %v1216, %v1215
      %v1254 = vpack.c.b16 %v1218, %v1217
      %v1255 = vpack.c.b16 %v1220, %v1219
      %v1256 = vpack.c.b16 %v1222, %v1221
      %v1257 = vpack.c.b16 %v1224, %v1223
      %v1258 = vpack.c.b16 %v1226, %v1225
      %v1259 = vpack.c.b16 %v1228, %v1227
      %v1260 = vpack.c.b16 %v1230, %v1229
      %v1261 = vpack.c.b16 %v1232, %v1231
      %v1262 = vpack.c.b16 %v1234, %v1233
      %v1263 = vpack.c.b16 %v1236, %v1235
      %v1264 = vpack.c.b16 %v1238, %v1237
      %v1265 = vpack.c.b16 %v1240, %v1239
      %v1266 = vpack.c.b16 %v1242, %v1241
      %1291 = vmatprep.subr.bf16.mxu0 0
      %1292 = vmatpush1.bf16.msra.mxu0 %v1243
      %1293 = vmatprep.subr.bf16.mxu0 0
      %1294 = vmatpush1.bf16.msra.mxu0 %v1244
      %1295 = vmatprep.subr.bf16.mxu0 0
      %1296 = vmatpush1.bf16.msra.mxu0 %v1245
      %1297 = vmatprep.subr.bf16.mxu0 0
      %1298 = vmatpush1.bf16.msra.mxu0 %v1246
      %1299 = vmatprep.subr.bf16.mxu0 0
      %1300 = vmatpush1.bf16.msra.mxu0 %v1247
      %1301 = vmatprep.subr.bf16.mxu0 0
      %1302 = vmatpush1.bf16.msra.mxu0 %v1248
      %1303 = vmatprep.subr.bf16.mxu0 0
      %1304 = vmatpush1.bf16.msra.mxu0 %v1249
      %1305 = vmatprep.subr.bf16.mxu0 0
      %1306 = vmatpush1.bf16.msra.mxu0 %v1250
      %1307 = vmatprep.subr.bf16.mxu0 0
      %1308 = vmatpush1.bf16.msra.mxu0 %v1251
      %1309 = vmatprep.subr.bf16.mxu0 0
      %1310 = vmatpush1.bf16.msra.mxu0 %v1252
      %1311 = vmatprep.subr.bf16.mxu0 0
      %1312 = vmatpush1.bf16.msra.mxu0 %v1253
      %1313 = vmatprep.subr.bf16.mxu0 0
      %1314 = vmatpush1.bf16.msra.mxu0 %v1254
      %1315 = vmatprep.subr.bf16.mxu0 0
      %1316 = vmatpush1.bf16.msra.mxu0 %v1255
      %1317 = vmatprep.subr.bf16.mxu0 0
      %1318 = vmatpush1.bf16.msra.mxu0 %v1256
      %1319 = vmatprep.subr.bf16.mxu0 0
      %1320 = vmatpush1.bf16.msra.mxu0 %v1257
      %1321 = vmatprep.subr.bf16.mxu0 0
      %1322 = vmatpush1.bf16.msra.mxu0 %v1258
      %1323 = vmatprep.mubr.bf16.mxu0 %v1124
      %1324 = vmatmul.mubr.bf16.gmra.mrb[0].mxu0 %v1123
      %v1325 = vpop.f32.mrb[0].mxu0
      %v1326 = vadd.f32 0.0, %v1325
      %v1327 = vpop.f32.mrb[0].mxu0
      %v1328 = vpop.f32.mrb[0].mxu0
      %v1329 = vadd.f32 0.0, %v1328
      %v1330 = vpop.f32.mrb[0].mxu0
      %1331 = vmatprep.mubr.bf16.mxu0 %v1127
      %1332 = vmatmul.mubr.bf16.gmra.mrb[0].mxu0 %v1126
      %v1333 = vpop.f32.mrb[0].mxu0
      %v1334 = vadd.f32 0.0, %v1333
      %v1335 = vpop.f32.mrb[0].mxu0
      %v1336 = vpop.f32.mrb[0].mxu0
      %v1337 = vadd.f32 0.0, %v1336
      %v1338 = vpop.f32.mrb[0].mxu0
      %1339 = vmatprep.mubr.bf16.mxu0 %v1130
      %1340 = vmatmul.mubr.bf16.gmra.mrb[0].mxu0 %v1129
      %v1341 = vpop.f32.mrb[0].mxu0
      %v1342 = vadd.f32 0.0, %v1341
      %v1343 = vpop.f32.mrb[0].mxu0
      %v1344 = vpop.f32.mrb[0].mxu0
      %v1345 = vadd.f32 0.0, %v1344
      %v1346 = vpop.f32.mrb[0].mxu0
      %1347 = vmatprep.mubr.bf16.mxu0 %v1133
      %1348 = vmatmul.mubr.bf16.gmra.mrb[0].mxu0 %v1132
      %v1349 = vpop.f32.mrb[0].mxu0
      %v1350 = vadd.f32 0.0, %v1349
      %v1351 = vpop.f32.mrb[0].mxu0
      %v1352 = vpop.f32.mrb[0].mxu0
      %v1353 = vadd.f32 0.0, %v1352
      %v1354 = vpop.f32.mrb[0].mxu0
      %1355 = vdwg.mxu0
      %1356 = vmatprep.subr.bf16.mxu0 0
      %1357 = vmatpush1.bf16.msra.mxu0 %v1259
      %1358 = vmatprep.subr.bf16.mxu0 0
      %1359 = vmatpush1.bf16.msra.mxu0 %v1260
      %1360 = vmatprep.subr.bf16.mxu0 0
      %1361 = vmatpush1.bf16.msra.mxu0 %v1261
      %1362 = vmatprep.subr.bf16.mxu0 0
      %1363 = vmatpush1.bf16.msra.mxu0 %v1262
      %1364 = vmatprep.subr.bf16.mxu0 0
      %1365 = vmatpush1.bf16.msra.mxu0 %v1263
      %1366 = vmatprep.subr.bf16.mxu0 0
      %1367 = vmatpush1.bf16.msra.mxu0 %v1264
      %1368 = vmatprep.subr.bf16.mxu0 0
      %1369 = vmatpush1.bf16.msra.mxu0 %v1265
      %1370 = vmatprep.subr.bf16.mxu0 0
      %1371 = vmatpush1.bf16.msra.mxu0 %v1266
      %1372 = vmatprep.subr.bf16.mxu0 0
      %1373 = vmatpush1.bf16.msra.mxu0 0
      %1374 = vmatprep.subr.bf16.mxu0 0
      %1375 = vmatpush1.bf16.msra.mxu0 0
      %1376 = vmatprep.subr.bf16.mxu0 0
      %1377 = vmatpush1.bf16.msra.mxu0 0
      %1378 = vmatprep.subr.bf16.mxu0 0
      %1379 = vmatpush1.bf16.msra.mxu0 0
      %1380 = vmatprep.subr.bf16.mxu0 0
      %1381 = vmatpush1.bf16.msra.mxu0 0
      %1382 = vmatprep.subr.bf16.mxu0 0
      %1383 = vmatpush1.bf16.msra.mxu0 0
      %1384 = vmatprep.subr.bf16.mxu0 0
      %1385 = vmatpush1.bf16.msra.mxu0 0
      %1386 = vmatprep.subr.bf16.mxu0 0
      %1387 = vmatpush1.bf16.msra.mxu0 0
      %1388 = vmatprep.mubr.bf16.mxu0 0
      %1389 = vmatmul.mubr.bf16.gmra.mrb[0].mxu0 %v1125
      %v1390 = vpop.f32.mrb[0].mxu0
      %v1391 = vadd.f32 %v1326, %v1390
      %v1392 = vpop.f32.mrb[0].mxu0
      %v1393 = vpop.f32.mrb[0].mxu0
      %v1394 = vadd.f32 %v1329, %v1393
      %v1395 = vpop.f32.mrb[0].mxu0
      %1396 = vmatprep.mubr.bf16.mxu0 0
      %1397 = vmatmul.mubr.bf16.gmra.mrb[0].mxu0 %v1128
      %v1398 = vpop.f32.mrb[0].mxu0
      %v1399 = vadd.f32 %v1334, %v1398
      %v1400 = vpop.f32.mrb[0].mxu0
      %v1401 = vpop.f32.mrb[0].mxu0
      %v1402 = vadd.f32 %v1337, %v1401
      %v1403 = vpop.f32.mrb[0].mxu0
      %1404 = vmatprep.mubr.bf16.mxu0 0
      %1405 = vmatmul.mubr.bf16.gmra.mrb[0].mxu0 %v1131
      %v1406 = vpop.f32.mrb[0].mxu0
      %v1407 = vadd.f32 %v1342, %v1406
      %v1408 = vpop.f32.mrb[0].mxu0
      %v1409 = vpop.f32.mrb[0].mxu0
      %v1410 = vadd.f32 %v1345, %v1409
      %v1411 = vpop.f32.mrb[0].mxu0
      %1412 = vmatprep.mubr.bf16.mxu0 0
      %1413 = vmatmul.mubr.bf16.gmra.mrb[0].mxu0 %v1134
      %v1414 = vpop.f32.mrb[0].mxu0
      %v1415 = vadd.f32 %v1350, %v1414
      %v1416 = vpop.f32.mrb[0].mxu0
      %v1417 = vpop.f32.mrb[0].mxu0
      %v1418 = vadd.f32 %v1353, %v1417
      %v1419 = vpop.f32.mrb[0].mxu0
      %1420 = vdwg.mxu0
      %v1421 = vadd.f32 %v1010, %v1391
      %v1422 = vadd.f32 %v1011, %v1394
      %v1423 = vadd.f32 %v1012, %v1399
      %v1424 = vadd.f32 %v1013, %v1402
      %v1425 = vadd.f32 %v1014, %v1407
      %v1426 = vadd.f32 %v1015, %v1410
      %v1427 = vadd.f32 %v1016, %v1415
      %v1428 = vadd.f32 %v1017, %v1418
      %1429 = vst [vmem:[#allocation2] sm:$0xff] %v1421
      %1430 = vst [vmem:[#allocation2 + $0x8] sm:$0xff] %v1422
      %1431 = vst [vmem:[#allocation2 + $0x10] sm:$0xff] %v1423
      %1432 = vst [vmem:[#allocation2 + $0x18] sm:$0xff] %v1424
      %1433 = vst [vmem:[#allocation2 + $0x20] sm:$0xff] %v1425
      %1434 = vst [vmem:[#allocation2 + $0x28] sm:$0xff] %v1426
      %1435 = vst [vmem:[#allocation2 + $0x30] sm:$0xff] %v1427
      %1436 = vst [vmem:[#allocation2 + $0x38] sm:$0xff] %v1428
      %v1437 = vld [vmem:[#allocation2] sm:$0xff]
      %v1438 = vld [vmem:[#allocation2 + $0x8] sm:$0xff]
      %v1439 = vld [vmem:[#allocation2 + $0x10] sm:$0xff]
      %v1440 = vld [vmem:[#allocation2 + $0x18] sm:$0xff]
      %v1441 = vld [vmem:[#allocation2 + $0x20] sm:$0xff]
      %v1442 = vld [vmem:[#allocation2 + $0x28] sm:$0xff]
      %v1443 = vld [vmem:[#allocation2 + $0x30] sm:$0xff]
      %v1444 = vld [vmem:[#allocation2 + $0x38] sm:$0xff]
      %v1445 = vld [vmem:[%s2] sm:$0x1]
      %v1447 = vlaneseq
      %v1448 = vshrl.u32 %v1447, 7
      %v1449 = vsub.s32 0, %v1448
      %v1450 = vrot.slane %v1445, %v1449
      %v1452 = vadd.f32 %v1437, %v1450
      %v1453 = vadd.f32 %v1438, %v1450
      %v1454 = vadd.f32 %v1439, %v1450
      %v1455 = vadd.f32 %v1440, %v1450
      %v1456 = vadd.f32 %v1441, %v1450
      %v1457 = vadd.f32 %v1442, %v1450
      %v1458 = vadd.f32 %v1443, %v1450
      %v1459 = vadd.f32 %v1444, %v1450
      %vm1460 = vcmp.ge.f32.partialorder %v1452, 0.0
      %vm1461 = vcmp.ge.f32.partialorder %v1453, 0.0
      %vm1462 = vcmp.ge.f32.partialorder %v1454, 0.0
      %vm1463 = vcmp.ge.f32.partialorder %v1455, 0.0
      %vm1464 = vcmp.ge.f32.partialorder %v1456, 0.0
      %vm1465 = vcmp.ge.f32.partialorder %v1457, 0.0
      %vm1466 = vcmp.ge.f32.partialorder %v1458, 0.0
      %vm1467 = vcmp.ge.f32.partialorder %v1459, 0.0
      %v1468 = vmul.f32 %v1452, 0.3
      %v1469 = vmul.f32 %v1453, 0.3
      %v1470 = vmul.f32 %v1454, 0.3
      %v1471 = vmul.f32 %v1455, 0.3
      %v1472 = vmul.f32 %v1456, 0.3
      %v1473 = vmul.f32 %v1457, 0.3
      %v1474 = vmul.f32 %v1458, 0.3
      %v1475 = vmul.f32 %v1459, 0.3
      %v1476 = vsel %vm1460, %v1452, %v1468
      %v1477 = vsel %vm1461, %v1453, %v1469
      %v1478 = vsel %vm1462, %v1454, %v1470
      %v1479 = vsel %vm1463, %v1455, %v1471
      %v1480 = vsel %vm1464, %v1456, %v1472
      %v1481 = vsel %vm1465, %v1457, %v1473
      %v1482 = vsel %vm1466, %v1458, %v1474
      %v1483 = vsel %vm1467, %v1459, %v1475
      %v1484 = vpack.c.bf16 %v1477, %v1476
      %v1485 = vpack.c.bf16 %v1479, %v1478
      %v1486 = vpack.c.bf16 %v1481, %v1480
      %v1487 = vpack.c.bf16 %v1483, %v1482
      %v1492 = vunpack.c.l.b16 %v1484
      %v1493 = vunpack.c.h.b16 %v1484
      %v1494 = vunpack.c.l.b16 %v1485
      %v1495 = vunpack.c.h.b16 %v1485
      %v1496 = vunpack.c.l.b16 %v1486
      %v1497 = vunpack.c.h.b16 %v1486
      %v1498 = vunpack.c.l.b16 %v1487
      %v1499 = vunpack.c.h.b16 %v1487
      %v1500 = vpack.c.b16 %v1492, %v1492
      %v1501 = vpack.c.b16 %v1493, %v1493
      %v1502 = vpack.c.b16 %v1494, %v1494
      %v1503 = vpack.c.b16 %v1495, %v1495
      %v1504 = vpack.c.b16 %v1496, %v1496
      %v1505 = vpack.c.b16 %v1497, %v1497
      %v1506 = vpack.c.b16 %v1498, %v1498
      %v1507 = vpack.c.b16 %v1499, %v1499
      %1516 = vst [vmem:[%s170] sm:$0xf] %v1500
      %1517 = vst [vmem:[%s170 + $0x4] sm:$0xf] %v1501
      %1518 = vst [vmem:[%s170 + $0x8] sm:$0xf] %v1502
      %1519 = vst [vmem:[%s170 + $0xc] sm:$0xf] %v1503
      %1520 = vst [vmem:[%s170 + $0x10] sm:$0xf] %v1504
      %1521 = vst [vmem:[%s170 + $0x14] sm:$0xf] %v1505
      %1522 = vst [vmem:[%s170 + $0x18] sm:$0xf] %v1506
      %1523 = vst [vmem:[%s170 + $0x1c] sm:$0xf] %v1507
      %p1524 = scmp.lt.s32.totalorder %s14, 1
      %s1525 = scalar_select %p1524, %s14, 1
      %s1526 = smul.addr %s1525, 8
      %s1527 = smul.addr %s1526, 4
      %s1528 = scalar_lea.vmem %s3, %s1527
      // Predicated region
      $region33: #{discriminator_forward.5} parent=31 // pred_check
        %p1529 = pneg %p100
      $region34: #{discriminator_forward.5} parent=31 // pred_check_branch
        %1531 = sbr.rel (%p1529) target = $region36
      $region35: #{discriminator_forward.5} parent=31 // pred_region
        _
      $region36: #{discriminator_forward.5} parent=31 // pred_fallthru
        _
    $region32: #{discriminator_forward.5} parent=5 // pred_fallthru
      _
    %p1532 = scmp.le.s32.totalorder 2, %s9
    // Predicated region
    $region37: #{discriminator_forward.5} parent=5 // pred_check
      %p1533 = pneg %p1532
    $region38: #{discriminator_forward.5} parent=5 // pred_check_branch
      %1535 = sbr.rel (%p1533) target = $region40
    $region39: #{discriminator_forward.5} parent=5 // pred_region
      %s1536 = ssub.s32 %s9, 2
      // Predicated region
      $region41: #{discriminator_forward.5} parent=39 // pred_check
        %p1537 = pneg %p106
      $region42: #{discriminator_forward.5} parent=39 // pred_check_branch
        %1539 = sbr.rel (%p1537) target = $region44
      $region43: #{discriminator_forward.5} parent=39 // pred_region
        %p1540 = scmp.lt.s32.totalorder %s15, 1
        %s1541 = scalar_select %p1540, %s15, 1
        %s1542 = smul.addr %s1541, 8
        %s1543 = smul.addr %s1542, 4
        %s1544 = scalar_lea.vmem %s3, %s1543
      $region44: #{discriminator_forward.5} parent=39 // pred_fallthru
        _
    $region40: #{discriminator_forward.5} parent=5 // pred_fallthru
      _
  $region6: #{discriminator_forward.5} parent=0 // loop_footer
    %s13 = sadd.s32 1, %s9
  $region7: #{discriminator_forward.5} parent=0 // loop_footer_branch
    %8 = sbr.rel target = $region3
  $region8: #{discriminator_forward.5} parent=0 // loop_exit
    _

// kernel: discriminator_forward.7
$region0: #{discriminator_forward.7}
  #allocation0 [shape = 'u32[]', space=smem, size = 0x4, offset = 0x4, fixed_abs, tag = 'smem constant byte address 0x4 - core index']
  #allocation1 [shape = 'u32[144,128]{1,0:T(1,128)}', space=vmem, size = 0x12000, scoped, tag = 'internal scratch']
  #allocation2 [shape = 'f32[1,1]{1,0:T(1,128)S(1)}', space=vmem, size = 0x200, scoped, tag = 'scoped memory for discriminator_forward.7']
  %s0 = inlined_call_operand.vmem [shape: bf16[2,4096], index: 0, kind: input, shape index: {}]
  %s1 = inlined_call_operand.vmem [shape: bf16[1,4096], index: 1, kind: input, shape index: {}]
  %s2 = inlined_call_operand.<no memory space> [shape: f32[1,1], index: 2, kind: input, shape index: {}]
  %s3 = inlined_call_operand.vmem [shape: f32[2,128], index: 3, kind: output, shape index: {}]
  %s4 = sld [smem:[#allocation0]]
  $region22: #{discriminator_forward.7} parent=0
    _
  %s6 = ssub.s32 1, %s4
  %s7 = scalar_select 0, %s6, %s4
  %v8 = vstv %s2
  %9 = vst [vmem:[#allocation2] sm:$0x1] %v8
  // Predicated region
  $region2: #{discriminator_forward.7} parent=0 // pred_check
    _
  $region3: #{discriminator_forward.7} parent=0 // pred_check_branch
    %11 = sbr.rel (0) target = $region5
  $region4: #{discriminator_forward.7} parent=0 // pred_region
    _
  $region5: #{discriminator_forward.7} parent=0 // pred_fallthru
    _
  // Predicated region
  $region6: #{discriminator_forward.7} parent=0 // pred_check
    _
  $region7: #{discriminator_forward.7} parent=0 // pred_check_branch
    %13 = sbr.rel (0) target = $region9
  $region8: #{discriminator_forward.7} parent=0 // pred_region
    _
  $region9: #{discriminator_forward.7} parent=0 // pred_fallthru
    _
  // Predicated region
  $region10: #{discriminator_forward.7} parent=0 // pred_check
    _
  $region11: #{discriminator_forward.7} parent=0 // pred_check_branch
    %15 = sbr.rel (0) target = $region13
  $region12: #{discriminator_forward.7} parent=0 // pred_region
    _
  $region13: #{discriminator_forward.7} parent=0 // pred_fallthru
    _
  %v16 = vld [vmem:[%s0] sm:$0xff]
  %v17 = vld [vmem:[%s0 + $0x8] sm:$0xff]
  %v18 = vld [vmem:[%s0 + $0x10] sm:$0xff]
  %v19 = vld [vmem:[%s0 + $0x18] sm:$0xff]
  %v20 = vunpack.c.l.bf16 %v16
  %v21 = vunpack.c.h.bf16 %v16
  %v22 = vunpack.c.l.bf16 %v17
  %v23 = vunpack.c.h.bf16 %v17
  %v24 = vunpack.c.l.bf16 %v18
  %v25 = vunpack.c.h.bf16 %v18
  %v26 = vunpack.c.l.bf16 %v19
  %v27 = vunpack.c.h.bf16 %v19
  %v28 = vld [vmem:[%s1] sm:$0xff]
  %v29 = vld [vmem:[%s1 + $0x8] sm:$0xff]
  %v30 = vld [vmem:[%s1 + $0x10] sm:$0xff]
  %v31 = vld [vmem:[%s1 + $0x18] sm:$0xff]
  %v32 = vunpack.c.l.bf16 %v28
  %v33 = vunpack.c.h.bf16 %v28
  %v34 = vunpack.c.l.bf16 %v29
  %v35 = vunpack.c.h.bf16 %v29
  %v36 = vunpack.c.l.bf16 %v30
  %v37 = vunpack.c.h.bf16 %v30
  %v38 = vunpack.c.l.bf16 %v31
  %v39 = vunpack.c.h.bf16 %v31
  %v48 = vlaneseq
  %v49 = vshrl.u32 %v48, 7
  %v50 = vsub.s32 0, %v49
  %v51 = vrot.slane %v32, %v50
  %v52 = vlaneseq
  %v53 = vshrl.u32 %v52, 7
  %v54 = vsub.s32 2, %v53
  %v55 = vrot.slane %v32, %v54
  %v56 = vlaneseq
  %v57 = vshrl.u32 %v56, 7
  %v58 = vsub.s32 4, %v57
  %v59 = vrot.slane %v32, %v58
  %v60 = vlaneseq
  %v61 = vshrl.u32 %v60, 7
  %v62 = vsub.s32 6, %v61
  %v63 = vrot.slane %v32, %v62
  %v64 = vlaneseq
  %v65 = vshrl.u32 %v64, 7
  %v66 = vsub.s32 0, %v65
  %v67 = vrot.slane %v33, %v66
  %v68 = vlaneseq
  %v69 = vshrl.u32 %v68, 7
  %v70 = vsub.s32 2, %v69
  %v71 = vrot.slane %v33, %v70
  %v72 = vlaneseq
  %v73 = vshrl.u32 %v72, 7
  %v74 = vsub.s32 4, %v73
  %v75 = vrot.slane %v33, %v74
  %v76 = vlaneseq
  %v77 = vshrl.u32 %v76, 7
  %v78 = vsub.s32 6, %v77
  %v79 = vrot.slane %v33, %v78
  %v80 = vlaneseq
  %v81 = vshrl.u32 %v80, 7
  %v82 = vsub.s32 0, %v81
  %v83 = vrot.slane %v34, %v82
  %v84 = vlaneseq
  %v85 = vshrl.u32 %v84, 7
  %v86 = vsub.s32 2, %v85
  %v87 = vrot.slane %v34, %v86
  %v88 = vlaneseq
  %v89 = vshrl.u32 %v88, 7
  %v90 = vsub.s32 4, %v89
  %v91 = vrot.slane %v34, %v90
  %v92 = vlaneseq
  %v93 = vshrl.u32 %v92, 7
  %v94 = vsub.s32 6, %v93
  %v95 = vrot.slane %v34, %v94
  %v96 = vlaneseq
  %v97 = vshrl.u32 %v96, 7
  %v98 = vsub.s32 0, %v97
  %v99 = vrot.slane %v35, %v98
  %v100 = vlaneseq
  %v101 = vshrl.u32 %v100, 7
  %v102 = vsub.s32 2, %v101
  %v103 = vrot.slane %v35, %v102
  %v104 = vlaneseq
  %v105 = vshrl.u32 %v104, 7
  %v106 = vsub.s32 4, %v105
  %v107 = vrot.slane %v35, %v106
  %v108 = vlaneseq
  %v109 = vshrl.u32 %v108, 7
  %v110 = vsub.s32 6, %v109
  %v111 = vrot.slane %v35, %v110
  %v112 = vlaneseq
  %v113 = vshrl.u32 %v112, 7
  %v114 = vsub.s32 0, %v113
  %v115 = vrot.slane %v36, %v114
  %v116 = vlaneseq
  %v117 = vshrl.u32 %v116, 7
  %v118 = vsub.s32 2, %v117
  %v119 = vrot.slane %v36, %v118
  %v120 = vlaneseq
  %v121 = vshrl.u32 %v120, 7
  %v122 = vsub.s32 4, %v121
  %v123 = vrot.slane %v36, %v122
  %v124 = vlaneseq
  %v125 = vshrl.u32 %v124, 7
  %v126 = vsub.s32 6, %v125
  %v127 = vrot.slane %v36, %v126
  %v128 = vlaneseq
  %v129 = vshrl.u32 %v128, 7
  %v130 = vsub.s32 0, %v129
  %v131 = vrot.slane %v37, %v130
  %v132 = vlaneseq
  %v133 = vshrl.u32 %v132, 7
  %v134 = vsub.s32 2, %v133
  %v135 = vrot.slane %v37, %v134
  %v136 = vlaneseq
  %v137 = vshrl.u32 %v136, 7
  %v138 = vsub.s32 4, %v137
  %v139 = vrot.slane %v37, %v138
  %v140 = vlaneseq
  %v141 = vshrl.u32 %v140, 7
  %v142 = vsub.s32 6, %v141
  %v143 = vrot.slane %v37, %v142
  %v144 = vlaneseq
  %v145 = vshrl.u32 %v144, 7
  %v146 = vsub.s32 0, %v145
  %v147 = vrot.slane %v38, %v146
  %v148 = vlaneseq
  %v149 = vshrl.u32 %v148, 7
  %v150 = vsub.s32 2, %v149
  %v151 = vrot.slane %v38, %v150
  %v152 = vlaneseq
  %v153 = vshrl.u32 %v152, 7
  %v154 = vsub.s32 4, %v153
  %v155 = vrot.slane %v38, %v154
  %v156 = vlaneseq
  %v157 = vshrl.u32 %v156, 7
  %v158 = vsub.s32 6, %v157
  %v159 = vrot.slane %v38, %v158
  %v160 = vlaneseq
  %v161 = vshrl.u32 %v160, 7
  %v162 = vsub.s32 0, %v161
  %v163 = vrot.slane %v39, %v162
  %v164 = vlaneseq
  %v165 = vshrl.u32 %v164, 7
  %v166 = vsub.s32 2, %v165
  %v167 = vrot.slane %v39, %v166
  %v168 = vlaneseq
  %v169 = vshrl.u32 %v168, 7
  %v170 = vsub.s32 4, %v169
  %v171 = vrot.slane %v39, %v170
  %v172 = vlaneseq
  %v173 = vshrl.u32 %v172, 7
  %v174 = vsub.s32 6, %v173
  %v175 = vrot.slane %v39, %v174
  %v208 = vlaneseq
  %v209 = vshrl.u32 %v208, 7
  %v210 = vsub.s32 0, %v209
  %v211 = vrot.slane %v51, %v210
  %v212 = vlaneseq
  %v213 = vshrl.u32 %v212, 7
  %v214 = vsub.s32 0, %v213
  %v215 = vrot.slane %v55, %v214
  %v216 = vlaneseq
  %v217 = vshrl.u32 %v216, 7
  %v218 = vsub.s32 0, %v217
  %v219 = vrot.slane %v59, %v218
  %v220 = vlaneseq
  %v221 = vshrl.u32 %v220, 7
  %v222 = vsub.s32 0, %v221
  %v223 = vrot.slane %v63, %v222
  %v224 = vlaneseq
  %v225 = vshrl.u32 %v224, 7
  %v226 = vsub.s32 0, %v225
  %v227 = vrot.slane %v67, %v226
  %v228 = vlaneseq
  %v229 = vshrl.u32 %v228, 7
  %v230 = vsub.s32 0, %v229
  %v231 = vrot.slane %v71, %v230
  %v232 = vlaneseq
  %v233 = vshrl.u32 %v232, 7
  %v234 = vsub.s32 0, %v233
  %v235 = vrot.slane %v75, %v234
  %v236 = vlaneseq
  %v237 = vshrl.u32 %v236, 7
  %v238 = vsub.s32 0, %v237
  %v239 = vrot.slane %v79, %v238
  %v240 = vlaneseq
  %v241 = vshrl.u32 %v240, 7
  %v242 = vsub.s32 0, %v241
  %v243 = vrot.slane %v83, %v242
  %v244 = vlaneseq
  %v245 = vshrl.u32 %v244, 7
  %v246 = vsub.s32 0, %v245
  %v247 = vrot.slane %v87, %v246
  %v248 = vlaneseq
  %v249 = vshrl.u32 %v248, 7
  %v250 = vsub.s32 0, %v249
  %v251 = vrot.slane %v91, %v250
  %v252 = vlaneseq
  %v253 = vshrl.u32 %v252, 7
  %v254 = vsub.s32 0, %v253
  %v255 = vrot.slane %v95, %v254
  %v256 = vlaneseq
  %v257 = vshrl.u32 %v256, 7
  %v258 = vsub.s32 0, %v257
  %v259 = vrot.slane %v99, %v258
  %v260 = vlaneseq
  %v261 = vshrl.u32 %v260, 7
  %v262 = vsub.s32 0, %v261
  %v263 = vrot.slane %v103, %v262
  %v264 = vlaneseq
  %v265 = vshrl.u32 %v264, 7
  %v266 = vsub.s32 0, %v265
  %v267 = vrot.slane %v107, %v266
  %v268 = vlaneseq
  %v269 = vshrl.u32 %v268, 7
  %v270 = vsub.s32 0, %v269
  %v271 = vrot.slane %v111, %v270
  %v272 = vlaneseq
  %v273 = vshrl.u32 %v272, 7
  %v274 = vsub.s32 0, %v273
  %v275 = vrot.slane %v115, %v274
  %v276 = vlaneseq
  %v277 = vshrl.u32 %v276, 7
  %v278 = vsub.s32 0, %v277
  %v279 = vrot.slane %v119, %v278
  %v280 = vlaneseq
  %v281 = vshrl.u32 %v280, 7
  %v282 = vsub.s32 0, %v281
  %v283 = vrot.slane %v123, %v282
  %v284 = vlaneseq
  %v285 = vshrl.u32 %v284, 7
  %v286 = vsub.s32 0, %v285
  %v287 = vrot.slane %v127, %v286
  %v288 = vlaneseq
  %v289 = vshrl.u32 %v288, 7
  %v290 = vsub.s32 0, %v289
  %v291 = vrot.slane %v131, %v290
  %v292 = vlaneseq
  %v293 = vshrl.u32 %v292, 7
  %v294 = vsub.s32 0, %v293
  %v295 = vrot.slane %v135, %v294
  %v296 = vlaneseq
  %v297 = vshrl.u32 %v296, 7
  %v298 = vsub.s32 0, %v297
  %v299 = vrot.slane %v139, %v298
  %v300 = vlaneseq
  %v301 = vshrl.u32 %v300, 7
  %v302 = vsub.s32 0, %v301
  %v303 = vrot.slane %v143, %v302
  %v304 = vlaneseq
  %v305 = vshrl.u32 %v304, 7
  %v306 = vsub.s32 0, %v305
  %v307 = vrot.slane %v147, %v306
  %v308 = vlaneseq
  %v309 = vshrl.u32 %v308, 7
  %v310 = vsub.s32 0, %v309
  %v311 = vrot.slane %v151, %v310
  %v312 = vlaneseq
  %v313 = vshrl.u32 %v312, 7
  %v314 = vsub.s32 0, %v313
  %v315 = vrot.slane %v155, %v314
  %v316 = vlaneseq
  %v317 = vshrl.u32 %v316, 7
  %v318 = vsub.s32 0, %v317
  %v319 = vrot.slane %v159, %v318
  %v320 = vlaneseq
  %v321 = vshrl.u32 %v320, 7
  %v322 = vsub.s32 0, %v321
  %v323 = vrot.slane %v163, %v322
  %v324 = vlaneseq
  %v325 = vshrl.u32 %v324, 7
  %v326 = vsub.s32 0, %v325
  %v327 = vrot.slane %v167, %v326
  %v328 = vlaneseq
  %v329 = vshrl.u32 %v328, 7
  %v330 = vsub.s32 0, %v329
  %v331 = vrot.slane %v171, %v330
  %v332 = vlaneseq
  %v333 = vshrl.u32 %v332, 7
  %v334 = vsub.s32 0, %v333
  %v335 = vrot.slane %v175, %v334
  %v368 = vcombine.low %v211, %v215
  %v369 = vcombine.low %v219, %v223
  %v371 = vunpack.c.l.s4 1983009808
  %v372 = vunpack.c.0.s8 %v371
  %v373 = vlaneseq
  %v374 = vshrl.u32 %v373, 7
  %v375 = vsub.s32 %v372, %v374
  %v376 = vrot.slane %v368, %v375
  %v378 = vunpack.c.l.s4 1983009808
  %v379 = vunpack.c.0.s8 %v378
  %v380 = vlaneseq
  %v381 = vshrl.u32 %v380, 7
  %v382 = vsub.s32 %v379, %v381
  %v383 = vrot.slane %v369, %v382
  %v384 = vcombine.low %v376, %v383
  %v385 = vcombine.low %v227, %v231
  %v386 = vcombine.low %v235, %v239
  %v388 = vunpack.c.l.s4 1983009808
  %v389 = vunpack.c.0.s8 %v388
  %v390 = vlaneseq
  %v391 = vshrl.u32 %v390, 7
  %v392 = vsub.s32 %v389, %v391
  %v393 = vrot.slane %v385, %v392
  %v395 = vunpack.c.l.s4 1983009808
  %v396 = vunpack.c.0.s8 %v395
  %v397 = vlaneseq
  %v398 = vshrl.u32 %v397, 7
  %v399 = vsub.s32 %v396, %v398
  %v400 = vrot.slane %v386, %v399
  %v401 = vcombine.low %v393, %v400
  %v402 = vcombine.low %v243, %v247
  %v403 = vcombine.low %v251, %v255
  %v405 = vunpack.c.l.s4 1983009808
  %v406 = vunpack.c.0.s8 %v405
  %v407 = vlaneseq
  %v408 = vshrl.u32 %v407, 7
  %v409 = vsub.s32 %v406, %v408
  %v410 = vrot.slane %v402, %v409
  %v412 = vunpack.c.l.s4 1983009808
  %v413 = vunpack.c.0.s8 %v412
  %v414 = vlaneseq
  %v415 = vshrl.u32 %v414, 7
  %v416 = vsub.s32 %v413, %v415
  %v417 = vrot.slane %v403, %v416
  %v418 = vcombine.low %v410, %v417
  %v419 = vcombine.low %v259, %v263
  %v420 = vcombine.low %v267, %v271
  %v422 = vunpack.c.l.s4 1983009808
  %v423 = vunpack.c.0.s8 %v422
  %v424 = vlaneseq
  %v425 = vshrl.u32 %v424, 7
  %v426 = vsub.s32 %v423, %v425
  %v427 = vrot.slane %v419, %v426
  %v429 = vunpack.c.l.s4 1983009808
  %v430 = vunpack.c.0.s8 %v429
  %v431 = vlaneseq
  %v432 = vshrl.u32 %v431, 7
  %v433 = vsub.s32 %v430, %v432
  %v434 = vrot.slane %v420, %v433
  %v435 = vcombine.low %v427, %v434
  %v436 = vcombine.low %v275, %v279
  %v437 = vcombine.low %v283, %v287
  %v439 = vunpack.c.l.s4 1983009808
  %v440 = vunpack.c.0.s8 %v439
  %v441 = vlaneseq
  %v442 = vshrl.u32 %v441, 7
  %v443 = vsub.s32 %v440, %v442
  %v444 = vrot.slane %v436, %v443
  %v446 = vunpack.c.l.s4 1983009808
  %v447 = vunpack.c.0.s8 %v446
  %v448 = vlaneseq
  %v449 = vshrl.u32 %v448, 7
  %v450 = vsub.s32 %v447, %v449
  %v451 = vrot.slane %v437, %v450
  %v452 = vcombine.low %v444, %v451
  %v453 = vcombine.low %v291, %v295
  %v454 = vcombine.low %v299, %v303
  %v456 = vunpack.c.l.s4 1983009808
  %v457 = vunpack.c.0.s8 %v456
  %v458 = vlaneseq
  %v459 = vshrl.u32 %v458, 7
  %v460 = vsub.s32 %v457, %v459
  %v461 = vrot.slane %v453, %v460
  %v463 = vunpack.c.l.s4 1983009808
  %v464 = vunpack.c.0.s8 %v463
  %v465 = vlaneseq
  %v466 = vshrl.u32 %v465, 7
  %v467 = vsub.s32 %v464, %v466
  %v468 = vrot.slane %v454, %v467
  %v469 = vcombine.low %v461, %v468
  %v470 = vcombine.low %v307, %v311
  %v471 = vcombine.low %v315, %v319
  %v473 = vunpack.c.l.s4 1983009808
  %v474 = vunpack.c.0.s8 %v473
  %v475 = vlaneseq
  %v476 = vshrl.u32 %v475, 7
  %v477 = vsub.s32 %v474, %v476
  %v478 = vrot.slane %v470, %v477
  %v480 = vunpack.c.l.s4 1983009808
  %v481 = vunpack.c.0.s8 %v480
  %v482 = vlaneseq
  %v483 = vshrl.u32 %v482, 7
  %v484 = vsub.s32 %v481, %v483
  %v485 = vrot.slane %v471, %v484
  %v486 = vcombine.low %v478, %v485
  %v487 = vcombine.low %v323, %v327
  %v488 = vcombine.low %v331, %v335
  %v490 = vunpack.c.l.s4 1983009808
  %v491 = vunpack.c.0.s8 %v490
  %v492 = vlaneseq
  %v493 = vshrl.u32 %v492, 7
  %v494 = vsub.s32 %v491, %v493
  %v495 = vrot.slane %v487, %v494
  %v497 = vunpack.c.l.s4 1983009808
  %v498 = vunpack.c.0.s8 %v497
  %v499 = vlaneseq
  %v500 = vshrl.u32 %v499, 7
  %v501 = vsub.s32 %v498, %v500
  %v502 = vrot.slane %v488, %v501
  %v503 = vcombine.low %v495, %v502
  %v512 = vmul.f32 %v20, %v384
  %v513 = vmul.f32 %v21, %v401
  %v514 = vmul.f32 %v22, %v418
  %v515 = vmul.f32 %v23, %v435
  %v516 = vmul.f32 %v24, %v452
  %v517 = vmul.f32 %v25, %v469
  %v518 = vmul.f32 %v26, %v486
  %v519 = vmul.f32 %v27, %v503
  %v528 = vcombine.high %v512, %v512
  %v530 = vunpack.c.l.s4 1983009808
  %v531 = vunpack.c.0.s8 %v530
  %v532 = vlaneseq
  %v533 = vshrl.u32 %v532, 7
  %v534 = vsub.s32 %v531, %v533
  %v535 = vrot.slane %v512, %v534
  %v537 = vunpack.c.l.s4 1983009808
  %v538 = vunpack.c.0.s8 %v537
  %v539 = vlaneseq
  %v540 = vshrl.u32 %v539, 7
  %v541 = vsub.s32 %v538, %v540
  %v542 = vrot.slane %v528, %v541
  %v543 = vcombine.high %v535, %v535
  %v544 = vcombine.high %v542, %v542
  %v545 = vcombine.high %v513, %v513
  %v547 = vunpack.c.l.s4 1983009808
  %v548 = vunpack.c.0.s8 %v547
  %v549 = vlaneseq
  %v550 = vshrl.u32 %v549, 7
  %v551 = vsub.s32 %v548, %v550
  %v552 = vrot.slane %v513, %v551
  %v554 = vunpack.c.l.s4 1983009808
  %v555 = vunpack.c.0.s8 %v554
  %v556 = vlaneseq
  %v557 = vshrl.u32 %v556, 7
  %v558 = vsub.s32 %v555, %v557
  %v559 = vrot.slane %v545, %v558
  %v560 = vcombine.high %v552, %v552
  %v561 = vcombine.high %v559, %v559
  %v562 = vcombine.high %v514, %v514
  %v564 = vunpack.c.l.s4 1983009808
  %v565 = vunpack.c.0.s8 %v564
  %v566 = vlaneseq
  %v567 = vshrl.u32 %v566, 7
  %v568 = vsub.s32 %v565, %v567
  %v569 = vrot.slane %v514, %v568
  %v571 = vunpack.c.l.s4 1983009808
  %v572 = vunpack.c.0.s8 %v571
  %v573 = vlaneseq
  %v574 = vshrl.u32 %v573, 7
  %v575 = vsub.s32 %v572, %v574
  %v576 = vrot.slane %v562, %v575
  %v577 = vcombine.high %v569, %v569
  %v578 = vcombine.high %v576, %v576
  %v579 = vcombine.high %v515, %v515
  %v581 = vunpack.c.l.s4 1983009808
  %v582 = vunpack.c.0.s8 %v581
  %v583 = vlaneseq
  %v584 = vshrl.u32 %v583, 7
  %v585 = vsub.s32 %v582, %v584
  %v586 = vrot.slane %v515, %v585
  %v588 = vunpack.c.l.s4 1983009808
  %v589 = vunpack.c.0.s8 %v588
  %v590 = vlaneseq
  %v591 = vshrl.u32 %v590, 7
  %v592 = vsub.s32 %v589, %v591
  %v593 = vrot.slane %v579, %v592
  %v594 = vcombine.high %v586, %v586
  %v595 = vcombine.high %v593, %v593
  %v596 = vcombine.high %v516, %v516
  %v598 = vunpack.c.l.s4 1983009808
  %v599 = vunpack.c.0.s8 %v598
  %v600 = vlaneseq
  %v601 = vshrl.u32 %v600, 7
  %v602 = vsub.s32 %v599, %v601
  %v603 = vrot.slane %v516, %v602
  %v605 = vunpack.c.l.s4 1983009808
  %v606 = vunpack.c.0.s8 %v605
  %v607 = vlaneseq
  %v608 = vshrl.u32 %v607, 7
  %v609 = vsub.s32 %v606, %v608
  %v610 = vrot.slane %v596, %v609
  %v611 = vcombine.high %v603, %v603
  %v612 = vcombine.high %v610, %v610
  %v613 = vcombine.high %v517, %v517
  %v615 = vunpack.c.l.s4 1983009808
  %v616 = vunpack.c.0.s8 %v615
  %v617 = vlaneseq
  %v618 = vshrl.u32 %v617, 7
  %v619 = vsub.s32 %v616, %v618
  %v620 = vrot.slane %v517, %v619
  %v622 = vunpack.c.l.s4 1983009808
  %v623 = vunpack.c.0.s8 %v622
  %v624 = vlaneseq
  %v625 = vshrl.u32 %v624, 7
  %v626 = vsub.s32 %v623, %v625
  %v627 = vrot.slane %v613, %v626
  %v628 = vcombine.high %v620, %v620
  %v629 = vcombine.high %v627, %v627
  %v630 = vcombine.high %v518, %v518
  %v632 = vunpack.c.l.s4 1983009808
  %v633 = vunpack.c.0.s8 %v632
  %v634 = vlaneseq
  %v635 = vshrl.u32 %v634, 7
  %v636 = vsub.s32 %v633, %v635
  %v637 = vrot.slane %v518, %v636
  %v639 = vunpack.c.l.s4 1983009808
  %v640 = vunpack.c.0.s8 %v639
  %v641 = vlaneseq
  %v642 = vshrl.u32 %v641, 7
  %v643 = vsub.s32 %v640, %v642
  %v644 = vrot.slane %v630, %v643
  %v645 = vcombine.high %v637, %v637
  %v646 = vcombine.high %v644, %v644
  %v647 = vcombine.high %v519, %v519
  %v649 = vunpack.c.l.s4 1983009808
  %v650 = vunpack.c.0.s8 %v649
  %v651 = vlaneseq
  %v652 = vshrl.u32 %v651, 7
  %v653 = vsub.s32 %v650, %v652
  %v654 = vrot.slane %v519, %v653
  %v656 = vunpack.c.l.s4 1983009808
  %v657 = vunpack.c.0.s8 %v656
  %v658 = vlaneseq
  %v659 = vshrl.u32 %v658, 7
  %v660 = vsub.s32 %v657, %v659
  %v661 = vrot.slane %v647, %v660
  %v662 = vcombine.high %v654, %v654
  %v663 = vcombine.high %v661, %v661
  %vm696 = vcmask 1041408
  %v697 = vsel %vm696, %v535, 0.0
  %v698 = vsel %vm696, %v543, 0.0
  %v699 = vadd.f32 %v697, %v698
  %v700 = vsel %vm696, %v542, 0.0
  %v701 = vadd.f32 %v699, %v700
  %v702 = vsel %vm696, %v544, 0.0
  %v703 = vadd.f32 %v701, %v702
  %v704 = vsel %vm696, %v552, 0.0
  %v705 = vadd.f32 %v703, %v704
  %v706 = vsel %vm696, %v560, 0.0
  %v707 = vadd.f32 %v705, %v706
  %v708 = vsel %vm696, %v559, 0.0
  %v709 = vadd.f32 %v707, %v708
  %v710 = vsel %vm696, %v561, 0.0
  %v711 = vadd.f32 %v709, %v710
  %v712 = vsel %vm696, %v569, 0.0
  %v713 = vadd.f32 %v711, %v712
  %v714 = vsel %vm696, %v577, 0.0
  %v715 = vadd.f32 %v713, %v714
  %v716 = vsel %vm696, %v576, 0.0
  %v717 = vadd.f32 %v715, %v716
  %v718 = vsel %vm696, %v578, 0.0
  %v719 = vadd.f32 %v717, %v718
  %v720 = vsel %vm696, %v586, 0.0
  %v721 = vadd.f32 %v719, %v720
  %v722 = vsel %vm696, %v594, 0.0
  %v723 = vadd.f32 %v721, %v722
  %v724 = vsel %vm696, %v593, 0.0
  %v725 = vadd.f32 %v723, %v724
  %v726 = vsel %vm696, %v595, 0.0
  %v727 = vadd.f32 %v725, %v726
  %v728 = vsel %vm696, %v603, 0.0
  %v729 = vadd.f32 %v727, %v728
  %v730 = vsel %vm696, %v611, 0.0
  %v731 = vadd.f32 %v729, %v730
  %v732 = vsel %vm696, %v610, 0.0
  %v733 = vadd.f32 %v731, %v732
  %v734 = vsel %vm696, %v612, 0.0
  %v735 = vadd.f32 %v733, %v734
  %v736 = vsel %vm696, %v620, 0.0
  %v737 = vadd.f32 %v735, %v736
  %v738 = vsel %vm696, %v628, 0.0
  %v739 = vadd.f32 %v737, %v738
  %v740 = vsel %vm696, %v627, 0.0
  %v741 = vadd.f32 %v739, %v740
  %v742 = vsel %vm696, %v629, 0.0
  %v743 = vadd.f32 %v741, %v742
  %v744 = vsel %vm696, %v637, 0.0
  %v745 = vadd.f32 %v743, %v744
  %v746 = vsel %vm696, %v645, 0.0
  %v747 = vadd.f32 %v745, %v746
  %v748 = vsel %vm696, %v644, 0.0
  %v749 = vadd.f32 %v747, %v748
  %v750 = vsel %vm696, %v646, 0.0
  %v751 = vadd.f32 %v749, %v750
  %v752 = vsel %vm696, %v654, 0.0
  %v753 = vadd.f32 %v751, %v752
  %v754 = vsel %vm696, %v662, 0.0
  %v755 = vadd.f32 %v753, %v754
  %v756 = vsel %vm696, %v661, 0.0
  %v757 = vadd.f32 %v755, %v756
  %v758 = vsel %vm696, %v663, 0.0
  %v759 = vadd.f32 %v757, %v758
  %760 = vadd.xlane.f32.xlu0 %v759
  %v761 = vpop.xlane.xlu0 %760
  %v762 = vld [vmem:[#allocation2] sm:$0x1]
  %v764 = vlaneseq
  %v765 = vshrl.u32 %v764, 7
  %v766 = vsub.s32 0, %v765
  %v767 = vrot.slane %v762, %v766
  %v769 = vadd.f32 %v761, %v767
  %v770 = vxor.u32 %v769, 2147483648
  %v771 = vmul.f32 %v770, 1.442695
  %v772 = vpow.pop %v771
  %v773 = vadd.f32 %v772, 1.0
  %v774 = vrcp.pop %v773
  %v775 = vmul.f32 1.0, %v774
  %777 = vset.pattern.permute.xlu0 0
  %778 = vperm.xlu0 %777, %v775
  %v779 = vpop.permute.xlu0 %778
  %781 = vst [vmem:[%s3] sm:$0x3] %v779
  // Predicated region
  $region14: #{discriminator_forward.7} parent=0 // pred_check
    _
  $region15: #{discriminator_forward.7} parent=0 // pred_check_branch
    %783 = sbr.rel (0) target = $region17
  $region16: #{discriminator_forward.7} parent=0 // pred_region
    _
  $region17: #{discriminator_forward.7} parent=0 // pred_fallthru
    _
  // Predicated region
  $region18: #{discriminator_forward.7} parent=0 // pred_check
    _
  $region19: #{discriminator_forward.7} parent=0 // pred_check_branch
    %785 = sbr.rel (0) target = $region21
  $region20: #{discriminator_forward.7} parent=0 // pred_region
    _
  $region21: #{discriminator_forward.7} parent=0 // pred_fallthru
    _

// kernel: discriminator_forward.6
$region0: #{discriminator_forward.6}
  #allocation0 [shape = 'u32[]', space=smem, size = 0x4, offset = 0x4, fixed_abs, tag = 'smem constant byte address 0x4 - core index']
  #allocation1 [shape = 'u32[144,128]{1,0:T(1,128)}', space=vmem, size = 0x12000, scoped, tag = 'internal scratch']
  #allocation2 [shape = 'f32[16,256]{1,0:T(8,128)}', space=vmem, size = 0x4000, scoped, tag = 'scratch operand']
  %s0 = inlined_call_operand.vmem [shape: bf16[2,2,20,384], index: 0, kind: input, shape index: {}]
  %s1 = inlined_call_operand.vmem [shape: bf16[3,384,256], index: 1, kind: input, shape index: {}]
  %s2 = inlined_call_operand.vmem [shape: f32[1,256], index: 2, kind: input, shape index: {}]
  %s3 = inlined_call_operand.vmem [shape: bf16[2,16,256], index: 3, kind: output, shape index: {}]
  %s4 = sld [smem:[#allocation0]]
  $region45: #{discriminator_forward.6} parent=0
    _
  %s6 = ssub.s32 1, %s4
  %s7 = scalar_select 0, %s6, %s4
  loop: start=0, step=1, limit=4
  $region2: #{discriminator_forward.6} parent=0 // loop_pre_header
    _
  $region3: #{discriminator_forward.6} parent=0 // loop_header
    %s9 = sphi 0, %s13
    %p10 = scmp.ge.s32.totalorder %s9, 4
    %s19 = sphi 0, %s21
    %s22 = sphi 0, %s19
    %s23 = sphi 0, %s22
    %s39 = sphi 0, %s23
    %s43 = sphi 0, %s43
    %s45 = sphi 0, %s43
    %s46 = sphi 0, %s45
    %s60 = sphi 0, %s46
    %s64 = sphi 0, %s64
    %s66 = sphi 0, %s64
    %s67 = sphi 0, %s66
    %s81 = sphi 0, %s67
    %s87 = sphi 0, %s89
    %s90 = sphi 0, %s87
    %s91 = sphi 0, %s90
    %s107 = sphi 0, %s91
  $region4: #{discriminator_forward.6} parent=0 // loop_header_branch
    %12 = sbr.rel (%p10) target = $region8
  $region5: #{discriminator_forward.6} parent=0 // loop_body
    %s14 = ssub.s32 %s9, 1
    %s15 = ssub.s32 %s9, 2
    %s16 = sadd.s32 %s9, 1
    %s17 = ssub.s32 %s9, %s16
    %p18 = scmp.eq.s32.totalorder %s17, 0
    %s20 = sadd.s32 %s19, 1
    %s21 = scalar_select %p18, %s19, %s20
    %p24 = pneg %p18
    %p25 = scmp.eq.s32.totalorder %s9, 1
    %p26 = por %p24, %p25
    %p27 = scmp.ne.s32.totalorder %s19, %s22
    %p28 = scmp.eq.s32.totalorder %s9, 0
    %p29 = por %p27, %p28
    %p30 = scmp.ne.s32.totalorder %s19, %s22
    %p31 = scmp.eq.s32.totalorder %s14, 1
    %p32 = por %p30, %p31
    %p33 = scmp.ne.s32.totalorder %s22, %s23
    %p34 = scmp.eq.s32.totalorder %s14, 0
    %p35 = por %p33, %p34
    %p36 = scmp.ne.s32.totalorder %s22, %s23
    %p37 = scmp.eq.s32.totalorder %s15, 1
    %p38 = por %p36, %p37
    %p40 = scmp.ne.s32.totalorder %s23, %s39
    %p41 = scmp.eq.s32.totalorder %s15, 0
    %p42 = por %p40, %p41
    %s44 = sadd.s32 %s43, 1
    %p47 = scmp.eq.s32.totalorder %s9, 1
    %p48 = scmp.ne.s32.totalorder %s43, %s45
    %p49 = scmp.eq.s32.totalorder %s9, 0
    %p50 = por %p48, %p49
    %p51 = scmp.ne.s32.totalorder %s43, %s45
    %p52 = scmp.eq.s32.totalorder %s14, 1
    %p53 = por %p51, %p52
    %p54 = scmp.ne.s32.totalorder %s45, %s46
    %p55 = scmp.eq.s32.totalorder %s14, 0
    %p56 = por %p54, %p55
    %p57 = scmp.ne.s32.totalorder %s45, %s46
    %p58 = scmp.eq.s32.totalorder %s15, 1
    %p59 = por %p57, %p58
    %p61 = scmp.ne.s32.totalorder %s46, %s60
    %p62 = scmp.eq.s32.totalorder %s15, 0
    %p63 = por %p61, %p62
    %s65 = sadd.s32 %s64, 1
    %p68 = scmp.eq.s32.totalorder %s9, 1
    %p69 = scmp.ne.s32.totalorder %s64, %s66
    %p70 = scmp.eq.s32.totalorder %s9, 0
    %p71 = por %p69, %p70
    %p72 = scmp.ne.s32.totalorder %s64, %s66
    %p73 = scmp.eq.s32.totalorder %s14, 1
    %p74 = por %p72, %p73
    %p75 = scmp.ne.s32.totalorder %s66, %s67
    %p76 = scmp.eq.s32.totalorder %s14, 0
    %p77 = por %p75, %p76
    %p78 = scmp.ne.s32.totalorder %s66, %s67
    %p79 = scmp.eq.s32.totalorder %s15, 1
    %p80 = por %p78, %p79
    %p82 = scmp.ne.s32.totalorder %s67, %s81
    %p83 = scmp.eq.s32.totalorder %s15, 0
    %p84 = por %p82, %p83
    %s85 = ssub.s32 %s9, %s16
    %p86 = scmp.eq.s32.totalorder %s85, 0
    %s88 = sadd.s32 %s87, 1
    %s89 = scalar_select %p86, %s87, %s88
    %p92 = pneg %p86
    %p93 = scmp.eq.s32.totalorder %s9, 1
    %p94 = por %p92, %p93
    %p95 = scmp.ne.s32.totalorder %s87, %s90
    %p96 = scmp.eq.s32.totalorder %s9, 0
    %p97 = por %p95, %p96
    %p98 = scmp.ne.s32.totalorder %s87, %s90
    %p99 = scmp.eq.s32.totalorder %s14, 1
    %p100 = por %p98, %p99
    %p101 = scmp.ne.s32.totalorder %s90, %s91
    %p102 = scmp.eq.s32.totalorder %s14, 0
    %p103 = por %p101, %p102
    %p104 = scmp.ne.s32.totalorder %s90, %s91
    %p105 = scmp.eq.s32.totalorder %s15, 1
    %p106 = por %p104, %p105
    %p108 = scmp.ne.s32.totalorder %s91, %s107
    %p109 = scmp.eq.s32.totalorder %s15, 0
    %p110 = por %p108, %p109
    %p111 = scmp.le.s32.totalorder 1, %s9
    %p112 = scmp.lt.s32.totalorder %s9, 3
    %p113 = pnand %p111, %p112
    %p114 = pneg %p113
    // Predicated region
    $region9: #{discriminator_forward.6} parent=5 // pred_check
      _
    $region10: #{discriminator_forward.6} parent=5 // pred_check_branch
      %116 = sbr.rel (%p113) target = $region12
    $region11: #{discriminator_forward.6} parent=5 // pred_region
      %s117 = ssub.s32 %s9, 1
      // Predicated region
      $region13: #{discriminator_forward.6} parent=11 // pred_check
        %p118 = pneg %p56
      $region14: #{discriminator_forward.6} parent=11 // pred_check_branch
        %120 = sbr.rel (%p118) target = $region16
      $region15: #{discriminator_forward.6} parent=11 // pred_region
        _
      $region16: #{discriminator_forward.6} parent=11 // pred_fallthru
        _
      // Predicated region
      $region17: #{discriminator_forward.6} parent=11 // pred_check
        %p121 = pneg %p77
      $region18: #{discriminator_forward.6} parent=11 // pred_check_branch
        %123 = sbr.rel (%p121) target = $region20
      $region19: #{discriminator_forward.6} parent=11 // pred_region
        _
      $region20: #{discriminator_forward.6} parent=11 // pred_fallthru
        _
    $region12: #{discriminator_forward.6} parent=5 // pred_fallthru
      _
    %p124 = scmp.lt.s32.totalorder %s9, 2
    // Predicated region
    $region21: #{discriminator_forward.6} parent=5 // pred_check
      %p125 = pneg %p124
    $region22: #{discriminator_forward.6} parent=5 // pred_check_branch
      %127 = sbr.rel (%p125) target = $region24
    $region23: #{discriminator_forward.6} parent=5 // pred_region
      // Predicated region
      $region25: #{discriminator_forward.6} parent=23 // pred_check
        %p128 = pneg %p29
      $region26: #{discriminator_forward.6} parent=23 // pred_check_branch
        %130 = sbr.rel (%p128) target = $region28
      $region27: #{discriminator_forward.6} parent=23 // pred_region
        %p131 = scmp.lt.s32.totalorder %s9, 1
        %s132 = scalar_select %p131, %s9, 1
        %s133 = smul.addr %s132, 18
        %s134 = smul.addr %s133, 4
        %s135 = scalar_lea.vmem %s0, %s134
      $region28: #{discriminator_forward.6} parent=23 // pred_fallthru
        _
    $region24: #{discriminator_forward.6} parent=5 // pred_fallthru
      _
    %p136 = scmp.le.s32.totalorder 1, %s9
    %p137 = scmp.lt.s32.totalorder %s9, 3
    %p138 = pnand %p136, %p137
    %p139 = pneg %p138
    // Predicated region
    $region29: #{discriminator_forward.6} parent=5 // pred_check
      _
    $region30: #{discriminator_forward.6} parent=5 // pred_check_branch
      %141 = sbr.rel (%p138) target = $region32
    $region31: #{discriminator_forward.6} parent=5 // pred_region
      %s142 = ssub.s32 %s9, 1
      %p143 = scmp.lt.s32.totalorder %s14, 1
      %s144 = scalar_select %p143, %s14, 1
      %s145 = smul.addr %s144, 18
      %s146 = smul.addr %s145, 4
      %s147 = scalar_lea.vmem %s0, %s146
      %p148 = pneg %p35
      %p149 = pneg %p32
      %p150 = pneg %p56
      %p151 = pneg %p53
      %p152 = pneg %p77
      %p153 = pneg %p74
      %p154 = pneg %p103
      %p155 = pneg %p100
      %p156 = scmp.lt.s32.totalorder %s14, 1
      %s157 = scalar_select %p156, %s14, 1
      %s158 = smul.addr %s157, 4
      %s159 = smul.addr %s158, 4
      %s160 = scalar_lea.vmem %s3, %s159
      %p161 = scmp.lt.s32.totalorder %s14, 1
      %s162 = scalar_select %p161, %s14, 1
      %s163 = smul.addr %s162, 18
      %s164 = smul.addr %s163, 4
      %s165 = scalar_lea.vmem %s0, %s164
      %p166 = scmp.lt.s32.totalorder %s14, 1
      %s167 = scalar_select %p166, %s14, 1
      %s168 = smul.addr %s167, 4
      %s169 = smul.addr %s168, 4
      %s170 = scalar_lea.vmem %s3, %s169
      %v172 = vld [vmem:[%s165] sm:$0xff]
      %v173 = vld [vmem:[%s165 + $0x8] sm:$0xf]
      %v174 = vld [vmem:[%s165 + $0xc] sm:$0xff]
      %v175 = vld [vmem:[%s165 + $0x14] sm:$0xf]
      %v176 = vld [vmem:[%s1] sm:$0xff]
      %v177 = vld [vmem:[%s1 + $0x8] sm:$0xff]
      %v178 = vld [vmem:[%s1 + $0x10] sm:$0xff]
      %v179 = vld [vmem:[%s1 + $0x18] sm:$0xff]
      %v180 = vld [vmem:[%s1 + $0x20] sm:$0xff]
      %v181 = vld [vmem:[%s1 + $0x28] sm:$0xff]
      %v182 = vld [vmem:[%s1 + $0x30] sm:$0xff]
      %v183 = vld [vmem:[%s1 + $0x38] sm:$0xff]
      %v184 = vld [vmem:[%s1 + $0x40] sm:$0xff]
      %v185 = vld [vmem:[%s1 + $0x48] sm:$0xff]
      %v186 = vld [vmem:[%s1 + $0x50] sm:$0xff]
      %v187 = vld [vmem:[%s1 + $0x58] sm:$0xff]
      %v188 = vld [vmem:[%s1 + $0x60] sm:$0xff]
      %v189 = vld [vmem:[%s1 + $0x68] sm:$0xff]
      %v190 = vld [vmem:[%s1 + $0x70] sm:$0xff]
      %v191 = vld [vmem:[%s1 + $0x78] sm:$0xff]
      %v192 = vld [vmem:[%s1 + $0x80] sm:$0xff]
      %v193 = vld [vmem:[%s1 + $0x88] sm:$0xff]
      %v194 = vld [vmem:[%s1 + $0x90] sm:$0xff]
      %v195 = vld [vmem:[%s1 + $0x98] sm:$0xff]
      %v196 = vld [vmem:[%s1 + $0xa0] sm:$0xff]
      %v197 = vld [vmem:[%s1 + $0xa8] sm:$0xff]
      %v198 = vld [vmem:[%s1 + $0xb0] sm:$0xff]
      %v199 = vld [vmem:[%s1 + $0xb8] sm:$0xff]
      %v200 = vld [vmem:[%s1 + $0xc0] sm:$0xff]
      %v201 = vld [vmem:[%s1 + $0xc8] sm:$0xff]
      %v202 = vld [vmem:[%s1 + $0xd0] sm:$0xff]
      %v203 = vld [vmem:[%s1 + $0xd8] sm:$0xff]
      %v204 = vld [vmem:[%s1 + $0xe0] sm:$0xff]
      %v205 = vld [vmem:[%s1 + $0xe8] sm:$0xff]
      %v206 = vld [vmem:[%s1 + $0xf0] sm:$0xff]
      %v207 = vld [vmem:[%s1 + $0xf8] sm:$0xff]
      %v208 = vld [vmem:[%s1 + $0x100] sm:$0xff]
      %v209 = vld [vmem:[%s1 + $0x108] sm:$0xff]
      %v210 = vld [vmem:[%s1 + $0x110] sm:$0xff]
      %v211 = vld [vmem:[%s1 + $0x118] sm:$0xff]
      %v212 = vld [vmem:[%s1 + $0x120] sm:$0xff]
      %v213 = vld [vmem:[%s1 + $0x128] sm:$0xff]
      %v214 = vld [vmem:[%s1 + $0x130] sm:$0xff]
      %v215 = vld [vmem:[%s1 + $0x138] sm:$0xff]
      %v216 = vld [vmem:[%s1 + $0x140] sm:$0xff]
      %v217 = vld [vmem:[%s1 + $0x148] sm:$0xff]
      %v218 = vld [vmem:[%s1 + $0x150] sm:$0xff]
      %v219 = vld [vmem:[%s1 + $0x158] sm:$0xff]
      %v220 = vld [vmem:[%s1 + $0x160] sm:$0xff]
      %v221 = vld [vmem:[%s1 + $0x168] sm:$0xff]
      %v222 = vld [vmem:[%s1 + $0x170] sm:$0xff]
      %v223 = vld [vmem:[%s1 + $0x178] sm:$0xff]
      %v228 = vunpack.c.l.b16 %v172
      %v229 = vunpack.c.h.b16 %v172
      %v230 = vunpack.c.l.b16 %v173
      %v231 = vunpack.c.l.b16 %v174
      %v232 = vunpack.c.h.b16 %v174
      %v233 = vunpack.c.l.b16 %v175
      %v234 = vpack.c.b16 %v231, %v228
      %v235 = vpack.c.b16 %v232, %v229
      %v236 = vpack.c.b16 %v233, %v230
      %v288 = vunpack.c.l.b16 %v176
      %v289 = vunpack.c.h.b16 %v176
      %v290 = vunpack.c.l.b16 %v177
      %v291 = vunpack.c.h.b16 %v177
      %v292 = vunpack.c.l.b16 %v178
      %v293 = vunpack.c.h.b16 %v178
      %v294 = vunpack.c.l.b16 %v179
      %v295 = vunpack.c.h.b16 %v179
      %v296 = vunpack.c.l.b16 %v180
      %v297 = vunpack.c.h.b16 %v180
      %v298 = vunpack.c.l.b16 %v181
      %v299 = vunpack.c.h.b16 %v181
      %v300 = vunpack.c.l.b16 %v182
      %v301 = vunpack.c.h.b16 %v182
      %v302 = vunpack.c.l.b16 %v183
      %v303 = vunpack.c.h.b16 %v183
      %v304 = vunpack.c.l.b16 %v184
      %v305 = vunpack.c.h.b16 %v184
      %v306 = vunpack.c.l.b16 %v185
      %v307 = vunpack.c.h.b16 %v185
      %v308 = vunpack.c.l.b16 %v186
      %v309 = vunpack.c.h.b16 %v186
      %v310 = vunpack.c.l.b16 %v187
      %v311 = vunpack.c.h.b16 %v187
      %v312 = vunpack.c.l.b16 %v188
      %v313 = vunpack.c.h.b16 %v188
      %v314 = vunpack.c.l.b16 %v189
      %v315 = vunpack.c.h.b16 %v189
      %v316 = vunpack.c.l.b16 %v190
      %v317 = vunpack.c.h.b16 %v190
      %v318 = vunpack.c.l.b16 %v191
      %v319 = vunpack.c.h.b16 %v191
      %v320 = vunpack.c.l.b16 %v192
      %v321 = vunpack.c.h.b16 %v192
      %v322 = vunpack.c.l.b16 %v193
      %v323 = vunpack.c.h.b16 %v193
      %v324 = vunpack.c.l.b16 %v194
      %v325 = vunpack.c.h.b16 %v194
      %v326 = vunpack.c.l.b16 %v195
      %v327 = vunpack.c.h.b16 %v195
      %v328 = vunpack.c.l.b16 %v196
      %v329 = vunpack.c.h.b16 %v196
      %v330 = vunpack.c.l.b16 %v197
      %v331 = vunpack.c.h.b16 %v197
      %v332 = vunpack.c.l.b16 %v198
      %v333 = vunpack.c.h.b16 %v198
      %v334 = vunpack.c.l.b16 %v199
      %v335 = vunpack.c.h.b16 %v199
      %v336 = vunpack.c.l.b16 %v200
      %v337 = vunpack.c.h.b16 %v200
      %v338 = vunpack.c.l.b16 %v201
      %v339 = vunpack.c.h.b16 %v201
      %v340 = vunpack.c.l.b16 %v202
      %v341 = vunpack.c.h.b16 %v202
      %v342 = vunpack.c.l.b16 %v203
      %v343 = vunpack.c.h.b16 %v203
      %v344 = vunpack.c.l.b16 %v204
      %v345 = vunpack.c.h.b16 %v204
      %v346 = vunpack.c.l.b16 %v205
      %v347 = vunpack.c.h.b16 %v205
      %v348 = vunpack.c.l.b16 %v206
      %v349 = vunpack.c.h.b16 %v206
      %v350 = vunpack.c.l.b16 %v207
      %v351 = vunpack.c.h.b16 %v207
      %v352 = vunpack.c.l.b16 %v208
      %v353 = vunpack.c.h.b16 %v208
      %v354 = vunpack.c.l.b16 %v209
      %v355 = vunpack.c.h.b16 %v209
      %v356 = vunpack.c.l.b16 %v210
      %v357 = vunpack.c.h.b16 %v210
      %v358 = vunpack.c.l.b16 %v211
      %v359 = vunpack.c.h.b16 %v211
      %v360 = vunpack.c.l.b16 %v212
      %v361 = vunpack.c.h.b16 %v212
      %v362 = vunpack.c.l.b16 %v213
      %v363 = vunpack.c.h.b16 %v213
      %v364 = vunpack.c.l.b16 %v214
      %v365 = vunpack.c.h.b16 %v214
      %v366 = vunpack.c.l.b16 %v215
      %v367 = vunpack.c.h.b16 %v215
      %v368 = vunpack.c.l.b16 %v216
      %v369 = vunpack.c.h.b16 %v216
      %v370 = vunpack.c.l.b16 %v217
      %v371 = vunpack.c.h.b16 %v217
      %v372 = vunpack.c.l.b16 %v218
      %v373 = vunpack.c.h.b16 %v218
      %v374 = vunpack.c.l.b16 %v219
      %v375 = vunpack.c.h.b16 %v219
      %v376 = vunpack.c.l.b16 %v220
      %v377 = vunpack.c.h.b16 %v220
      %v378 = vunpack.c.l.b16 %v221
      %v379 = vunpack.c.h.b16 %v221
      %v380 = vunpack.c.l.b16 %v222
      %v381 = vunpack.c.h.b16 %v222
      %v382 = vunpack.c.l.b16 %v223
      %v383 = vunpack.c.h.b16 %v223
      %v384 = vpack.c.b16 %v290, %v288
      %v385 = vpack.c.b16 %v291, %v289
      %v386 = vpack.c.b16 %v294, %v292
      %v387 = vpack.c.b16 %v295, %v293
      %v388 = vpack.c.b16 %v298, %v296
      %v389 = vpack.c.b16 %v299, %v297
      %v390 = vpack.c.b16 %v302, %v300
      %v391 = vpack.c.b16 %v303, %v301
      %v392 = vpack.c.b16 %v306, %v304
      %v393 = vpack.c.b16 %v307, %v305
      %v394 = vpack.c.b16 %v310, %v308
      %v395 = vpack.c.b16 %v311, %v309
      %v396 = vpack.c.b16 %v314, %v312
      %v397 = vpack.c.b16 %v315, %v313
      %v398 = vpack.c.b16 %v318, %v316
      %v399 = vpack.c.b16 %v319, %v317
      %v400 = vpack.c.b16 %v322, %v320
      %v401 = vpack.c.b16 %v323, %v321
      %v402 = vpack.c.b16 %v326, %v324
      %v403 = vpack.c.b16 %v327, %v325
      %v404 = vpack.c.b16 %v330, %v328
      %v405 = vpack.c.b16 %v331, %v329
      %v406 = vpack.c.b16 %v334, %v332
      %v407 = vpack.c.b16 %v335, %v333
      %v408 = vpack.c.b16 %v338, %v336
      %v409 = vpack.c.b16 %v339, %v337
      %v410 = vpack.c.b16 %v342, %v340
      %v411 = vpack.c.b16 %v343, %v341
      %v412 = vpack.c.b16 %v346, %v344
      %v413 = vpack.c.b16 %v347, %v345
      %v414 = vpack.c.b16 %v350, %v348
      %v415 = vpack.c.b16 %v351, %v349
      %v416 = vpack.c.b16 %v354, %v352
      %v417 = vpack.c.b16 %v355, %v353
      %v418 = vpack.c.b16 %v358, %v356
      %v419 = vpack.c.b16 %v359, %v357
      %v420 = vpack.c.b16 %v362, %v360
      %v421 = vpack.c.b16 %v363, %v361
      %v422 = vpack.c.b16 %v366, %v364
      %v423 = vpack.c.b16 %v367, %v365
      %v424 = vpack.c.b16 %v370, %v368
      %v425 = vpack.c.b16 %v371, %v369
      %v426 = vpack.c.b16 %v374, %v372
      %v427 = vpack.c.b16 %v375, %v373
      %v428 = vpack.c.b16 %v378, %v376
      %v429 = vpack.c.b16 %v379, %v377
      %v430 = vpack.c.b16 %v382, %v380
      %v431 = vpack.c.b16 %v383, %v381
      %480 = vmatprep.subr.bf16.mxu0 %v385
      %481 = vmatpush1.bf16.msra.mxu0 %v384
      %482 = vmatprep.subr.bf16.mxu0 %v387
      %483 = vmatpush1.bf16.msra.mxu0 %v386
      %484 = vmatprep.subr.bf16.mxu0 %v389
      %485 = vmatpush1.bf16.msra.mxu0 %v388
      %486 = vmatprep.subr.bf16.mxu0 %v391
      %487 = vmatpush1.bf16.msra.mxu0 %v390
      %488 = vmatprep.subr.bf16.mxu0 %v393
      %489 = vmatpush1.bf16.msra.mxu0 %v392
      %490 = vmatprep.subr.bf16.mxu0 %v395
      %491 = vmatpush1.bf16.msra.mxu0 %v394
      %492 = vmatprep.subr.bf16.mxu0 %v397
      %493 = vmatpush1.bf16.msra.mxu0 %v396
      %494 = vmatprep.subr.bf16.mxu0 %v399
      %495 = vmatpush1.bf16.msra.mxu0 %v398
      %496 = vmatprep.subr.bf16.mxu0 %v401
      %497 = vmatpush1.bf16.msra.mxu0 %v400
      %498 = vmatprep.subr.bf16.mxu0 %v403
      %499 = vmatpush1.bf16.msra.mxu0 %v402
      %500 = vmatprep.subr.bf16.mxu0 %v405
      %501 = vmatpush1.bf16.msra.mxu0 %v404
      %502 = vmatprep.subr.bf16.mxu0 %v407
      %503 = vmatpush1.bf16.msra.mxu0 %v406
      %504 = vmatprep.subr.bf16.mxu0 %v409
      %505 = vmatpush1.bf16.msra.mxu0 %v408
      %506 = vmatprep.subr.bf16.mxu0 %v411
      %507 = vmatpush1.bf16.msra.mxu0 %v410
      %508 = vmatprep.subr.bf16.mxu0 %v413
      %509 = vmatpush1.bf16.msra.mxu0 %v412
      %510 = vmatprep.subr.bf16.mxu0 %v415
      %511 = vmatpush1.bf16.msra.mxu0 %v414
      %512 = vmatprep.mubr.bf16.mxu0 %v235
      %513 = vmatmul.mubr.bf16.gmra.mrb[0].mxu0 %v234
      %v514 = vpop.f32.mrb[0].mxu0
      %v515 = vadd.f32 0.0, %v514
      %v516 = vpop.f32.mrb[0].mxu0
      %v517 = vadd.f32 0.0, %v516
      %v518 = vpop.f32.mrb[0].mxu0
      %v519 = vadd.f32 0.0, %v518
      %v520 = vpop.f32.mrb[0].mxu0
      %v521 = vadd.f32 0.0, %v520
      %522 = vdwg.mxu0
      %523 = vmatprep.subr.bf16.mxu0 %v417
      %524 = vmatpush1.bf16.msra.mxu0 %v416
      %525 = vmatprep.subr.bf16.mxu0 %v419
      %526 = vmatpush1.bf16.msra.mxu0 %v418
      %527 = vmatprep.subr.bf16.mxu0 %v421
      %528 = vmatpush1.bf16.msra.mxu0 %v420
      %529 = vmatprep.subr.bf16.mxu0 %v423
      %530 = vmatpush1.bf16.msra.mxu0 %v422
      %531 = vmatprep.subr.bf16.mxu0 %v425
      %532 = vmatpush1.bf16.msra.mxu0 %v424
      %533 = vmatprep.subr.bf16.mxu0 %v427
      %534 = vmatpush1.bf16.msra.mxu0 %v426
      %535 = vmatprep.subr.bf16.mxu0 %v429
      %536 = vmatpush1.bf16.msra.mxu0 %v428
      %537 = vmatprep.subr.bf16.mxu0 %v431
      %538 = vmatpush1.bf16.msra.mxu0 %v430
      %539 = vmatprep.subr.bf16.mxu0 0
      %540 = vmatpush1.bf16.msra.mxu0 0
      %541 = vmatprep.subr.bf16.mxu0 0
      %542 = vmatpush1.bf16.msra.mxu0 0
      %543 = vmatprep.subr.bf16.mxu0 0
      %544 = vmatpush1.bf16.msra.mxu0 0
      %545 = vmatprep.subr.bf16.mxu0 0
      %546 = vmatpush1.bf16.msra.mxu0 0
      %547 = vmatprep.subr.bf16.mxu0 0
      %548 = vmatpush1.bf16.msra.mxu0 0
      %549 = vmatprep.subr.bf16.mxu0 0
      %550 = vmatpush1.bf16.msra.mxu0 0
      %551 = vmatprep.subr.bf16.mxu0 0
      %552 = vmatpush1.bf16.msra.mxu0 0
      %553 = vmatprep.subr.bf16.mxu0 0
      %554 = vmatpush1.bf16.msra.mxu0 0
      %555 = vmatprep.mubr.bf16.mxu0 0
      %556 = vmatmul.mubr.bf16.gmra.mrb[0].mxu0 %v236
      %v557 = vpop.f32.mrb[0].mxu0
      %v558 = vadd.f32 %v515, %v557
      %v559 = vpop.f32.mrb[0].mxu0
      %v560 = vadd.f32 %v517, %v559
      %v561 = vpop.f32.mrb[0].mxu0
      %v562 = vadd.f32 %v519, %v561
      %v563 = vpop.f32.mrb[0].mxu0
      %v564 = vadd.f32 %v521, %v563
      %565 = vdwg.mxu0
      %566 = vst [vmem:[#allocation2] sm:$0xff] %v558
      %567 = vst [vmem:[#allocation2 + $0x8] sm:$0xff] %v560
      %568 = vst [vmem:[#allocation2 + $0x10] sm:$0xff] %v562
      %569 = vst [vmem:[#allocation2 + $0x18] sm:$0xff] %v564
      %v570 = vld [vmem:[#allocation2] sm:$0xff]
      %v571 = vld [vmem:[#allocation2 + $0x8] sm:$0xff]
      %v572 = vld [vmem:[#allocation2 + $0x10] sm:$0xff]
      %v573 = vld [vmem:[#allocation2 + $0x18] sm:$0xff]
      %s574 = scalar_lea.vmem %s165, 36
      %v575 = vld [vmem:[%s574] sm:$0xff]
      %v576 = vld [vmem:[%s574 + $0x8] sm:$0xf]
      %v577 = vld [vmem:[%s574 + $0xc] sm:$0xff]
      %v578 = vld [vmem:[%s574 + $0x14] sm:$0xf]
      %s579 = scalar_lea.vmem %s1, 384
      %v580 = vld [vmem:[%s579] sm:$0xff]
      %v581 = vld [vmem:[%s579 + $0x8] sm:$0xff]
      %v582 = vld [vmem:[%s579 + $0x10] sm:$0xff]
      %v583 = vld [vmem:[%s579 + $0x18] sm:$0xff]
      %v584 = vld [vmem:[%s579 + $0x20] sm:$0xff]
      %v585 = vld [vmem:[%s579 + $0x28] sm:$0xff]
      %v586 = vld [vmem:[%s579 + $0x30] sm:$0xff]
      %v587 = vld [vmem:[%s579 + $0x38] sm:$0xff]
      %v588 = vld [vmem:[%s579 + $0x40] sm:$0xff]
      %v589 = vld [vmem:[%s579 + $0x48] sm:$0xff]
      %v590 = vld [vmem:[%s579 + $0x50] sm:$0xff]
      %v591 = vld [vmem:[%s579 + $0x58] sm:$0xff]
      %v592 = vld [vmem:[%s579 + $0x60] sm:$0xff]
      %v593 = vld [vmem:[%s579 + $0x68] sm:$0xff]
      %v594 = vld [vmem:[%s579 + $0x70] sm:$0xff]
      %v595 = vld [vmem:[%s579 + $0x78] sm:$0xff]
      %v596 = vld [vmem:[%s579 + $0x80] sm:$0xff]
      %v597 = vld [vmem:[%s579 + $0x88] sm:$0xff]
      %v598 = vld [vmem:[%s579 + $0x90] sm:$0xff]
      %v599 = vld [vmem:[%s579 + $0x98] sm:$0xff]
      %v600 = vld [vmem:[%s579 + $0xa0] sm:$0xff]
      %v601 = vld [vmem:[%s579 + $0xa8] sm:$0xff]
      %v602 = vld [vmem:[%s579 + $0xb0] sm:$0xff]
      %v603 = vld [vmem:[%s579 + $0xb8] sm:$0xff]
      %v604 = vld [vmem:[%s579 + $0xc0] sm:$0xff]
      %v605 = vld [vmem:[%s579 + $0xc8] sm:$0xff]
      %v606 = vld [vmem:[%s579 + $0xd0] sm:$0xff]
      %v607 = vld [vmem:[%s579 + $0xd8] sm:$0xff]
      %v608 = vld [vmem:[%s579 + $0xe0] sm:$0xff]
      %v609 = vld [vmem:[%s579 + $0xe8] sm:$0xff]
      %v610 = vld [vmem:[%s579 + $0xf0] sm:$0xff]
      %v611 = vld [vmem:[%s579 + $0xf8] sm:$0xff]
      %v612 = vld [vmem:[%s579 + $0x100] sm:$0xff]
      %v613 = vld [vmem:[%s579 + $0x108] sm:$0xff]
      %v614 = vld [vmem:[%s579 + $0x110] sm:$0xff]
      %v615 = vld [vmem:[%s579 + $0x118] sm:$0xff]
      %v616 = vld [vmem:[%s579 + $0x120] sm:$0xff]
      %v617 = vld [vmem:[%s579 + $0x128] sm:$0xff]
      %v618 = vld [vmem:[%s579 + $0x130] sm:$0xff]
      %v619 = vld [vmem:[%s579 + $0x138] sm:$0xff]
      %v620 = vld [vmem:[%s579 + $0x140] sm:$0xff]
      %v621 = vld [vmem:[%s579 + $0x148] sm:$0xff]
      %v622 = vld [vmem:[%s579 + $0x150] sm:$0xff]
      %v623 = vld [vmem:[%s579 + $0x158] sm:$0xff]
      %v624 = vld [vmem:[%s579 + $0x160] sm:$0xff]
      %v625 = vld [vmem:[%s579 + $0x168] sm:$0xff]
      %v626 = vld [vmem:[%s579 + $0x170] sm:$0xff]
      %v627 = vld [vmem:[%s579 + $0x178] sm:$0xff]
      %v632 = vunpack.c.l.b16 %v575
      %v633 = vunpack.c.h.b16 %v575
      %v634 = vunpack.c.l.b16 %v576
      %v635 = vunpack.c.l.b16 %v577
      %v636 = vunpack.c.h.b16 %v577
      %v637 = vunpack.c.l.b16 %v578
      %v638 = vpack.c.b16 %v635, %v632
      %v639 = vpack.c.b16 %v636, %v633
      %v640 = vpack.c.b16 %v637, %v634
      %v692 = vunpack.c.l.b16 %v580
      %v693 = vunpack.c.h.b16 %v580
      %v694 = vunpack.c.l.b16 %v581
      %v695 = vunpack.c.h.b16 %v581
      %v696 = vunpack.c.l.b16 %v582
      %v697 = vunpack.c.h.b16 %v582
      %v698 = vunpack.c.l.b16 %v583
      %v699 = vunpack.c.h.b16 %v583
      %v700 = vunpack.c.l.b16 %v584
      %v701 = vunpack.c.h.b16 %v584
      %v702 = vunpack.c.l.b16 %v585
      %v703 = vunpack.c.h.b16 %v585
      %v704 = vunpack.c.l.b16 %v586
      %v705 = vunpack.c.h.b16 %v586
      %v706 = vunpack.c.l.b16 %v587
      %v707 = vunpack.c.h.b16 %v587
      %v708 = vunpack.c.l.b16 %v588
      %v709 = vunpack.c.h.b16 %v588
      %v710 = vunpack.c.l.b16 %v589
      %v711 = vunpack.c.h.b16 %v589
      %v712 = vunpack.c.l.b16 %v590
      %v713 = vunpack.c.h.b16 %v590
      %v714 = vunpack.c.l.b16 %v591
      %v715 = vunpack.c.h.b16 %v591
      %v716 = vunpack.c.l.b16 %v592
      %v717 = vunpack.c.h.b16 %v592
      %v718 = vunpack.c.l.b16 %v593
      %v719 = vunpack.c.h.b16 %v593
      %v720 = vunpack.c.l.b16 %v594
      %v721 = vunpack.c.h.b16 %v594
      %v722 = vunpack.c.l.b16 %v595
      %v723 = vunpack.c.h.b16 %v595
      %v724 = vunpack.c.l.b16 %v596
      %v725 = vunpack.c.h.b16 %v596
      %v726 = vunpack.c.l.b16 %v597
      %v727 = vunpack.c.h.b16 %v597
      %v728 = vunpack.c.l.b16 %v598
      %v729 = vunpack.c.h.b16 %v598
      %v730 = vunpack.c.l.b16 %v599
      %v731 = vunpack.c.h.b16 %v599
      %v732 = vunpack.c.l.b16 %v600
      %v733 = vunpack.c.h.b16 %v600
      %v734 = vunpack.c.l.b16 %v601
      %v735 = vunpack.c.h.b16 %v601
      %v736 = vunpack.c.l.b16 %v602
      %v737 = vunpack.c.h.b16 %v602
      %v738 = vunpack.c.l.b16 %v603
      %v739 = vunpack.c.h.b16 %v603
      %v740 = vunpack.c.l.b16 %v604
      %v741 = vunpack.c.h.b16 %v604
      %v742 = vunpack.c.l.b16 %v605
      %v743 = vunpack.c.h.b16 %v605
      %v744 = vunpack.c.l.b16 %v606
      %v745 = vunpack.c.h.b16 %v606
      %v746 = vunpack.c.l.b16 %v607
      %v747 = vunpack.c.h.b16 %v607
      %v748 = vunpack.c.l.b16 %v608
      %v749 = vunpack.c.h.b16 %v608
      %v750 = vunpack.c.l.b16 %v609
      %v751 = vunpack.c.h.b16 %v609
      %v752 = vunpack.c.l.b16 %v610
      %v753 = vunpack.c.h.b16 %v610
      %v754 = vunpack.c.l.b16 %v611
      %v755 = vunpack.c.h.b16 %v611
      %v756 = vunpack.c.l.b16 %v612
      %v757 = vunpack.c.h.b16 %v612
      %v758 = vunpack.c.l.b16 %v613
      %v759 = vunpack.c.h.b16 %v613
      %v760 = vunpack.c.l.b16 %v614
      %v761 = vunpack.c.h.b16 %v614
      %v762 = vunpack.c.l.b16 %v615
      %v763 = vunpack.c.h.b16 %v615
      %v764 = vunpack.c.l.b16 %v616
      %v765 = vunpack.c.h.b16 %v616
      %v766 = vunpack.c.l.b16 %v617
      %v767 = vunpack.c.h.b16 %v617
      %v768 = vunpack.c.l.b16 %v618
      %v769 = vunpack.c.h.b16 %v618
      %v770 = vunpack.c.l.b16 %v619
      %v771 = vunpack.c.h.b16 %v619
      %v772 = vunpack.c.l.b16 %v620
      %v773 = vunpack.c.h.b16 %v620
      %v774 = vunpack.c.l.b16 %v621
      %v775 = vunpack.c.h.b16 %v621
      %v776 = vunpack.c.l.b16 %v622
      %v777 = vunpack.c.h.b16 %v622
      %v778 = vunpack.c.l.b16 %v623
      %v779 = vunpack.c.h.b16 %v623
      %v780 = vunpack.c.l.b16 %v624
      %v781 = vunpack.c.h.b16 %v624
      %v782 = vunpack.c.l.b16 %v625
      %v783 = vunpack.c.h.b16 %v625
      %v784 = vunpack.c.l.b16 %v626
      %v785 = vunpack.c.h.b16 %v626
      %v786 = vunpack.c.l.b16 %v627
      %v787 = vunpack.c.h.b16 %v627
      %v788 = vpack.c.b16 %v694, %v692
      %v789 = vpack.c.b16 %v695, %v693
      %v790 = vpack.c.b16 %v698, %v696
      %v791 = vpack.c.b16 %v699, %v697
      %v792 = vpack.c.b16 %v702, %v700
      %v793 = vpack.c.b16 %v703, %v701
      %v794 = vpack.c.b16 %v706, %v704
      %v795 = vpack.c.b16 %v707, %v705
      %v796 = vpack.c.b16 %v710, %v708
      %v797 = vpack.c.b16 %v711, %v709
      %v798 = vpack.c.b16 %v714, %v712
      %v799 = vpack.c.b16 %v715, %v713
      %v800 = vpack.c.b16 %v718, %v716
      %v801 = vpack.c.b16 %v719, %v717
      %v802 = vpack.c.b16 %v722, %v720
      %v803 = vpack.c.b16 %v723, %v721
      %v804 = vpack.c.b16 %v726, %v724
      %v805 = vpack.c.b16 %v727, %v725
      %v806 = vpack.c.b16 %v730, %v728
      %v807 = vpack.c.b16 %v731, %v729
      %v808 = vpack.c.b16 %v734, %v732
      %v809 = vpack.c.b16 %v735, %v733
      %v810 = vpack.c.b16 %v738, %v736
      %v811 = vpack.c.b16 %v739, %v737
      %v812 = vpack.c.b16 %v742, %v740
      %v813 = vpack.c.b16 %v743, %v741
      %v814 = vpack.c.b16 %v746, %v744
      %v815 = vpack.c.b16 %v747, %v745
      %v816 = vpack.c.b16 %v750, %v748
      %v817 = vpack.c.b16 %v751, %v749
      %v818 = vpack.c.b16 %v754, %v752
      %v819 = vpack.c.b16 %v755, %v753
      %v820 = vpack.c.b16 %v758, %v756
      %v821 = vpack.c.b16 %v759, %v757
      %v822 = vpack.c.b16 %v762, %v760
      %v823 = vpack.c.b16 %v763, %v761
      %v824 = vpack.c.b16 %v766, %v764
      %v825 = vpack.c.b16 %v767, %v765
      %v826 = vpack.c.b16 %v770, %v768
      %v827 = vpack.c.b16 %v771, %v769
      %v828 = vpack.c.b16 %v774, %v772
      %v829 = vpack.c.b16 %v775, %v773
      %v830 = vpack.c.b16 %v778, %v776
      %v831 = vpack.c.b16 %v779, %v777
      %v832 = vpack.c.b16 %v782, %v780
      %v833 = vpack.c.b16 %v783, %v781
      %v834 = vpack.c.b16 %v786, %v784
      %v835 = vpack.c.b16 %v787, %v785
      %884 = vmatprep.subr.bf16.mxu0 %v789
      %885 = vmatpush1.bf16.msra.mxu0 %v788
      %886 = vmatprep.subr.bf16.mxu0 %v791
      %887 = vmatpush1.bf16.msra.mxu0 %v790
      %888 = vmatprep.subr.bf16.mxu0 %v793
      %889 = vmatpush1.bf16.msra.mxu0 %v792
      %890 = vmatprep.subr.bf16.mxu0 %v795
      %891 = vmatpush1.bf16.msra.mxu0 %v794
      %892 = vmatprep.subr.bf16.mxu0 %v797
      %893 = vmatpush1.bf16.msra.mxu0 %v796
      %894 = vmatprep.subr.bf16.mxu0 %v799
      %895 = vmatpush1.bf16.msra.mxu0 %v798
      %896 = vmatprep.subr.bf16.mxu0 %v801
      %897 = vmatpush1.bf16.msra.mxu0 %v800
      %898 = vmatprep.subr.bf16.mxu0 %v803
      %899 = vmatpush1.bf16.msra.mxu0 %v802
      %900 = vmatprep.subr.bf16.mxu0 %v805
      %901 = vmatpush1.bf16.msra.mxu0 %v804
      %902 = vmatprep.subr.bf16.mxu0 %v807
      %903 = vmatpush1.bf16.msra.mxu0 %v806
      %904 = vmatprep.subr.bf16.mxu0 %v809
      %905 = vmatpush1.bf16.msra.mxu0 %v808
      %906 = vmatprep.subr.bf16.mxu0 %v811
      %907 = vmatpush1.bf16.msra.mxu0 %v810
      %908 = vmatprep.subr.bf16.mxu0 %v813
      %909 = vmatpush1.bf16.msra.mxu0 %v812
      %910 = vmatprep.subr.bf16.mxu0 %v815
      %911 = vmatpush1.bf16.msra.mxu0 %v814
      %912 = vmatprep.subr.bf16.mxu0 %v817
      %913 = vmatpush1.bf16.msra.mxu0 %v816
      %914 = vmatprep.subr.bf16.mxu0 %v819
      %915 = vmatpush1.bf16.msra.mxu0 %v818
      %916 = vmatprep.mubr.bf16.mxu0 %v639
      %917 = vmatmul.mubr.bf16.gmra.mrb[0].mxu0 %v638
      %v918 = vpop.f32.mrb[0].mxu0
      %v919 = vadd.f32 0.0, %v918
      %v920 = vpop.f32.mrb[0].mxu0
      %v921 = vadd.f32 0.0, %v920
      %v922 = vpop.f32.mrb[0].mxu0
      %v923 = vadd.f32 0.0, %v922
      %v924 = vpop.f32.mrb[0].mxu0
      %v925 = vadd.f32 0.0, %v924
      %926 = vdwg.mxu0
      %927 = vmatprep.subr.bf16.mxu0 %v821
      %928 = vmatpush1.bf16.msra.mxu0 %v820
      %929 = vmatprep.subr.bf16.mxu0 %v823
      %930 = vmatpush1.bf16.msra.mxu0 %v822
      %931 = vmatprep.subr.bf16.mxu0 %v825
      %932 = vmatpush1.bf16.msra.mxu0 %v824
      %933 = vmatprep.subr.bf16.mxu0 %v827
      %934 = vmatpush1.bf16.msra.mxu0 %v826
      %935 = vmatprep.subr.bf16.mxu0 %v829
      %936 = vmatpush1.bf16.msra.mxu0 %v828
      %937 = vmatprep.subr.bf16.mxu0 %v831
      %938 = vmatpush1.bf16.msra.mxu0 %v830
      %939 = vmatprep.subr.bf16.mxu0 %v833
      %940 = vmatpush1.bf16.msra.mxu0 %v832
      %941 = vmatprep.subr.bf16.mxu0 %v835
      %942 = vmatpush1.bf16.msra.mxu0 %v834
      %943 = vmatprep.subr.bf16.mxu0 0
      %944 = vmatpush1.bf16.msra.mxu0 0
      %945 = vmatprep.subr.bf16.mxu0 0
      %946 = vmatpush1.bf16.msra.mxu0 0
      %947 = vmatprep.subr.bf16.mxu0 0
      %948 = vmatpush1.bf16.msra.mxu0 0
      %949 = vmatprep.subr.bf16.mxu0 0
      %950 = vmatpush1.bf16.msra.mxu0 0
      %951 = vmatprep.subr.bf16.mxu0 0
      %952 = vmatpush1.bf16.msra.mxu0 0
      %953 = vmatprep.subr.bf16.mxu0 0
      %954 = vmatpush1.bf16.msra.mxu0 0
      %955 = vmatprep.subr.bf16.mxu0 0
      %956 = vmatpush1.bf16.msra.mxu0 0
      %957 = vmatprep.subr.bf16.mxu0 0
      %958 = vmatpush1.bf16.msra.mxu0 0
      %959 = vmatprep.mubr.bf16.mxu0 0
      %960 = vmatmul.mubr.bf16.gmra.mrb[0].mxu0 %v640
      %v961 = vpop.f32.mrb[0].mxu0
      %v962 = vadd.f32 %v919, %v961
      %v963 = vpop.f32.mrb[0].mxu0
      %v964 = vadd.f32 %v921, %v963
      %v965 = vpop.f32.mrb[0].mxu0
      %v966 = vadd.f32 %v923, %v965
      %v967 = vpop.f32.mrb[0].mxu0
      %v968 = vadd.f32 %v925, %v967
      %969 = vdwg.mxu0
      %v970 = vadd.f32 %v570, %v962
      %v971 = vadd.f32 %v571, %v964
      %v972 = vadd.f32 %v572, %v966
      %v973 = vadd.f32 %v573, %v968
      %974 = vst [vmem:[#allocation2] sm:$0xff] %v970
      %975 = vst [vmem:[#allocation2 + $0x8] sm:$0xff] %v971
      %976 = vst [vmem:[#allocation2 + $0x10] sm:$0xff] %v972
      %977 = vst [vmem:[#allocation2 + $0x18] sm:$0xff] %v973
      %v978 = vld [vmem:[#allocation2] sm:$0xff]
      %v979 = vld [vmem:[#allocation2 + $0x8] sm:$0xff]
      %v980 = vld [vmem:[#allocation2 + $0x10] sm:$0xff]
      %v981 = vld [vmem:[#allocation2 + $0x18] sm:$0xff]
      %v982 = vld [vmem:[%s165] sm:$0xcc]
      %v983 = vld [vmem:[%s165 + $0x8] sm:$0xc]
      %v984 = vld [vmem:[%s165 + $0xc] sm:$0xff]
      %v985 = vld [vmem:[%s165 + $0x14] sm:$0xf]
      %v986 = vld [vmem:[%s165 + $0x18] sm:$0x33]
      %v987 = vld [vmem:[%s165 + $0x20] sm:$0x3]
      %s988 = scalar_lea.vmem %s1, 768
      %v989 = vld [vmem:[%s988] sm:$0xff]
      %v990 = vld [vmem:[%s988 + $0x8] sm:$0xff]
      %v991 = vld [vmem:[%s988 + $0x10] sm:$0xff]
      %v992 = vld [vmem:[%s988 + $0x18] sm:$0xff]
      %v993 = vld [vmem:[%s988 + $0x20] sm:$0xff]
      %v994 = vld [vmem:[%s988 + $0x28] sm:$0xff]
      %v995 = vld [vmem:[%s988 + $0x30] sm:$0xff]
      %v996 = vld [vmem:[%s988 + $0x38] sm:$0xff]
      %v997 = vld [vmem:[%s988 + $0x40] sm:$0xff]
      %v998 = vld [vmem:[%s988 + $0x48] sm:$0xff]
      %v999 = vld [vmem:[%s988 + $0x50] sm:$0xff]
      %v1000 = vld [vmem:[%s988 + $0x58] sm:$0xff]
      %v1001 = vld [vmem:[%s988 + $0x60] sm:$0xff]
      %v1002 = vld [vmem:[%s988 + $0x68] sm:$0xff]
      %v1003 = vld [vmem:[%s988 + $0x70] sm:$0xff]
      %v1004 = vld [vmem:[%s988 + $0x78] sm:$0xff]
      %v1005 = vld [vmem:[%s988 + $0x80] sm:$0xff]
      %v1006 = vld [vmem:[%s988 + $0x88] sm:$0xff]
      %v1007 = vld [vmem:[%s988 + $0x90] sm:$0xff]
      %v1008 = vld [vmem:[%s988 + $0x98] sm:$0xff]
      %v1009 = vld [vmem:[%s988 + $0xa0] sm:$0xff]
      %v1010 = vld [vmem:[%s988 + $0xa8] sm:$0xff]
      %v1011 = vld [vmem:[%s988 + $0xb0] sm:$0xff]
      %v1012 = vld [vmem:[%s988 + $0xb8] sm:$0xff]
      %v1013 = vld [vmem:[%s988 + $0xc0] sm:$0xff]
      %v1014 = vld [vmem:[%s988 + $0xc8] sm:$0xff]
      %v1015 = vld [vmem:[%s988 + $0xd0] sm:$0xff]
      %v1016 = vld [vmem:[%s988 + $0xd8] sm:$0xff]
      %v1017 = vld [vmem:[%s988 + $0xe0] sm:$0xff]
      %v1018 = vld [vmem:[%s988 + $0xe8] sm:$0xff]
      %v1019 = vld [vmem:[%s988 + $0xf0] sm:$0xff]
      %v1020 = vld [vmem:[%s988 + $0xf8] sm:$0xff]
      %v1021 = vld [vmem:[%s988 + $0x100] sm:$0xff]
      %v1022 = vld [vmem:[%s988 + $0x108] sm:$0xff]
      %v1023 = vld [vmem:[%s988 + $0x110] sm:$0xff]
      %v1024 = vld [vmem:[%s988 + $0x118] sm:$0xff]
      %v1025 = vld [vmem:[%s988 + $0x120] sm:$0xff]
      %v1026 = vld [vmem:[%s988 + $0x128] sm:$0xff]
      %v1027 = vld [vmem:[%s988 + $0x130] sm:$0xff]
      %v1028 = vld [vmem:[%s988 + $0x138] sm:$0xff]
      %v1029 = vld [vmem:[%s988 + $0x140] sm:$0xff]
      %v1030 = vld [vmem:[%s988 + $0x148] sm:$0xff]
      %v1031 = vld [vmem:[%s988 + $0x150] sm:$0xff]
      %v1032 = vld [vmem:[%s988 + $0x158] sm:$0xff]
      %v1033 = vld [vmem:[%s988 + $0x160] sm:$0xff]
      %v1034 = vld [vmem:[%s988 + $0x168] sm:$0xff]
      %v1035 = vld [vmem:[%s988 + $0x170] sm:$0xff]
      %v1036 = vld [vmem:[%s988 + $0x178] sm:$0xff]
      %v1043 = vunpack.c.l.b16 %v982
      %v1044 = vunpack.c.h.b16 %v982
      %v1045 = vunpack.c.l.b16 %v983
      %v1046 = vunpack.c.l.b16 %v984
      %v1047 = vunpack.c.h.b16 %v984
      %v1048 = vunpack.c.l.b16 %v985
      %v1049 = vunpack.c.l.b16 %v986
      %v1050 = vunpack.c.h.b16 %v986
      %v1051 = vunpack.c.l.b16 %v987
      %v1052 = vpack.c.b16 %v1046, %v1043
      %v1053 = vpack.c.b16 %v1047, %v1044
      %v1054 = vpack.c.b16 %v1048, %v1045
      %v1055 = vpack.c.b16 %v1049, %v1049
      %v1056 = vpack.c.b16 %v1050, %v1050
      %v1057 = vpack.c.b16 %v1051, %v1051
      %vm1058 = vcmask 1045504
      %v1059 = vrot.slane %v1052, 2
      %v1060 = vrot.slane %v1055, 2
      %v1061 = vsel %vm1058, %v1059, %v1060
      %v1062 = vrot.slane %v1053, 2
      %v1063 = vrot.slane %v1056, 2
      %v1064 = vsel %vm1058, %v1062, %v1063
      %v1065 = vrot.slane %v1054, 2
      %v1066 = vrot.slane %v1057, 2
      %v1067 = vsel %vm1058, %v1065, %v1066
      %v1119 = vunpack.c.l.b16 %v989
      %v1120 = vunpack.c.h.b16 %v989
      %v1121 = vunpack.c.l.b16 %v990
      %v1122 = vunpack.c.h.b16 %v990
      %v1123 = vunpack.c.l.b16 %v991
      %v1124 = vunpack.c.h.b16 %v991
      %v1125 = vunpack.c.l.b16 %v992
      %v1126 = vunpack.c.h.b16 %v992
      %v1127 = vunpack.c.l.b16 %v993
      %v1128 = vunpack.c.h.b16 %v993
      %v1129 = vunpack.c.l.b16 %v994
      %v1130 = vunpack.c.h.b16 %v994
      %v1131 = vunpack.c.l.b16 %v995
      %v1132 = vunpack.c.h.b16 %v995
      %v1133 = vunpack.c.l.b16 %v996
      %v1134 = vunpack.c.h.b16 %v996
      %v1135 = vunpack.c.l.b16 %v997
      %v1136 = vunpack.c.h.b16 %v997
      %v1137 = vunpack.c.l.b16 %v998
      %v1138 = vunpack.c.h.b16 %v998
      %v1139 = vunpack.c.l.b16 %v999
      %v1140 = vunpack.c.h.b16 %v999
      %v1141 = vunpack.c.l.b16 %v1000
      %v1142 = vunpack.c.h.b16 %v1000
      %v1143 = vunpack.c.l.b16 %v1001
      %v1144 = vunpack.c.h.b16 %v1001
      %v1145 = vunpack.c.l.b16 %v1002
      %v1146 = vunpack.c.h.b16 %v1002
      %v1147 = vunpack.c.l.b16 %v1003
      %v1148 = vunpack.c.h.b16 %v1003
      %v1149 = vunpack.c.l.b16 %v1004
      %v1150 = vunpack.c.h.b16 %v1004
      %v1151 = vunpack.c.l.b16 %v1005
      %v1152 = vunpack.c.h.b16 %v1005
      %v1153 = vunpack.c.l.b16 %v1006
      %v1154 = vunpack.c.h.b16 %v1006
      %v1155 = vunpack.c.l.b16 %v1007
      %v1156 = vunpack.c.h.b16 %v1007
      %v1157 = vunpack.c.l.b16 %v1008
      %v1158 = vunpack.c.h.b16 %v1008
      %v1159 = vunpack.c.l.b16 %v1009
      %v1160 = vunpack.c.h.b16 %v1009
      %v1161 = vunpack.c.l.b16 %v1010
      %v1162 = vunpack.c.h.b16 %v1010
      %v1163 = vunpack.c.l.b16 %v1011
      %v1164 = vunpack.c.h.b16 %v1011
      %v1165 = vunpack.c.l.b16 %v1012
      %v1166 = vunpack.c.h.b16 %v1012
      %v1167 = vunpack.c.l.b16 %v1013
      %v1168 = vunpack.c.h.b16 %v1013
      %v1169 = vunpack.c.l.b16 %v1014
      %v1170 = vunpack.c.h.b16 %v1014
      %v1171 = vunpack.c.l.b16 %v1015
      %v1172 = vunpack.c.h.b16 %v1015
      %v1173 = vunpack.c.l.b16 %v1016
      %v1174 = vunpack.c.h.b16 %v1016
      %v1175 = vunpack.c.l.b16 %v1017
      %v1176 = vunpack.c.h.b16 %v1017
      %v1177 = vunpack.c.l.b16 %v1018
      %v1178 = vunpack.c.h.b16 %v1018
      %v1179 = vunpack.c.l.b16 %v1019
      %v1180 = vunpack.c.h.b16 %v1019
      %v1181 = vunpack.c.l.b16 %v1020
      %v1182 = vunpack.c.h.b16 %v1020
      %v1183 = vunpack.c.l.b16 %v1021
      %v1184 = vunpack.c.h.b16 %v1021
      %v1185 = vunpack.c.l.b16 %v1022
      %v1186 = vunpack.c.h.b16 %v1022
      %v1187 = vunpack.c.l.b16 %v1023
      %v1188 = vunpack.c.h.b16 %v1023
      %v1189 = vunpack.c.l.b16 %v1024
      %v1190 = vunpack.c.h.b16 %v1024
      %v1191 = vunpack.c.l.b16 %v1025
      %v1192 = vunpack.c.h.b16 %v1025
      %v1193 = vunpack.c.l.b16 %v1026
      %v1194 = vunpack.c.h.b16 %v1026
      %v1195 = vunpack.c.l.b16 %v1027
      %v1196 = vunpack.c.h.b16 %v1027
      %v1197 = vunpack.c.l.b16 %v1028
      %v1198 = vunpack.c.h.b16 %v1028
      %v1199 = vunpack.c.l.b16 %v1029
      %v1200 = vunpack.c.h.b16 %v1029
      %v1201 = vunpack.c.l.b16 %v1030
      %v1202 = vunpack.c.h.b16 %v1030
      %v1203 = vunpack.c.l.b16 %v1031
      %v1204 = vunpack.c.h.b16 %v1031
      %v1205 = vunpack.c.l.b16 %v1032
      %v1206 = vunpack.c.h.b16 %v1032
      %v1207 = vunpack.c.l.b16 %v1033
      %v1208 = vunpack.c.h.b16 %v1033
      %v1209 = vunpack.c.l.b16 %v1034
      %v1210 = vunpack.c.h.b16 %v1034
      %v1211 = vunpack.c.l.b16 %v1035
      %v1212 = vunpack.c.h.b16 %v1035
      %v1213 = vunpack.c.l.b16 %v1036
      %v1214 = vunpack.c.h.b16 %v1036
      %v1215 = vpack.c.b16 %v1121, %v1119
      %v1216 = vpack.c.b16 %v1122, %v1120
      %v1217 = vpack.c.b16 %v1125, %v1123
      %v1218 = vpack.c.b16 %v1126, %v1124
      %v1219 = vpack.c.b16 %v1129, %v1127
      %v1220 = vpack.c.b16 %v1130, %v1128
      %v1221 = vpack.c.b16 %v1133, %v1131
      %v1222 = vpack.c.b16 %v1134, %v1132
      %v1223 = vpack.c.b16 %v1137, %v1135
      %v1224 = vpack.c.b16 %v1138, %v1136
      %v1225 = vpack.c.b16 %v1141, %v1139
      %v1226 = vpack.c.b16 %v1142, %v1140
      %v1227 = vpack.c.b16 %v1145, %v1143
      %v1228 = vpack.c.b16 %v1146, %v1144
      %v1229 = vpack.c.b16 %v1149, %v1147
      %v1230 = vpack.c.b16 %v1150, %v1148
      %v1231 = vpack.c.b16 %v1153, %v1151
      %v1232 = vpack.c.b16 %v1154, %v1152
      %v1233 = vpack.c.b16 %v1157, %v1155
      %v1234 = vpack.c.b16 %v1158, %v1156
      %v1235 = vpack.c.b16 %v1161, %v1159
      %v1236 = vpack.c.b16 %v1162, %v1160
      %v1237 = vpack.c.b16 %v1165, %v1163
      %v1238 = vpack.c.b16 %v1166, %v1164
      %v1239 = vpack.c.b16 %v1169, %v1167
      %v1240 = vpack.c.b16 %v1170, %v1168
      %v1241 = vpack.c.b16 %v1173, %v1171
      %v1242 = vpack.c.b16 %v1174, %v1172
      %v1243 = vpack.c.b16 %v1177, %v1175
      %v1244 = vpack.c.b16 %v1178, %v1176
      %v1245 = vpack.c.b16 %v1181, %v1179
      %v1246 = vpack.c.b16 %v1182, %v1180
      %v1247 = vpack.c.b16 %v1185, %v1183
      %v1248 = vpack.c.b16 %v1186, %v1184
      %v1249 = vpack.c.b16 %v1189, %v1187
      %v1250 = vpack.c.b16 %v1190, %v1188
      %v1251 = vpack.c.b16 %v1193, %v1191
      %v1252 = vpack.c.b16 %v1194, %v1192
      %v1253 = vpack.c.b16 %v1197, %v1195
      %v1254 = vpack.c.b16 %v1198, %v1196
      %v1255 = vpack.c.b16 %v1201, %v1199
      %v1256 = vpack.c.b16 %v1202, %v1200
      %v1257 = vpack.c.b16 %v1205, %v1203
      %v1258 = vpack.c.b16 %v1206, %v1204
      %v1259 = vpack.c.b16 %v1209, %v1207
      %v1260 = vpack.c.b16 %v1210, %v1208
      %v1261 = vpack.c.b16 %v1213, %v1211
      %v1262 = vpack.c.b16 %v1214, %v1212
      %1311 = vmatprep.subr.bf16.mxu0 %v1216
      %1312 = vmatpush1.bf16.msra.mxu0 %v1215
      %1313 = vmatprep.subr.bf16.mxu0 %v1218
      %1314 = vmatpush1.bf16.msra.mxu0 %v1217
      %1315 = vmatprep.subr.bf16.mxu0 %v1220
      %1316 = vmatpush1.bf16.msra.mxu0 %v1219
      %1317 = vmatprep.subr.bf16.mxu0 %v1222
      %1318 = vmatpush1.bf16.msra.mxu0 %v1221
      %1319 = vmatprep.subr.bf16.mxu0 %v1224
      %1320 = vmatpush1.bf16.msra.mxu0 %v1223
      %1321 = vmatprep.subr.bf16.mxu0 %v1226
      %1322 = vmatpush1.bf16.msra.mxu0 %v1225
      %1323 = vmatprep.subr.bf16.mxu0 %v1228
      %1324 = vmatpush1.bf16.msra.mxu0 %v1227
      %1325 = vmatprep.subr.bf16.mxu0 %v1230
      %1326 = vmatpush1.bf16.msra.mxu0 %v1229
      %1327 = vmatprep.subr.bf16.mxu0 %v1232
      %1328 = vmatpush1.bf16.msra.mxu0 %v1231
      %1329 = vmatprep.subr.bf16.mxu0 %v1234
      %1330 = vmatpush1.bf16.msra.mxu0 %v1233
      %1331 = vmatprep.subr.bf16.mxu0 %v1236
      %1332 = vmatpush1.bf16.msra.mxu0 %v1235
      %1333 = vmatprep.subr.bf16.mxu0 %v1238
      %1334 = vmatpush1.bf16.msra.mxu0 %v1237
      %1335 = vmatprep.subr.bf16.mxu0 %v1240
      %1336 = vmatpush1.bf16.msra.mxu0 %v1239
      %1337 = vmatprep.subr.bf16.mxu0 %v1242
      %1338 = vmatpush1.bf16.msra.mxu0 %v1241
      %1339 = vmatprep.subr.bf16.mxu0 %v1244
      %1340 = vmatpush1.bf16.msra.mxu0 %v1243
      %1341 = vmatprep.subr.bf16.mxu0 %v1246
      %1342 = vmatpush1.bf16.msra.mxu0 %v1245
      %1343 = vmatprep.mubr.bf16.mxu0 %v1064
      %1344 = vmatmul.mubr.bf16.gmra.mrb[0].mxu0 %v1061
      %v1345 = vpop.f32.mrb[0].mxu0
      %v1346 = vadd.f32 0.0, %v1345
      %v1347 = vpop.f32.mrb[0].mxu0
      %v1348 = vadd.f32 0.0, %v1347
      %v1349 = vpop.f32.mrb[0].mxu0
      %v1350 = vadd.f32 0.0, %v1349
      %v1351 = vpop.f32.mrb[0].mxu0
      %v1352 = vadd.f32 0.0, %v1351
      %1353 = vdwg.mxu0
      %1354 = vmatprep.subr.bf16.mxu0 %v1248
      %1355 = vmatpush1.bf16.msra.mxu0 %v1247
      %1356 = vmatprep.subr.bf16.mxu0 %v1250
      %1357 = vmatpush1.bf16.msra.mxu0 %v1249
      %1358 = vmatprep.subr.bf16.mxu0 %v1252
      %1359 = vmatpush1.bf16.msra.mxu0 %v1251
      %1360 = vmatprep.subr.bf16.mxu0 %v1254
      %1361 = vmatpush1.bf16.msra.mxu0 %v1253
      %1362 = vmatprep.subr.bf16.mxu0 %v1256
      %1363 = vmatpush1.bf16.msra.mxu0 %v1255
      %1364 = vmatprep.subr.bf16.mxu0 %v1258
      %1365 = vmatpush1.bf16.msra.mxu0 %v1257
      %1366 = vmatprep.subr.bf16.mxu0 %v1260
      %1367 = vmatpush1.bf16.msra.mxu0 %v1259
      %1368 = vmatprep.subr.bf16.mxu0 %v1262
      %1369 = vmatpush1.bf16.msra.mxu0 %v1261
      %1370 = vmatprep.subr.bf16.mxu0 0
      %1371 = vmatpush1.bf16.msra.mxu0 0
      %1372 = vmatprep.subr.bf16.mxu0 0
      %1373 = vmatpush1.bf16.msra.mxu0 0
      %1374 = vmatprep.subr.bf16.mxu0 0
      %1375 = vmatpush1.bf16.msra.mxu0 0
      %1376 = vmatprep.subr.bf16.mxu0 0
      %1377 = vmatpush1.bf16.msra.mxu0 0
      %1378 = vmatprep.subr.bf16.mxu0 0
      %1379 = vmatpush1.bf16.msra.mxu0 0
      %1380 = vmatprep.subr.bf16.mxu0 0
      %1381 = vmatpush1.bf16.msra.mxu0 0
      %1382 = vmatprep.subr.bf16.mxu0 0
      %1383 = vmatpush1.bf16.msra.mxu0 0
      %1384 = vmatprep.subr.bf16.mxu0 0
      %1385 = vmatpush1.bf16.msra.mxu0 0
      %1386 = vmatprep.mubr.bf16.mxu0 0
      %1387 = vmatmul.mubr.bf16.gmra.mrb[0].mxu0 %v1067
      %v1388 = vpop.f32.mrb[0].mxu0
      %v1389 = vadd.f32 %v1346, %v1388
      %v1390 = vpop.f32.mrb[0].mxu0
      %v1391 = vadd.f32 %v1348, %v1390
      %v1392 = vpop.f32.mrb[0].mxu0
      %v1393 = vadd.f32 %v1350, %v1392
      %v1394 = vpop.f32.mrb[0].mxu0
      %v1395 = vadd.f32 %v1352, %v1394
      %1396 = vdwg.mxu0
      %v1397 = vadd.f32 %v978, %v1389
      %v1398 = vadd.f32 %v979, %v1391
      %v1399 = vadd.f32 %v980, %v1393
      %v1400 = vadd.f32 %v981, %v1395
      %1401 = vst [vmem:[#allocation2] sm:$0xff] %v1397
      %1402 = vst [vmem:[#allocation2 + $0x8] sm:$0xff] %v1398
      %1403 = vst [vmem:[#allocation2 + $0x10] sm:$0xff] %v1399
      %1404 = vst [vmem:[#allocation2 + $0x18] sm:$0xff] %v1400
      %v1405 = vld [vmem:[#allocation2] sm:$0xff]
      %v1406 = vld [vmem:[#allocation2 + $0x8] sm:$0xff]
      %v1407 = vld [vmem:[#allocation2 + $0x10] sm:$0xff]
      %v1408 = vld [vmem:[#allocation2 + $0x18] sm:$0xff]
      %v1409 = vld [vmem:[%s2] sm:$0x3]
      %v1411 = vlaneseq
      %v1412 = vshrl.u32 %v1411, 7
      %v1413 = vsub.s32 0, %v1412
      %v1414 = vrot.slane %v1409, %v1413
      %v1415 = vlaneseq
      %v1416 = vshrl.u32 %v1415, 7
      %v1417 = vsub.s32 1, %v1416
      %v1418 = vrot.slane %v1409, %v1417
      %v1421 = vadd.f32 %v1405, %v1414
      %v1422 = vadd.f32 %v1406, %v1418
      %v1423 = vadd.f32 %v1407, %v1414
      %v1424 = vadd.f32 %v1408, %v1418
      %vm1425 = vcmp.ge.f32.partialorder %v1421, 0.0
      %vm1426 = vcmp.ge.f32.partialorder %v1422, 0.0
      %vm1427 = vcmp.ge.f32.partialorder %v1423, 0.0
      %vm1428 = vcmp.ge.f32.partialorder %v1424, 0.0
      %v1429 = vmul.f32 %v1421, 0.3
      %v1430 = vmul.f32 %v1422, 0.3
      %v1431 = vmul.f32 %v1423, 0.3
      %v1432 = vmul.f32 %v1424, 0.3
      %v1433 = vsel %vm1425, %v1421, %v1429
      %v1434 = vsel %vm1426, %v1422, %v1430
      %v1435 = vsel %vm1427, %v1423, %v1431
      %v1436 = vsel %vm1428, %v1424, %v1432
      %v1437 = vpack.c.bf16 %v1435, %v1433
      %v1438 = vpack.c.bf16 %v1436, %v1434
      %v1441 = vunpack.c.l.b16 %v1437
      %v1442 = vunpack.c.l.b16 %v1438
      %v1443 = vunpack.c.h.b16 %v1437
      %v1444 = vunpack.c.h.b16 %v1438
      %v1445 = vpack.c.b16 %v1442, %v1441
      %v1446 = vpack.c.b16 %v1444, %v1443
      %1449 = vst [vmem:[%s170] sm:$0xff] %v1445
      %1450 = vst [vmem:[%s170 + $0x8] sm:$0xff] %v1446
      %p1451 = scmp.lt.s32.totalorder %s14, 1
      %s1452 = scalar_select %p1451, %s14, 1
      %s1453 = smul.addr %s1452, 4
      %s1454 = smul.addr %s1453, 4
      %s1455 = scalar_lea.vmem %s3, %s1454
      // Predicated region
      $region33: #{discriminator_forward.6} parent=31 // pred_check
        %p1456 = pneg %p100
      $region34: #{discriminator_forward.6} parent=31 // pred_check_branch
        %1458 = sbr.rel (%p1456) target = $region36
      $region35: #{discriminator_forward.6} parent=31 // pred_region
        _
      $region36: #{discriminator_forward.6} parent=31 // pred_fallthru
        _
    $region32: #{discriminator_forward.6} parent=5 // pred_fallthru
      _
    %p1459 = scmp.le.s32.totalorder 2, %s9
    // Predicated region
    $region37: #{discriminator_forward.6} parent=5 // pred_check
      %p1460 = pneg %p1459
    $region38: #{discriminator_forward.6} parent=5 // pred_check_branch
      %1462 = sbr.rel (%p1460) target = $region40
    $region39: #{discriminator_forward.6} parent=5 // pred_region
      %s1463 = ssub.s32 %s9, 2
      // Predicated region
      $region41: #{discriminator_forward.6} parent=39 // pred_check
        %p1464 = pneg %p106
      $region42: #{discriminator_forward.6} parent=39 // pred_check_branch
        %1466 = sbr.rel (%p1464) target = $region44
      $region43: #{discriminator_forward.6} parent=39 // pred_region
        %p1467 = scmp.lt.s32.totalorder %s15, 1
        %s1468 = scalar_select %p1467, %s15, 1
        %s1469 = smul.addr %s1468, 4
        %s1470 = smul.addr %s1469, 4
        %s1471 = scalar_lea.vmem %s3, %s1470
      $region44: #{discriminator_forward.6} parent=39 // pred_fallthru
        _
    $region40: #{discriminator_forward.6} parent=5 // pred_fallthru
      _
  $region6: #{discriminator_forward.6} parent=0 // loop_footer
    %s13 = sadd.s32 1, %s9
  $region7: #{discriminator_forward.6} parent=0 // loop_footer_branch
    %8 = sbr.rel target = $region3
  $region8: #{discriminator_forward.6} parent=0 // loop_exit
    _

</llo_original>
